<compile_context>
chip_gen: v5e
topology: v5e:2x2
jax: 0.10.0
libtpu: 0.0.40
codegen_flags: <defaults>
</compile_context>

<pallas_src>
import functools

import jax
import jax.numpy as jnp
from jax import lax
from jax.experimental import pallas as pl
from jax.experimental.pallas import tpu as pltpu  # noqa: F401  (TPU backend)

# ----------------------------- config ---------------------------------------
VOCAB    = 32
MAX_LEN  = 8          # hyper['max_len']
HIDDEN   = 32
N_HEADS  = 4
HEAD_DIM = HIDDEN // N_HEADS
N_LAYERS = 2
INTER    = 64
BATCH2   = 2          # batch of input_x2 (input_x1 is a single sequence)
LN_EPS   = 1e-12
NEG_INF  = -1e9


# ----------------------------- kernel ---------------------------------------

def _layer_norm(x, gamma, beta, eps=LN_EPS):
    mu = jnp.mean(x, axis=-1, keepdims=True)
    var = jnp.mean(jnp.square(x - mu), axis=-1, keepdims=True)
    return (x - mu) * lax.rsqrt(var + eps) * gamma + beta


def _bert_fused_kernel(x_ref, bias_ref, mcol_ref, embln_ref,
                       wqkv_ref, bqkv_ref, wo_ref, bo_ref, ln1_ref,
                       w1_ref, b1_ref, w2_ref, b2_ref, ln2_ref,
                       f1w_ref, f1b_ref, f2w_ref, f2b_ref,
                       o_ref):
    n_tok, H = x_ref.shape
    n_batch, L = bias_ref.shape
    n_layers = wqkv_ref.shape[0]
    dh = H // N_HEADS
    scale = 1.0 / float(dh) ** 0.5

    bias_all = bias_ref[...]                    # (n_batch, L) additive key mask
    mcols = mcol_ref[...]                       # (n_tok, 1)  token mask column

    embln = embln_ref[...]                      # (2, H): [gamma; beta]
    x = _layer_norm(x_ref[...], embln[0:1, :], embln[1:2, :])   # (n_tok, H) f32

    for l in range(n_layers):
        # ---- fused QKV projection: one MXU pass, 3H-wide (lane-dense) output
        qkv = jnp.dot(x.astype(jnp.bfloat16), wqkv_ref[l],
                      preferred_element_type=jnp.float32) + bqkv_ref[l]   # (n_tok, 3H)

        # ---- attention, all in VMEM (static batch/head unroll)
        attn_rows = []
        for b in range(n_batch):
            r0 = b * L
            qkv_b = qkv[r0:r0 + L, :]           # (L, 3H)
            bias_b = bias_all[b:b + 1, :]       # (1, L)
            head_outs = []
            for h in range(N_HEADS):
                c0 = h * dh
                qh = qkv_b[:, c0:c0 + dh]                       # (L, dh)
                kh = qkv_b[:, H + c0:H + c0 + dh]               # (L, dh)
                vh = qkv_b[:, 2 * H + c0:2 * H + c0 + dh]       # (L, dh)
                s = lax.dot_general(qh, kh, (((1,), (1,)), ((), ())),
                                    preferred_element_type=jnp.float32) * scale
                s = s + bias_b                                  # mask pad keys
                s = s - jnp.max(s, axis=-1, keepdims=True)
                p = jnp.exp(s)
                p = p * pl.reciprocal(jnp.sum(p, axis=-1, keepdims=True), approx=True)
                head_outs.append(jnp.dot(p, vh, preferred_element_type=jnp.float32))
            attn_rows.append(jnp.concatenate(head_outs, axis=1))  # (L, H)
        attn = jnp.concatenate(attn_rows, axis=0)                 # (n_tok, H)

        # ---- output projection + add&LN
        a = jnp.dot(attn.astype(jnp.bfloat16), wo_ref[l],
                    preferred_element_type=jnp.float32) + bo_ref[l]
        ln1 = ln1_ref[l]
        x = _layer_norm(a + x, ln1[0:1, :], ln1[1:2, :])

        # ---- feed-forward + add&LN
        f = jnp.dot(x.astype(jnp.bfloat16), w1_ref[l],
                    preferred_element_type=jnp.float32) + b1_ref[l]
        f = jax.nn.gelu(f, approximate=True)
        f = jnp.dot(f.astype(jnp.bfloat16), w2_ref[l],
                    preferred_element_type=jnp.float32) + b2_ref[l]
        ln2 = ln2_ref[l]
        x = _layer_norm(f + x, ln2[0:1, :], ln2[1:2, :])

    # ---- masked mean pooling (masked_fill(pad, 0).sum / count), count clamped
    pooled = []
    for b in range(n_batch):
        r0 = b * L
        hb = x[r0:r0 + L, :]                    # (L, H)
        mb = mcols[r0:r0 + L, :]                # (L, 1)
        s = jnp.sum(hb * mb, axis=0, keepdims=True)                  # (1, H)
        cnt = jnp.maximum(jnp.sum(mb, axis=0, keepdims=True), 1.0)   # (1, 1)
        pooled.append(s * pl.reciprocal(cnt, approx=True))

    # ---- siamese head: pairwise L1 distance + cosine similarity + MLP
    f1w = f1w_ref[...]                          # (3, INTER)
    f1b = f1b_ref[...]                          # (1, INTER)
    f2w = f2w_ref[...]                          # (1, INTER)  (torch weight layout)
    f2b = f2b_ref[...]                          # (1, 1)
    p1 = pooled[0]                              # (1, H), broadcasts vs each p2
    outs = []
    for b in range(1, n_batch):
        p2 = pooled[b]
        # torch.pairwise_distance(p=1, eps=1e-6)
        dis = jnp.sum(jnp.abs(p1 - p2 + 1e-6), axis=1, keepdims=True)        # (1,1)
        # torch.cosine_similarity(dim=1, eps=1e-8)
        dot = jnp.sum(p1 * p2, axis=1, keepdims=True)
        n1 = jnp.sqrt(jnp.sum(p1 * p1, axis=1, keepdims=True))
        n2 = jnp.sqrt(jnp.sum(p2 * p2, axis=1, keepdims=True))
        ang = dot / (jnp.maximum(n1, 1e-8) * jnp.maximum(n2, 1e-8))          # (1,1)
        # feature = cat([dis, dis, ang]); fold the tiny (1,3)@(3,64) matmul into
        # broadcasted rank-1 updates (lane-friendly).  dropout2 is identity.
        hh = dis * f1w[0:1, :] + dis * f1w[1:2, :] + ang * f1w[2:3, :] + f1b
        hh = jnp.maximum(hh, 0.0)
        outs.append(jnp.sum(hh * f2w, axis=1, keepdims=True) + f2b)          # (1,1)
    o_ref[...] = jnp.concatenate(outs, axis=1)  # (1, n_batch-1)


def _full_spec(shape):
    nd = len(shape)
    return pl.BlockSpec(shape, lambda *_, nd=nd: (0,) * nd)


# ----------------------------- model ----------------------------------------

def bert_siamese_forward(params, input_x1, input_x2):
    """input_x1: (L,) int32 token ids; input_x2: (B, L) int32 token ids."""
    x1_ids = input_x1[None, :]                                    # unsqueeze(0) -> (1, L)
    ids = jnp.concatenate([x1_ids, input_x2], axis=0).astype(jnp.int32)   # (1+B, L)
    n_batch, L = ids.shape
    b2 = n_batch - 1

    mask = (ids != 0)
    maskf = mask.astype(jnp.float32)

    # embedding gather stays in plain JAX
    x = (params["word_emb"][ids]
         + params["pos_emb"][None, :L, :]
         + params["tok_emb"][0][None, None, :])                   # (1+B, L, H)
    x = x.reshape(n_batch * L, HIDDEN).astype(jnp.float32)

    bias_rows = (1.0 - maskf) * NEG_INF                           # (1+B, L)
    mask_cols = maskf.reshape(n_batch * L, 1)                     # ((1+B)*L, 1)

    args = (x, bias_rows, mask_cols, params["emb_ln"],
            params["wqkv"], params["bqkv"], params["wo"], params["bo"], params["ln1"],
            params["w1"], params["b1"], params["w2"], params["b2"], params["ln2"],
            params["f1_w"], params["f1_b"], params["f2_w"], params["f2_b"])

    out = pl.pallas_call(
        _bert_fused_kernel,
        out_shape=jax.ShapeDtypeStruct((1, b2), jnp.float32),
        grid=(1,),
        in_specs=[_full_spec(a.shape) for a in args],
        out_specs=_full_spec((1, b2)),
    )(*args)                                                      # (1, B)

    # torch: f_tag2 output (B,1) -> squeeze (all size-1 dims) -> unsqueeze(0)
    logits = out.reshape(b2, 1)
    return jnp.squeeze(logits)[None, ...]                         # (1, B)  ((1,) if B==1)


# ----------------------------- params ---------------------------------------

def init_params(key):
    def norm(k, shape, scale=0.02):
        return scale * jax.random.normal(k, shape, dtype=jnp.float32)

    ln_rows = jnp.concatenate([jnp.ones((1, HIDDEN), jnp.float32),
                               jnp.zeros((1, HIDDEN), jnp.float32)], axis=0)  # [gamma; beta]

    keys = jax.random.split(key, 8 + N_LAYERS)
    params = {
        "word_emb": norm(keys[0], (VOCAB, HIDDEN)),
        "pos_emb":  norm(keys[1], (MAX_LEN, HIDDEN)),
        "tok_emb":  norm(keys[2], (2, HIDDEN)),
        "emb_ln":   ln_rows,
        # TODO(synk): original module declares nn.Linear(2, 64) but its forward feeds a
        # 3-feature vector cat((dis1, dis1, ang)); using in_features=3 so the forward runs.
        "f1_w": norm(keys[3], (3, INTER)),
        "f1_b": jnp.zeros((1, INTER), jnp.float32),
        "f2_w": norm(keys[4], (1, INTER)),     # torch Linear(64,1) weight layout (out,in)
        "f2_b": jnp.zeros((1, 1), jnp.float32),
    }

    wqkv, bqkv, wo, bo, ln1, w1, b1, w2, b2, ln2 = ([] for _ in range(10))
    for l in range(N_LAYERS):
        lk = jax.random.split(keys[8 + l], 6)
        wq = norm(lk[0], (HIDDEN, HIDDEN))
        wk = norm(lk[1], (HIDDEN, HIDDEN))
        wv = norm(lk[2], (HIDDEN, HIDDEN))
        wqkv.append(jnp.concatenate([wq, wk, wv], axis=1))        # fused (H, 3H)
        bqkv.append(jnp.zeros((1, 3 * HIDDEN), jnp.float32))
        wo.append(norm(lk[3], (HIDDEN, HIDDEN)))
        bo.append(jnp.zeros((1, HIDDEN), jnp.float32))
        ln1.append(ln_rows)
        w1.append(norm(lk[4], (HIDDEN, INTER)))
        b1.append(jnp.zeros((1, INTER), jnp.float32))
        w2.append(norm(lk[5], (INTER, HIDDEN)))
        b2.append(jnp.zeros((1, HIDDEN), jnp.float32))
        ln2.append(ln_rows)

    # matrix weights stored bf16 (MXU-native, half the weight DMA); biases/LN stay f32
    params["wqkv"] = jnp.stack(wqkv).astype(jnp.bfloat16)
    params["bqkv"] = jnp.stack(bqkv)
    params["wo"]   = jnp.stack(wo).astype(jnp.bfloat16)
    params["bo"]   = jnp.stack(bo)
    params["ln1"]  = jnp.stack(ln1)
    params["w1"]   = jnp.stack(w1).astype(jnp.bfloat16)
    params["b1"]   = jnp.stack(b1)
    params["w2"]   = jnp.stack(w2).astype(jnp.bfloat16)
    params["b2"]   = jnp.stack(b2)
    params["ln2"]  = jnp.stack(ln2)
    return params


# ----------------------------- main ------------------------------------------

if __name__ == "__main__":
    key = jax.random.PRNGKey(0)
    kp, k1, k2 = jax.random.split(key, 3)

    params = init_params(kp)

    # token ids; 0 is the pad id, keep some trailing padding
    input_x1 = jax.random.randint(k1, (MAX_LEN,), 1, VOCAB).astype(jnp.int32)
    input_x1 = input_x1.at[6:].set(0)
    input_x2 = jax.random.randint(k2, (BATCH2, MAX_LEN), 1, VOCAB).astype(jnp.int32)
    input_x2 = input_x2.at[:, 5:].set(0)

    fwd = jax.jit(bert_siamese_forward)
    out = fwd(params, input_x1, input_x2)
    out = jax.block_until_ready(out)

    assert out.shape == (1, BATCH2)
    assert bool(jnp.all(jnp.isfinite(out)))
    print("KERNEL_OK")
</pallas_src>

<mosaic_0001>
module attributes {stable_mosaic.version = 11 : i64} {
  func.func @_bert_fused_kernel(%arg0: i32, %arg1: memref<24x32xf32, #tpu.memory_space<vmem>>, %arg2: memref<3x8xf32, #tpu.memory_space<vmem>>, %arg3: memref<24x1xf32, #tpu.memory_space<vmem>>, %arg4: memref<2x32xf32, #tpu.memory_space<vmem>>, %arg5: memref<2x32x96xbf16, #tpu.memory_space<vmem>>, %arg6: memref<2x1x96xf32, #tpu.memory_space<vmem>>, %arg7: memref<2x32x32xbf16, #tpu.memory_space<vmem>>, %arg8: memref<2x1x32xf32, #tpu.memory_space<vmem>>, %arg9: memref<2x2x32xf32, #tpu.memory_space<vmem>>, %arg10: memref<2x32x64xbf16, #tpu.memory_space<vmem>>, %arg11: memref<2x1x64xf32, #tpu.memory_space<vmem>>, %arg12: memref<2x64x32xbf16, #tpu.memory_space<vmem>>, %arg13: memref<2x1x32xf32, #tpu.memory_space<vmem>>, %arg14: memref<2x2x32xf32, #tpu.memory_space<vmem>>, %arg15: memref<3x64xf32, #tpu.memory_space<vmem>>, %arg16: memref<1x64xf32, #tpu.memory_space<vmem>>, %arg17: memref<1x64xf32, #tpu.memory_space<vmem>>, %arg18: memref<1x1xf32, #tpu.memory_space<vmem>>, %arg19: memref<1x2xf32, #tpu.memory_space<vmem>>) attributes {dimension_semantics = [#tpu.dimension_semantics<arbitrary>], iteration_bounds = array<i64: 1>, scalar_prefetch = 0 : i64, scratch_operands = 0 : i64, tpu.core_type = #tpu.core_type<tc>, window_params = [{pipeline_mode = #tpu.pipeline_mode<synchronous>, transform_indices = @transform_0, window_bounds = array<i64: 24, 32>}, {pipeline_mode = #tpu.pipeline_mode<synchronous>, transform_indices = @transform_1, window_bounds = array<i64: 3, 8>}, {pipeline_mode = #tpu.pipeline_mode<synchronous>, transform_indices = @transform_2, window_bounds = array<i64: 24, 1>}, {pipeline_mode = #tpu.pipeline_mode<synchronous>, transform_indices = @transform_3, window_bounds = array<i64: 2, 32>}, {pipeline_mode = #tpu.pipeline_mode<synchronous>, transform_indices = @transform_4, window_bounds = array<i64: 2, 32, 96>}, {pipeline_mode = #tpu.pipeline_mode<synchronous>, transform_indices = @transform_5, window_bounds = array<i64: 2, 1, 96>}, {pipeline_mode = #tpu.pipeline_mode<synchronous>, transform_indices = @transform_6, window_bounds = array<i64: 2, 32, 32>}, {pipeline_mode = #tpu.pipeline_mode<synchronous>, transform_indices = @transform_7, window_bounds = array<i64: 2, 1, 32>}, {pipeline_mode = #tpu.pipeline_mode<synchronous>, transform_indices = @transform_8, window_bounds = array<i64: 2, 2, 32>}, {pipeline_mode = #tpu.pipeline_mode<synchronous>, transform_indices = @transform_9, window_bounds = array<i64: 2, 32, 64>}, {pipeline_mode = #tpu.pipeline_mode<synchronous>, transform_indices = @transform_10, window_bounds = array<i64: 2, 1, 64>}, {pipeline_mode = #tpu.pipeline_mode<synchronous>, transform_indices = @transform_11, window_bounds = array<i64: 2, 64, 32>}, {pipeline_mode = #tpu.pipeline_mode<synchronous>, transform_indices = @transform_12, window_bounds = array<i64: 2, 1, 32>}, {pipeline_mode = #tpu.pipeline_mode<synchronous>, transform_indices = @transform_13, window_bounds = array<i64: 2, 2, 32>}, {pipeline_mode = #tpu.pipeline_mode<synchronous>, transform_indices = @transform_14, window_bounds = array<i64: 3, 64>}, {pipeline_mode = #tpu.pipeline_mode<synchronous>, transform_indices = @transform_15, window_bounds = array<i64: 1, 64>}, {pipeline_mode = #tpu.pipeline_mode<synchronous>, transform_indices = @transform_16, window_bounds = array<i64: 1, 64>}, {pipeline_mode = #tpu.pipeline_mode<synchronous>, transform_indices = @transform_17, window_bounds = array<i64: 1, 1>}, {pipeline_mode = #tpu.pipeline_mode<synchronous>, transform_indices = @transform_18, window_bounds = array<i64: 1, 2>}]} {
    %c0 = arith.constant 0 : index
    %c0_0 = arith.constant 0 : index
    %0 = vector.load %arg2[%c0, %c0_0] : memref<3x8xf32, #tpu.memory_space<vmem>>, vector<3x8xf32>
    %c0_1 = arith.constant 0 : index
    %c0_2 = arith.constant 0 : index
    %1 = vector.load %arg3[%c0_1, %c0_2] : memref<24x1xf32, #tpu.memory_space<vmem>>, vector<24x1xf32>
    %c0_3 = arith.constant 0 : index
    %c0_4 = arith.constant 0 : index
    %2 = vector.load %arg4[%c0_3, %c0_4] : memref<2x32xf32, #tpu.memory_space<vmem>>, vector<2x32xf32>
    %c0_5 = arith.constant 0 : index
    %c0_6 = arith.constant 0 : index
    %3 = vector.load %arg1[%c0_5, %c0_6] : memref<24x32xf32, #tpu.memory_space<vmem>>, vector<24x32xf32>
    %4 = vector.extract_strided_slice %2 {offsets = [0, 0], sizes = [1, 32], strides = [1, 1]} : vector<2x32xf32> to vector<1x32xf32>
    %5 = vector.extract_strided_slice %2 {offsets = [1, 0], sizes = [1, 32], strides = [1, 1]} : vector<2x32xf32> to vector<1x32xf32>
    %cst = arith.constant dense<0.000000e+00> : vector<24xf32>
    %6 = vector.multi_reduction <add>, %3, %cst [1] : vector<24x32xf32> to vector<24xf32>
    %7 = vector.shape_cast %6 : vector<24xf32> to vector<24x1xf32>
    %cst_7 = arith.constant 3.200000e+01 : f32
    %8 = vector.broadcast %cst_7 : f32 to vector<24x1xf32>
    %9 = arith.divf %7, %8 : vector<24x1xf32>
    %10 = vector.broadcast %9 : vector<24x1xf32> to vector<24x32xf32>
    %11 = arith.subf %3, %10 : vector<24x32xf32>
    %12 = arith.mulf %11, %11 : vector<24x32xf32>
    %cst_8 = arith.constant dense<0.000000e+00> : vector<24xf32>
    %13 = vector.multi_reduction <add>, %12, %cst_8 [1] : vector<24x32xf32> to vector<24xf32>
    %14 = vector.shape_cast %13 : vector<24xf32> to vector<24x1xf32>
    %cst_9 = arith.constant 3.200000e+01 : f32
    %15 = vector.broadcast %cst_9 : f32 to vector<24x1xf32>
    %16 = arith.divf %14, %15 : vector<24x1xf32>
    %17 = vector.broadcast %9 : vector<24x1xf32> to vector<24x32xf32>
    %18 = arith.subf %3, %17 : vector<24x32xf32>
    %cst_10 = arith.constant 9.99999996E-13 : f32
    %19 = vector.broadcast %cst_10 : f32 to vector<24x1xf32>
    %20 = arith.addf %16, %19 : vector<24x1xf32>
    %21 = math.rsqrt %20 : vector<24x1xf32>
    %22 = vector.broadcast %21 : vector<24x1xf32> to vector<24x32xf32>
    %23 = arith.mulf %18, %22 : vector<24x32xf32>
    %24 = vector.broadcast %4 : vector<1x32xf32> to vector<24x32xf32>
    %25 = arith.mulf %23, %24 : vector<24x32xf32>
    %26 = vector.broadcast %5 : vector<1x32xf32> to vector<24x32xf32>
    %27 = arith.addf %25, %26 : vector<24x32xf32>
    %28 = arith.truncf %27 : vector<24x32xf32> to vector<24x32xbf16>
    %c0_11 = arith.constant 0 : index
    %c0_12 = arith.constant 0 : index
    %c0_13 = arith.constant 0 : index
    %29 = vector.load %arg5[%c0_11, %c0_12, %c0_13] : memref<2x32x96xbf16, #tpu.memory_space<vmem>>, vector<1x32x96xbf16>
    %30 = vector.shape_cast %29 : vector<1x32x96xbf16> to vector<32x96xbf16>
    %cst_14 = arith.constant dense<0.000000e+00> : vector<24x96xf32>
    %31 = tpu.matmul %28, %30, %cst_14 {dimension_numbers = #tpu.dot_dimension_numbers<[1], [0], [0], [1], [0, 0, 1, 1], [], []>} : vector<24x32xbf16>, vector<32x96xbf16>, vector<24x96xf32> -> vector<24x96xf32>
    %c0_15 = arith.constant 0 : index
    %c0_16 = arith.constant 0 : index
    %c0_17 = arith.constant 0 : index
    %32 = vector.load %arg6[%c0_15, %c0_16, %c0_17] : memref<2x1x96xf32, #tpu.memory_space<vmem>>, vector<1x1x96xf32>
    %33 = vector.shape_cast %32 : vector<1x1x96xf32> to vector<1x96xf32>
    %34 = vector.broadcast %33 : vector<1x96xf32> to vector<24x96xf32>
    %35 = arith.addf %31, %34 : vector<24x96xf32>
    %36 = vector.extract_strided_slice %35 {offsets = [0, 0], sizes = [8, 96], strides = [1, 1]} : vector<24x96xf32> to vector<8x96xf32>
    %37 = vector.extract_strided_slice %0 {offsets = [0, 0], sizes = [1, 8], strides = [1, 1]} : vector<3x8xf32> to vector<1x8xf32>
    %38 = vector.extract_strided_slice %36 {offsets = [0, 0], sizes = [8, 8], strides = [1, 1]} : vector<8x96xf32> to vector<8x8xf32>
    %39 = vector.extract_strided_slice %36 {offsets = [0, 32], sizes = [8, 8], strides = [1, 1]} : vector<8x96xf32> to vector<8x8xf32>
    %40 = vector.extract_strided_slice %36 {offsets = [0, 64], sizes = [8, 8], strides = [1, 1]} : vector<8x96xf32> to vector<8x8xf32>
    %cst_18 = arith.constant dense<0.000000e+00> : vector<8x8xf32>
    %41 = tpu.matmul %38, %39, %cst_18 {dimension_numbers = #tpu.dot_dimension_numbers<[1], [1], [0], [0], [0, 0, 1, 0], [], []>} : vector<8x8xf32>, vector<8x8xf32>, vector<8x8xf32> -> vector<8x8xf32>
    %cst_19 = arith.constant 0.353553385 : f32
    %42 = vector.broadcast %cst_19 : f32 to vector<8x8xf32>
    %43 = arith.mulf %41, %42 : vector<8x8xf32>
    %44 = vector.broadcast %37 : vector<1x8xf32> to vector<8x8xf32>
    %45 = arith.addf %43, %44 : vector<8x8xf32>
    %cst_20 = arith.constant dense<0xFF800000> : vector<8xf32>
    %46 = vector.multi_reduction <maximumf>, %45, %cst_20 [1] : vector<8x8xf32> to vector<8xf32>
    %47 = vector.shape_cast %46 : vector<8xf32> to vector<8x1xf32>
    %48 = vector.broadcast %47 : vector<8x1xf32> to vector<8x8xf32>
    %49 = arith.subf %45, %48 : vector<8x8xf32>
    %50 = math.exp %49 : vector<8x8xf32>
    %cst_21 = arith.constant dense<0.000000e+00> : vector<8xf32>
    %51 = vector.multi_reduction <add>, %50, %cst_21 [1] : vector<8x8xf32> to vector<8xf32>
    %52 = vector.shape_cast %51 : vector<8xf32> to vector<8x1xf32>
    %53 = tpu.reciprocal %52 {approx = true} : vector<8x1xf32> -> vector<8x1xf32>
    %54 = vector.broadcast %53 : vector<8x1xf32> to vector<8x8xf32>
    %55 = arith.mulf %50, %54 : vector<8x8xf32>
    %cst_22 = arith.constant dense<0.000000e+00> : vector<8x8xf32>
    %56 = tpu.matmul %55, %40, %cst_22 {dimension_numbers = #tpu.dot_dimension_numbers<[1], [0], [0], [1], [0, 0, 1, 1], [], []>} : vector<8x8xf32>, vector<8x8xf32>, vector<8x8xf32> -> vector<8x8xf32>
    %57 = vector.extract_strided_slice %36 {offsets = [0, 8], sizes = [8, 8], strides = [1, 1]} : vector<8x96xf32> to vector<8x8xf32>
    %58 = vector.extract_strided_slice %36 {offsets = [0, 40], sizes = [8, 8], strides = [1, 1]} : vector<8x96xf32> to vector<8x8xf32>
    %59 = vector.extract_strided_slice %36 {offsets = [0, 72], sizes = [8, 8], strides = [1, 1]} : vector<8x96xf32> to vector<8x8xf32>
    %cst_23 = arith.constant dense<0.000000e+00> : vector<8x8xf32>
    %60 = tpu.matmul %57, %58, %cst_23 {dimension_numbers = #tpu.dot_dimension_numbers<[1], [1], [0], [0], [0, 0, 1, 0], [], []>} : vector<8x8xf32>, vector<8x8xf32>, vector<8x8xf32> -> vector<8x8xf32>
    %cst_24 = arith.constant 0.353553385 : f32
    %61 = vector.broadcast %cst_24 : f32 to vector<8x8xf32>
    %62 = arith.mulf %60, %61 : vector<8x8xf32>
    %63 = vector.broadcast %37 : vector<1x8xf32> to vector<8x8xf32>
    %64 = arith.addf %62, %63 : vector<8x8xf32>
    %cst_25 = arith.constant dense<0xFF800000> : vector<8xf32>
    %65 = vector.multi_reduction <maximumf>, %64, %cst_25 [1] : vector<8x8xf32> to vector<8xf32>
    %66 = vector.shape_cast %65 : vector<8xf32> to vector<8x1xf32>
    %67 = vector.broadcast %66 : vector<8x1xf32> to vector<8x8xf32>
    %68 = arith.subf %64, %67 : vector<8x8xf32>
    %69 = math.exp %68 : vector<8x8xf32>
    %cst_26 = arith.constant dense<0.000000e+00> : vector<8xf32>
    %70 = vector.multi_reduction <add>, %69, %cst_26 [1] : vector<8x8xf32> to vector<8xf32>
    %71 = vector.shape_cast %70 : vector<8xf32> to vector<8x1xf32>
    %72 = tpu.reciprocal %71 {approx = true} : vector<8x1xf32> -> vector<8x1xf32>
    %73 = vector.broadcast %72 : vector<8x1xf32> to vector<8x8xf32>
    %74 = arith.mulf %69, %73 : vector<8x8xf32>
    %cst_27 = arith.constant dense<0.000000e+00> : vector<8x8xf32>
    %75 = tpu.matmul %74, %59, %cst_27 {dimension_numbers = #tpu.dot_dimension_numbers<[1], [0], [0], [1], [0, 0, 1, 1], [], []>} : vector<8x8xf32>, vector<8x8xf32>, vector<8x8xf32> -> vector<8x8xf32>
    %76 = vector.extract_strided_slice %36 {offsets = [0, 16], sizes = [8, 8], strides = [1, 1]} : vector<8x96xf32> to vector<8x8xf32>
    %77 = vector.extract_strided_slice %36 {offsets = [0, 48], sizes = [8, 8], strides = [1, 1]} : vector<8x96xf32> to vector<8x8xf32>
    %78 = vector.extract_strided_slice %36 {offsets = [0, 80], sizes = [8, 8], strides = [1, 1]} : vector<8x96xf32> to vector<8x8xf32>
    %cst_28 = arith.constant dense<0.000000e+00> : vector<8x8xf32>
    %79 = tpu.matmul %76, %77, %cst_28 {dimension_numbers = #tpu.dot_dimension_numbers<[1], [1], [0], [0], [0, 0, 1, 0], [], []>} : vector<8x8xf32>, vector<8x8xf32>, vector<8x8xf32> -> vector<8x8xf32>
    %cst_29 = arith.constant 0.353553385 : f32
    %80 = vector.broadcast %cst_29 : f32 to vector<8x8xf32>
    %81 = arith.mulf %79, %80 : vector<8x8xf32>
    %82 = vector.broadcast %37 : vector<1x8xf32> to vector<8x8xf32>
    %83 = arith.addf %81, %82 : vector<8x8xf32>
    %cst_30 = arith.constant dense<0xFF800000> : vector<8xf32>
    %84 = vector.multi_reduction <maximumf>, %83, %cst_30 [1] : vector<8x8xf32> to vector<8xf32>
    %85 = vector.shape_cast %84 : vector<8xf32> to vector<8x1xf32>
    %86 = vector.broadcast %85 : vector<8x1xf32> to vector<8x8xf32>
    %87 = arith.subf %83, %86 : vector<8x8xf32>
    %88 = math.exp %87 : vector<8x8xf32>
    %cst_31 = arith.constant dense<0.000000e+00> : vector<8xf32>
    %89 = vector.multi_reduction <add>, %88, %cst_31 [1] : vector<8x8xf32> to vector<8xf32>
    %90 = vector.shape_cast %89 : vector<8xf32> to vector<8x1xf32>
    %91 = tpu.reciprocal %90 {approx = true} : vector<8x1xf32> -> vector<8x1xf32>
    %92 = vector.broadcast %91 : vector<8x1xf32> to vector<8x8xf32>
    %93 = arith.mulf %88, %92 : vector<8x8xf32>
    %cst_32 = arith.constant dense<0.000000e+00> : vector<8x8xf32>
    %94 = tpu.matmul %93, %78, %cst_32 {dimension_numbers = #tpu.dot_dimension_numbers<[1], [0], [0], [1], [0, 0, 1, 1], [], []>} : vector<8x8xf32>, vector<8x8xf32>, vector<8x8xf32> -> vector<8x8xf32>
    %95 = vector.extract_strided_slice %36 {offsets = [0, 24], sizes = [8, 8], strides = [1, 1]} : vector<8x96xf32> to vector<8x8xf32>
    %96 = vector.extract_strided_slice %36 {offsets = [0, 56], sizes = [8, 8], strides = [1, 1]} : vector<8x96xf32> to vector<8x8xf32>
    %97 = vector.extract_strided_slice %36 {offsets = [0, 88], sizes = [8, 8], strides = [1, 1]} : vector<8x96xf32> to vector<8x8xf32>
    %cst_33 = arith.constant dense<0.000000e+00> : vector<8x8xf32>
    %98 = tpu.matmul %95, %96, %cst_33 {dimension_numbers = #tpu.dot_dimension_numbers<[1], [1], [0], [0], [0, 0, 1, 0], [], []>} : vector<8x8xf32>, vector<8x8xf32>, vector<8x8xf32> -> vector<8x8xf32>
    %cst_34 = arith.constant 0.353553385 : f32
    %99 = vector.broadcast %cst_34 : f32 to vector<8x8xf32>
    %100 = arith.mulf %98, %99 : vector<8x8xf32>
    %101 = vector.broadcast %37 : vector<1x8xf32> to vector<8x8xf32>
    %102 = arith.addf %100, %101 : vector<8x8xf32>
    %cst_35 = arith.constant dense<0xFF800000> : vector<8xf32>
    %103 = vector.multi_reduction <maximumf>, %102, %cst_35 [1] : vector<8x8xf32> to vector<8xf32>
    %104 = vector.shape_cast %103 : vector<8xf32> to vector<8x1xf32>
    %105 = vector.broadcast %104 : vector<8x1xf32> to vector<8x8xf32>
    %106 = arith.subf %102, %105 : vector<8x8xf32>
    %107 = math.exp %106 : vector<8x8xf32>
    %cst_36 = arith.constant dense<0.000000e+00> : vector<8xf32>
    %108 = vector.multi_reduction <add>, %107, %cst_36 [1] : vector<8x8xf32> to vector<8xf32>
    %109 = vector.shape_cast %108 : vector<8xf32> to vector<8x1xf32>
    %110 = tpu.reciprocal %109 {approx = true} : vector<8x1xf32> -> vector<8x1xf32>
    %111 = vector.broadcast %110 : vector<8x1xf32> to vector<8x8xf32>
    %112 = arith.mulf %107, %111 : vector<8x8xf32>
    %cst_37 = arith.constant dense<0.000000e+00> : vector<8x8xf32>
    %113 = tpu.matmul %112, %97, %cst_37 {dimension_numbers = #tpu.dot_dimension_numbers<[1], [0], [0], [1], [0, 0, 1, 1], [], []>} : vector<8x8xf32>, vector<8x8xf32>, vector<8x8xf32> -> vector<8x8xf32>
    %114 = tpu.concatenate %56, %75, %94, %113 in 1 : vector<8x8xf32>, vector<8x8xf32>, vector<8x8xf32>, vector<8x8xf32> -> vector<8x32xf32>
    %115 = vector.extract_strided_slice %35 {offsets = [8, 0], sizes = [8, 96], strides = [1, 1]} : vector<24x96xf32> to vector<8x96xf32>
    %116 = vector.extract_strided_slice %0 {offsets = [1, 0], sizes = [1, 8], strides = [1, 1]} : vector<3x8xf32> to vector<1x8xf32>
    %117 = vector.extract_strided_slice %115 {offsets = [0, 0], sizes = [8, 8], strides = [1, 1]} : vector<8x96xf32> to vector<8x8xf32>
    %118 = vector.extract_strided_slice %115 {offsets = [0, 32], sizes = [8, 8], strides = [1, 1]} : vector<8x96xf32> to vector<8x8xf32>
    %119 = vector.extract_strided_slice %115 {offsets = [0, 64], sizes = [8, 8], strides = [1, 1]} : vector<8x96xf32> to vector<8x8xf32>
    %cst_38 = arith.constant dense<0.000000e+00> : vector<8x8xf32>
    %120 = tpu.matmul %117, %118, %cst_38 {dimension_numbers = #tpu.dot_dimension_numbers<[1], [1], [0], [0], [0, 0, 1, 0], [], []>} : vector<8x8xf32>, vector<8x8xf32>, vector<8x8xf32> -> vector<8x8xf32>
    %cst_39 = arith.constant 0.353553385 : f32
    %121 = vector.broadcast %cst_39 : f32 to vector<8x8xf32>
    %122 = arith.mulf %120, %121 : vector<8x8xf32>
    %123 = vector.broadcast %116 : vector<1x8xf32> to vector<8x8xf32>
    %124 = arith.addf %122, %123 : vector<8x8xf32>
    %cst_40 = arith.constant dense<0xFF800000> : vector<8xf32>
    %125 = vector.multi_reduction <maximumf>, %124, %cst_40 [1] : vector<8x8xf32> to vector<8xf32>
    %126 = vector.shape_cast %125 : vector<8xf32> to vector<8x1xf32>
    %127 = vector.broadcast %126 : vector<8x1xf32> to vector<8x8xf32>
    %128 = arith.subf %124, %127 : vector<8x8xf32>
    %129 = math.exp %128 : vector<8x8xf32>
    %cst_41 = arith.constant dense<0.000000e+00> : vector<8xf32>
    %130 = vector.multi_reduction <add>, %129, %cst_41 [1] : vector<8x8xf32> to vector<8xf32>
    %131 = vector.shape_cast %130 : vector<8xf32> to vector<8x1xf32>
    %132 = tpu.reciprocal %131 {approx = true} : vector<8x1xf32> -> vector<8x1xf32>
    %133 = vector.broadcast %132 : vector<8x1xf32> to vector<8x8xf32>
    %134 = arith.mulf %129, %133 : vector<8x8xf32>
    %cst_42 = arith.constant dense<0.000000e+00> : vector<8x8xf32>
    %135 = tpu.matmul %134, %119, %cst_42 {dimension_numbers = #tpu.dot_dimension_numbers<[1], [0], [0], [1], [0, 0, 1, 1], [], []>} : vector<8x8xf32>, vector<8x8xf32>, vector<8x8xf32> -> vector<8x8xf32>
    %136 = vector.extract_strided_slice %115 {offsets = [0, 8], sizes = [8, 8], strides = [1, 1]} : vector<8x96xf32> to vector<8x8xf32>
    %137 = vector.extract_strided_slice %115 {offsets = [0, 40], sizes = [8, 8], strides = [1, 1]} : vector<8x96xf32> to vector<8x8xf32>
    %138 = vector.extract_strided_slice %115 {offsets = [0, 72], sizes = [8, 8], strides = [1, 1]} : vector<8x96xf32> to vector<8x8xf32>
    %cst_43 = arith.constant dense<0.000000e+00> : vector<8x8xf32>
    %139 = tpu.matmul %136, %137, %cst_43 {dimension_numbers = #tpu.dot_dimension_numbers<[1], [1], [0], [0], [0, 0, 1, 0], [], []>} : vector<8x8xf32>, vector<8x8xf32>, vector<8x8xf32> -> vector<8x8xf32>
    %cst_44 = arith.constant 0.353553385 : f32
    %140 = vector.broadcast %cst_44 : f32 to vector<8x8xf32>
    %141 = arith.mulf %139, %140 : vector<8x8xf32>
    %142 = vector.broadcast %116 : vector<1x8xf32> to vector<8x8xf32>
    %143 = arith.addf %141, %142 : vector<8x8xf32>
    %cst_45 = arith.constant dense<0xFF800000> : vector<8xf32>
    %144 = vector.multi_reduction <maximumf>, %143, %cst_45 [1] : vector<8x8xf32> to vector<8xf32>
    %145 = vector.shape_cast %144 : vector<8xf32> to vector<8x1xf32>
    %146 = vector.broadcast %145 : vector<8x1xf32> to vector<8x8xf32>
    %147 = arith.subf %143, %146 : vector<8x8xf32>
    %148 = math.exp %147 : vector<8x8xf32>
    %cst_46 = arith.constant dense<0.000000e+00> : vector<8xf32>
    %149 = vector.multi_reduction <add>, %148, %cst_46 [1] : vector<8x8xf32> to vector<8xf32>
    %150 = vector.shape_cast %149 : vector<8xf32> to vector<8x1xf32>
    %151 = tpu.reciprocal %150 {approx = true} : vector<8x1xf32> -> vector<8x1xf32>
    %152 = vector.broadcast %151 : vector<8x1xf32> to vector<8x8xf32>
    %153 = arith.mulf %148, %152 : vector<8x8xf32>
    %cst_47 = arith.constant dense<0.000000e+00> : vector<8x8xf32>
    %154 = tpu.matmul %153, %138, %cst_47 {dimension_numbers = #tpu.dot_dimension_numbers<[1], [0], [0], [1], [0, 0, 1, 1], [], []>} : vector<8x8xf32>, vector<8x8xf32>, vector<8x8xf32> -> vector<8x8xf32>
    %155 = vector.extract_strided_slice %115 {offsets = [0, 16], sizes = [8, 8], strides = [1, 1]} : vector<8x96xf32> to vector<8x8xf32>
    %156 = vector.extract_strided_slice %115 {offsets = [0, 48], sizes = [8, 8], strides = [1, 1]} : vector<8x96xf32> to vector<8x8xf32>
    %157 = vector.extract_strided_slice %115 {offsets = [0, 80], sizes = [8, 8], strides = [1, 1]} : vector<8x96xf32> to vector<8x8xf32>
    %cst_48 = arith.constant dense<0.000000e+00> : vector<8x8xf32>
    %158 = tpu.matmul %155, %156, %cst_48 {dimension_numbers = #tpu.dot_dimension_numbers<[1], [1], [0], [0], [0, 0, 1, 0], [], []>} : vector<8x8xf32>, vector<8x8xf32>, vector<8x8xf32> -> vector<8x8xf32>
    %cst_49 = arith.constant 0.353553385 : f32
    %159 = vector.broadcast %cst_49 : f32 to vector<8x8xf32>
    %160 = arith.mulf %158, %159 : vector<8x8xf32>
    %161 = vector.broadcast %116 : vector<1x8xf32> to vector<8x8xf32>
    %162 = arith.addf %160, %161 : vector<8x8xf32>
    %cst_50 = arith.constant dense<0xFF800000> : vector<8xf32>
    %163 = vector.multi_reduction <maximumf>, %162, %cst_50 [1] : vector<8x8xf32> to vector<8xf32>
    %164 = vector.shape_cast %163 : vector<8xf32> to vector<8x1xf32>
    %165 = vector.broadcast %164 : vector<8x1xf32> to vector<8x8xf32>
    %166 = arith.subf %162, %165 : vector<8x8xf32>
    %167 = math.exp %166 : vector<8x8xf32>
    %cst_51 = arith.constant dense<0.000000e+00> : vector<8xf32>
    %168 = vector.multi_reduction <add>, %167, %cst_51 [1] : vector<8x8xf32> to vector<8xf32>
    %169 = vector.shape_cast %168 : vector<8xf32> to vector<8x1xf32>
    %170 = tpu.reciprocal %169 {approx = true} : vector<8x1xf32> -> vector<8x1xf32>
    %171 = vector.broadcast %170 : vector<8x1xf32> to vector<8x8xf32>
    %172 = arith.mulf %167, %171 : vector<8x8xf32>
    %cst_52 = arith.constant dense<0.000000e+00> : vector<8x8xf32>
    %173 = tpu.matmul %172, %157, %cst_52 {dimension_numbers = #tpu.dot_dimension_numbers<[1], [0], [0], [1], [0, 0, 1, 1], [], []>} : vector<8x8xf32>, vector<8x8xf32>, vector<8x8xf32> -> vector<8x8xf32>
    %174 = vector.extract_strided_slice %115 {offsets = [0, 24], sizes = [8, 8], strides = [1, 1]} : vector<8x96xf32> to vector<8x8xf32>
    %175 = vector.extract_strided_slice %115 {offsets = [0, 56], sizes = [8, 8], strides = [1, 1]} : vector<8x96xf32> to vector<8x8xf32>
    %176 = vector.extract_strided_slice %115 {offsets = [0, 88], sizes = [8, 8], strides = [1, 1]} : vector<8x96xf32> to vector<8x8xf32>
    %cst_53 = arith.constant dense<0.000000e+00> : vector<8x8xf32>
    %177 = tpu.matmul %174, %175, %cst_53 {dimension_numbers = #tpu.dot_dimension_numbers<[1], [1], [0], [0], [0, 0, 1, 0], [], []>} : vector<8x8xf32>, vector<8x8xf32>, vector<8x8xf32> -> vector<8x8xf32>
    %cst_54 = arith.constant 0.353553385 : f32
    %178 = vector.broadcast %cst_54 : f32 to vector<8x8xf32>
    %179 = arith.mulf %177, %178 : vector<8x8xf32>
    %180 = vector.broadcast %116 : vector<1x8xf32> to vector<8x8xf32>
    %181 = arith.addf %179, %180 : vector<8x8xf32>
    %cst_55 = arith.constant dense<0xFF800000> : vector<8xf32>
    %182 = vector.multi_reduction <maximumf>, %181, %cst_55 [1] : vector<8x8xf32> to vector<8xf32>
    %183 = vector.shape_cast %182 : vector<8xf32> to vector<8x1xf32>
    %184 = vector.broadcast %183 : vector<8x1xf32> to vector<8x8xf32>
    %185 = arith.subf %181, %184 : vector<8x8xf32>
    %186 = math.exp %185 : vector<8x8xf32>
    %cst_56 = arith.constant dense<0.000000e+00> : vector<8xf32>
    %187 = vector.multi_reduction <add>, %186, %cst_56 [1] : vector<8x8xf32> to vector<8xf32>
    %188 = vector.shape_cast %187 : vector<8xf32> to vector<8x1xf32>
    %189 = tpu.reciprocal %188 {approx = true} : vector<8x1xf32> -> vector<8x1xf32>
    %190 = vector.broadcast %189 : vector<8x1xf32> to vector<8x8xf32>
    %191 = arith.mulf %186, %190 : vector<8x8xf32>
    %cst_57 = arith.constant dense<0.000000e+00> : vector<8x8xf32>
    %192 = tpu.matmul %191, %176, %cst_57 {dimension_numbers = #tpu.dot_dimension_numbers<[1], [0], [0], [1], [0, 0, 1, 1], [], []>} : vector<8x8xf32>, vector<8x8xf32>, vector<8x8xf32> -> vector<8x8xf32>
    %193 = tpu.concatenate %135, %154, %173, %192 in 1 : vector<8x8xf32>, vector<8x8xf32>, vector<8x8xf32>, vector<8x8xf32> -> vector<8x32xf32>
    %194 = vector.extract_strided_slice %35 {offsets = [16, 0], sizes = [8, 96], strides = [1, 1]} : vector<24x96xf32> to vector<8x96xf32>
    %195 = vector.extract_strided_slice %0 {offsets = [2, 0], sizes = [1, 8], strides = [1, 1]} : vector<3x8xf32> to vector<1x8xf32>
    %196 = vector.extract_strided_slice %194 {offsets = [0, 0], sizes = [8, 8], strides = [1, 1]} : vector<8x96xf32> to vector<8x8xf32>
    %197 = vector.extract_strided_slice %194 {offsets = [0, 32], sizes = [8, 8], strides = [1, 1]} : vector<8x96xf32> to vector<8x8xf32>
    %198 = vector.extract_strided_slice %194 {offsets = [0, 64], sizes = [8, 8], strides = [1, 1]} : vector<8x96xf32> to vector<8x8xf32>
    %cst_58 = arith.constant dense<0.000000e+00> : vector<8x8xf32>
    %199 = tpu.matmul %196, %197, %cst_58 {dimension_numbers = #tpu.dot_dimension_numbers<[1], [1], [0], [0], [0, 0, 1, 0], [], []>} : vector<8x8xf32>, vector<8x8xf32>, vector<8x8xf32> -> vector<8x8xf32>
    %cst_59 = arith.constant 0.353553385 : f32
    %200 = vector.broadcast %cst_59 : f32 to vector<8x8xf32>
    %201 = arith.mulf %199, %200 : vector<8x8xf32>
    %202 = vector.broadcast %195 : vector<1x8xf32> to vector<8x8xf32>
    %203 = arith.addf %201, %202 : vector<8x8xf32>
    %cst_60 = arith.constant dense<0xFF800000> : vector<8xf32>
    %204 = vector.multi_reduction <maximumf>, %203, %cst_60 [1] : vector<8x8xf32> to vector<8xf32>
    %205 = vector.shape_cast %204 : vector<8xf32> to vector<8x1xf32>
    %206 = vector.broadcast %205 : vector<8x1xf32> to vector<8x8xf32>
    %207 = arith.subf %203, %206 : vector<8x8xf32>
    %208 = math.exp %207 : vector<8x8xf32>
    %cst_61 = arith.constant dense<0.000000e+00> : vector<8xf32>
    %209 = vector.multi_reduction <add>, %208, %cst_61 [1] : vector<8x8xf32> to vector<8xf32>
    %210 = vector.shape_cast %209 : vector<8xf32> to vector<8x1xf32>
    %211 = tpu.reciprocal %210 {approx = true} : vector<8x1xf32> -> vector<8x1xf32>
    %212 = vector.broadcast %211 : vector<8x1xf32> to vector<8x8xf32>
    %213 = arith.mulf %208, %212 : vector<8x8xf32>
    %cst_62 = arith.constant dense<0.000000e+00> : vector<8x8xf32>
    %214 = tpu.matmul %213, %198, %cst_62 {dimension_numbers = #tpu.dot_dimension_numbers<[1], [0], [0], [1], [0, 0, 1, 1], [], []>} : vector<8x8xf32>, vector<8x8xf32>, vector<8x8xf32> -> vector<8x8xf32>
    %215 = vector.extract_strided_slice %194 {offsets = [0, 8], sizes = [8, 8], strides = [1, 1]} : vector<8x96xf32> to vector<8x8xf32>
    %216 = vector.extract_strided_slice %194 {offsets = [0, 40], sizes = [8, 8], strides = [1, 1]} : vector<8x96xf32> to vector<8x8xf32>
    %217 = vector.extract_strided_slice %194 {offsets = [0, 72], sizes = [8, 8], strides = [1, 1]} : vector<8x96xf32> to vector<8x8xf32>
    %cst_63 = arith.constant dense<0.000000e+00> : vector<8x8xf32>
    %218 = tpu.matmul %215, %216, %cst_63 {dimension_numbers = #tpu.dot_dimension_numbers<[1], [1], [0], [0], [0, 0, 1, 0], [], []>} : vector<8x8xf32>, vector<8x8xf32>, vector<8x8xf32> -> vector<8x8xf32>
    %cst_64 = arith.constant 0.353553385 : f32
    %219 = vector.broadcast %cst_64 : f32 to vector<8x8xf32>
    %220 = arith.mulf %218, %219 : vector<8x8xf32>
    %221 = vector.broadcast %195 : vector<1x8xf32> to vector<8x8xf32>
    %222 = arith.addf %220, %221 : vector<8x8xf32>
    %cst_65 = arith.constant dense<0xFF800000> : vector<8xf32>
    %223 = vector.multi_reduction <maximumf>, %222, %cst_65 [1] : vector<8x8xf32> to vector<8xf32>
    %224 = vector.shape_cast %223 : vector<8xf32> to vector<8x1xf32>
    %225 = vector.broadcast %224 : vector<8x1xf32> to vector<8x8xf32>
    %226 = arith.subf %222, %225 : vector<8x8xf32>
    %227 = math.exp %226 : vector<8x8xf32>
    %cst_66 = arith.constant dense<0.000000e+00> : vector<8xf32>
    %228 = vector.multi_reduction <add>, %227, %cst_66 [1] : vector<8x8xf32> to vector<8xf32>
    %229 = vector.shape_cast %228 : vector<8xf32> to vector<8x1xf32>
    %230 = tpu.reciprocal %229 {approx = true} : vector<8x1xf32> -> vector<8x1xf32>
    %231 = vector.broadcast %230 : vector<8x1xf32> to vector<8x8xf32>
    %232 = arith.mulf %227, %231 : vector<8x8xf32>
    %cst_67 = arith.constant dense<0.000000e+00> : vector<8x8xf32>
    %233 = tpu.matmul %232, %217, %cst_67 {dimension_numbers = #tpu.dot_dimension_numbers<[1], [0], [0], [1], [0, 0, 1, 1], [], []>} : vector<8x8xf32>, vector<8x8xf32>, vector<8x8xf32> -> vector<8x8xf32>
    %234 = vector.extract_strided_slice %194 {offsets = [0, 16], sizes = [8, 8], strides = [1, 1]} : vector<8x96xf32> to vector<8x8xf32>
    %235 = vector.extract_strided_slice %194 {offsets = [0, 48], sizes = [8, 8], strides = [1, 1]} : vector<8x96xf32> to vector<8x8xf32>
    %236 = vector.extract_strided_slice %194 {offsets = [0, 80], sizes = [8, 8], strides = [1, 1]} : vector<8x96xf32> to vector<8x8xf32>
    %cst_68 = arith.constant dense<0.000000e+00> : vector<8x8xf32>
    %237 = tpu.matmul %234, %235, %cst_68 {dimension_numbers = #tpu.dot_dimension_numbers<[1], [1], [0], [0], [0, 0, 1, 0], [], []>} : vector<8x8xf32>, vector<8x8xf32>, vector<8x8xf32> -> vector<8x8xf32>
    %cst_69 = arith.constant 0.353553385 : f32
    %238 = vector.broadcast %cst_69 : f32 to vector<8x8xf32>
    %239 = arith.mulf %237, %238 : vector<8x8xf32>
    %240 = vector.broadcast %195 : vector<1x8xf32> to vector<8x8xf32>
    %241 = arith.addf %239, %240 : vector<8x8xf32>
    %cst_70 = arith.constant dense<0xFF800000> : vector<8xf32>
    %242 = vector.multi_reduction <maximumf>, %241, %cst_70 [1] : vector<8x8xf32> to vector<8xf32>
    %243 = vector.shape_cast %242 : vector<8xf32> to vector<8x1xf32>
    %244 = vector.broadcast %243 : vector<8x1xf32> to vector<8x8xf32>
    %245 = arith.subf %241, %244 : vector<8x8xf32>
    %246 = math.exp %245 : vector<8x8xf32>
    %cst_71 = arith.constant dense<0.000000e+00> : vector<8xf32>
    %247 = vector.multi_reduction <add>, %246, %cst_71 [1] : vector<8x8xf32> to vector<8xf32>
    %248 = vector.shape_cast %247 : vector<8xf32> to vector<8x1xf32>
    %249 = tpu.reciprocal %248 {approx = true} : vector<8x1xf32> -> vector<8x1xf32>
    %250 = vector.broadcast %249 : vector<8x1xf32> to vector<8x8xf32>
    %251 = arith.mulf %246, %250 : vector<8x8xf32>
    %cst_72 = arith.constant dense<0.000000e+00> : vector<8x8xf32>
    %252 = tpu.matmul %251, %236, %cst_72 {dimension_numbers = #tpu.dot_dimension_numbers<[1], [0], [0], [1], [0, 0, 1, 1], [], []>} : vector<8x8xf32>, vector<8x8xf32>, vector<8x8xf32> -> vector<8x8xf32>
    %253 = vector.extract_strided_slice %194 {offsets = [0, 24], sizes = [8, 8], strides = [1, 1]} : vector<8x96xf32> to vector<8x8xf32>
    %254 = vector.extract_strided_slice %194 {offsets = [0, 56], sizes = [8, 8], strides = [1, 1]} : vector<8x96xf32> to vector<8x8xf32>
    %255 = vector.extract_strided_slice %194 {offsets = [0, 88], sizes = [8, 8], strides = [1, 1]} : vector<8x96xf32> to vector<8x8xf32>
    %cst_73 = arith.constant dense<0.000000e+00> : vector<8x8xf32>
    %256 = tpu.matmul %253, %254, %cst_73 {dimension_numbers = #tpu.dot_dimension_numbers<[1], [1], [0], [0], [0, 0, 1, 0], [], []>} : vector<8x8xf32>, vector<8x8xf32>, vector<8x8xf32> -> vector<8x8xf32>
    %cst_74 = arith.constant 0.353553385 : f32
    %257 = vector.broadcast %cst_74 : f32 to vector<8x8xf32>
    %258 = arith.mulf %256, %257 : vector<8x8xf32>
    %259 = vector.broadcast %195 : vector<1x8xf32> to vector<8x8xf32>
    %260 = arith.addf %258, %259 : vector<8x8xf32>
    %cst_75 = arith.constant dense<0xFF800000> : vector<8xf32>
    %261 = vector.multi_reduction <maximumf>, %260, %cst_75 [1] : vector<8x8xf32> to vector<8xf32>
    %262 = vector.shape_cast %261 : vector<8xf32> to vector<8x1xf32>
    %263 = vector.broadcast %262 : vector<8x1xf32> to vector<8x8xf32>
    %264 = arith.subf %260, %263 : vector<8x8xf32>
    %265 = math.exp %264 : vector<8x8xf32>
    %cst_76 = arith.constant dense<0.000000e+00> : vector<8xf32>
    %266 = vector.multi_reduction <add>, %265, %cst_76 [1] : vector<8x8xf32> to vector<8xf32>
    %267 = vector.shape_cast %266 : vector<8xf32> to vector<8x1xf32>
    %268 = tpu.reciprocal %267 {approx = true} : vector<8x1xf32> -> vector<8x1xf32>
    %269 = vector.broadcast %268 : vector<8x1xf32> to vector<8x8xf32>
    %270 = arith.mulf %265, %269 : vector<8x8xf32>
    %cst_77 = arith.constant dense<0.000000e+00> : vector<8x8xf32>
    %271 = tpu.matmul %270, %255, %cst_77 {dimension_numbers = #tpu.dot_dimension_numbers<[1], [0], [0], [1], [0, 0, 1, 1], [], []>} : vector<8x8xf32>, vector<8x8xf32>, vector<8x8xf32> -> vector<8x8xf32>
    %272 = tpu.concatenate %214, %233, %252, %271 in 1 : vector<8x8xf32>, vector<8x8xf32>, vector<8x8xf32>, vector<8x8xf32> -> vector<8x32xf32>
    %273 = tpu.concatenate %114, %193, %272 in 0 : vector<8x32xf32>, vector<8x32xf32>, vector<8x32xf32> -> vector<24x32xf32>
    %274 = arith.truncf %273 : vector<24x32xf32> to vector<24x32xbf16>
    %c0_78 = arith.constant 0 : index
    %c0_79 = arith.constant 0 : index
    %c0_80 = arith.constant 0 : index
    %275 = vector.load %arg7[%c0_78, %c0_79, %c0_80] : memref<2x32x32xbf16, #tpu.memory_space<vmem>>, vector<1x32x32xbf16>
    %276 = vector.shape_cast %275 : vector<1x32x32xbf16> to vector<32x32xbf16>
    %cst_81 = arith.constant dense<0.000000e+00> : vector<24x32xf32>
    %277 = tpu.matmul %274, %276, %cst_81 {dimension_numbers = #tpu.dot_dimension_numbers<[1], [0], [0], [1], [0, 0, 1, 1], [], []>} : vector<24x32xbf16>, vector<32x32xbf16>, vector<24x32xf32> -> vector<24x32xf32>
    %c0_82 = arith.constant 0 : index
    %c0_83 = arith.constant 0 : index
    %c0_84 = arith.constant 0 : index
    %278 = vector.load %arg8[%c0_82, %c0_83, %c0_84] : memref<2x1x32xf32, #tpu.memory_space<vmem>>, vector<1x1x32xf32>
    %279 = vector.shape_cast %278 : vector<1x1x32xf32> to vector<1x32xf32>
    %280 = vector.broadcast %279 : vector<1x32xf32> to vector<24x32xf32>
    %281 = arith.addf %277, %280 : vector<24x32xf32>
    %c0_85 = arith.constant 0 : index
    %c0_86 = arith.constant 0 : index
    %c0_87 = arith.constant 0 : index
    %282 = vector.load %arg9[%c0_85, %c0_86, %c0_87] : memref<2x2x32xf32, #tpu.memory_space<vmem>>, vector<1x2x32xf32>
    %283 = vector.shape_cast %282 : vector<1x2x32xf32> to vector<2x32xf32>
    %284 = arith.addf %281, %27 : vector<24x32xf32>
    %285 = vector.extract_strided_slice %283 {offsets = [0, 0], sizes = [1, 32], strides = [1, 1]} : vector<2x32xf32> to vector<1x32xf32>
    %286 = vector.extract_strided_slice %283 {offsets = [1, 0], sizes = [1, 32], strides = [1, 1]} : vector<2x32xf32> to vector<1x32xf32>
    %cst_88 = arith.constant dense<0.000000e+00> : vector<24xf32>
    %287 = vector.multi_reduction <add>, %284, %cst_88 [1] : vector<24x32xf32> to vector<24xf32>
    %288 = vector.shape_cast %287 : vector<24xf32> to vector<24x1xf32>
    %cst_89 = arith.constant 3.200000e+01 : f32
    %289 = vector.broadcast %cst_89 : f32 to vector<24x1xf32>
    %290 = arith.divf %288, %289 : vector<24x1xf32>
    %291 = vector.broadcast %290 : vector<24x1xf32> to vector<24x32xf32>
    %292 = arith.subf %284, %291 : vector<24x32xf32>
    %293 = arith.mulf %292, %292 : vector<24x32xf32>
    %cst_90 = arith.constant dense<0.000000e+00> : vector<24xf32>
    %294 = vector.multi_reduction <add>, %293, %cst_90 [1] : vector<24x32xf32> to vector<24xf32>
    %295 = vector.shape_cast %294 : vector<24xf32> to vector<24x1xf32>
    %cst_91 = arith.constant 3.200000e+01 : f32
    %296 = vector.broadcast %cst_91 : f32 to vector<24x1xf32>
    %297 = arith.divf %295, %296 : vector<24x1xf32>
    %298 = vector.broadcast %290 : vector<24x1xf32> to vector<24x32xf32>
    %299 = arith.subf %284, %298 : vector<24x32xf32>
    %cst_92 = arith.constant 9.99999996E-13 : f32
    %300 = vector.broadcast %cst_92 : f32 to vector<24x1xf32>
    %301 = arith.addf %297, %300 : vector<24x1xf32>
    %302 = math.rsqrt %301 : vector<24x1xf32>
    %303 = vector.broadcast %302 : vector<24x1xf32> to vector<24x32xf32>
    %304 = arith.mulf %299, %303 : vector<24x32xf32>
    %305 = vector.broadcast %285 : vector<1x32xf32> to vector<24x32xf32>
    %306 = arith.mulf %304, %305 : vector<24x32xf32>
    %307 = vector.broadcast %286 : vector<1x32xf32> to vector<24x32xf32>
    %308 = arith.addf %306, %307 : vector<24x32xf32>
    %309 = arith.truncf %308 : vector<24x32xf32> to vector<24x32xbf16>
    %c0_93 = arith.constant 0 : index
    %c0_94 = arith.constant 0 : index
    %c0_95 = arith.constant 0 : index
    %310 = vector.load %arg10[%c0_93, %c0_94, %c0_95] : memref<2x32x64xbf16, #tpu.memory_space<vmem>>, vector<1x32x64xbf16>
    %311 = vector.shape_cast %310 : vector<1x32x64xbf16> to vector<32x64xbf16>
    %cst_96 = arith.constant dense<0.000000e+00> : vector<24x64xf32>
    %312 = tpu.matmul %309, %311, %cst_96 {dimension_numbers = #tpu.dot_dimension_numbers<[1], [0], [0], [1], [0, 0, 1, 1], [], []>} : vector<24x32xbf16>, vector<32x64xbf16>, vector<24x64xf32> -> vector<24x64xf32>
    %c0_97 = arith.constant 0 : index
    %c0_98 = arith.constant 0 : index
    %c0_99 = arith.constant 0 : index
    %313 = vector.load %arg11[%c0_97, %c0_98, %c0_99] : memref<2x1x64xf32, #tpu.memory_space<vmem>>, vector<1x1x64xf32>
    %314 = vector.shape_cast %313 : vector<1x1x64xf32> to vector<1x64xf32>
    %315 = vector.broadcast %314 : vector<1x64xf32> to vector<24x64xf32>
    %316 = arith.addf %312, %315 : vector<24x64xf32>
    %317 = arith.mulf %316, %316 : vector<24x64xf32>
    %318 = arith.mulf %316, %317 : vector<24x64xf32>
    %cst_100 = arith.constant 4.471500e-02 : f32
    %319 = vector.broadcast %cst_100 : f32 to vector<24x64xf32>
    %320 = arith.mulf %319, %318 : vector<24x64xf32>
    %321 = arith.addf %316, %320 : vector<24x64xf32>
    %cst_101 = arith.constant 0.797884583 : f32
    %322 = vector.broadcast %cst_101 : f32 to vector<24x64xf32>
    %323 = arith.mulf %322, %321 : vector<24x64xf32>
    %324 = math.tanh %323 : vector<24x64xf32>
    %cst_102 = arith.constant 1.000000e+00 : f32
    %325 = vector.broadcast %cst_102 : f32 to vector<24x64xf32>
    %326 = arith.addf %325, %324 : vector<24x64xf32>
    %cst_103 = arith.constant 5.000000e-01 : f32
    %327 = vector.broadcast %cst_103 : f32 to vector<24x64xf32>
    %328 = arith.mulf %327, %326 : vector<24x64xf32>
    %329 = arith.mulf %316, %328 : vector<24x64xf32>
    %330 = arith.truncf %329 : vector<24x64xf32> to vector<24x64xbf16>
    %c0_104 = arith.constant 0 : index
    %c0_105 = arith.constant 0 : index
    %c0_106 = arith.constant 0 : index
    %331 = vector.load %arg12[%c0_104, %c0_105, %c0_106] : memref<2x64x32xbf16, #tpu.memory_space<vmem>>, vector<1x64x32xbf16>
    %332 = vector.shape_cast %331 : vector<1x64x32xbf16> to vector<64x32xbf16>
    %cst_107 = arith.constant dense<0.000000e+00> : vector<24x32xf32>
    %333 = tpu.matmul %330, %332, %cst_107 {dimension_numbers = #tpu.dot_dimension_numbers<[1], [0], [0], [1], [0, 0, 1, 1], [], []>} : vector<24x64xbf16>, vector<64x32xbf16>, vector<24x32xf32> -> vector<24x32xf32>
    %c0_108 = arith.constant 0 : index
    %c0_109 = arith.constant 0 : index
    %c0_110 = arith.constant 0 : index
    %334 = vector.load %arg13[%c0_108, %c0_109, %c0_110] : memref<2x1x32xf32, #tpu.memory_space<vmem>>, vector<1x1x32xf32>
    %335 = vector.shape_cast %334 : vector<1x1x32xf32> to vector<1x32xf32>
    %336 = vector.broadcast %335 : vector<1x32xf32> to vector<24x32xf32>
    %337 = arith.addf %333, %336 : vector<24x32xf32>
    %c0_111 = arith.constant 0 : index
    %c0_112 = arith.constant 0 : index
    %c0_113 = arith.constant 0 : index
    %338 = vector.load %arg14[%c0_111, %c0_112, %c0_113] : memref<2x2x32xf32, #tpu.memory_space<vmem>>, vector<1x2x32xf32>
    %339 = vector.shape_cast %338 : vector<1x2x32xf32> to vector<2x32xf32>
    %340 = arith.addf %337, %308 : vector<24x32xf32>
    %341 = vector.extract_strided_slice %339 {offsets = [0, 0], sizes = [1, 32], strides = [1, 1]} : vector<2x32xf32> to vector<1x32xf32>
    %342 = vector.extract_strided_slice %339 {offsets = [1, 0], sizes = [1, 32], strides = [1, 1]} : vector<2x32xf32> to vector<1x32xf32>
    %cst_114 = arith.constant dense<0.000000e+00> : vector<24xf32>
    %343 = vector.multi_reduction <add>, %340, %cst_114 [1] : vector<24x32xf32> to vector<24xf32>
    %344 = vector.shape_cast %343 : vector<24xf32> to vector<24x1xf32>
    %cst_115 = arith.constant 3.200000e+01 : f32
    %345 = vector.broadcast %cst_115 : f32 to vector<24x1xf32>
    %346 = arith.divf %344, %345 : vector<24x1xf32>
    %347 = vector.broadcast %346 : vector<24x1xf32> to vector<24x32xf32>
    %348 = arith.subf %340, %347 : vector<24x32xf32>
    %349 = arith.mulf %348, %348 : vector<24x32xf32>
    %cst_116 = arith.constant dense<0.000000e+00> : vector<24xf32>
    %350 = vector.multi_reduction <add>, %349, %cst_116 [1] : vector<24x32xf32> to vector<24xf32>
    %351 = vector.shape_cast %350 : vector<24xf32> to vector<24x1xf32>
    %cst_117 = arith.constant 3.200000e+01 : f32
    %352 = vector.broadcast %cst_117 : f32 to vector<24x1xf32>
    %353 = arith.divf %351, %352 : vector<24x1xf32>
    %354 = vector.broadcast %346 : vector<24x1xf32> to vector<24x32xf32>
    %355 = arith.subf %340, %354 : vector<24x32xf32>
    %cst_118 = arith.constant 9.99999996E-13 : f32
    %356 = vector.broadcast %cst_118 : f32 to vector<24x1xf32>
    %357 = arith.addf %353, %356 : vector<24x1xf32>
    %358 = math.rsqrt %357 : vector<24x1xf32>
    %359 = vector.broadcast %358 : vector<24x1xf32> to vector<24x32xf32>
    %360 = arith.mulf %355, %359 : vector<24x32xf32>
    %361 = vector.broadcast %341 : vector<1x32xf32> to vector<24x32xf32>
    %362 = arith.mulf %360, %361 : vector<24x32xf32>
    %363 = vector.broadcast %342 : vector<1x32xf32> to vector<24x32xf32>
    %364 = arith.addf %362, %363 : vector<24x32xf32>
    %365 = arith.truncf %364 : vector<24x32xf32> to vector<24x32xbf16>
    %c1 = arith.constant 1 : index
    %c0_119 = arith.constant 0 : index
    %c0_120 = arith.constant 0 : index
    %366 = vector.load %arg5[%c1, %c0_119, %c0_120] : memref<2x32x96xbf16, #tpu.memory_space<vmem>>, vector<1x32x96xbf16>
    %367 = vector.shape_cast %366 : vector<1x32x96xbf16> to vector<32x96xbf16>
    %cst_121 = arith.constant dense<0.000000e+00> : vector<24x96xf32>
    %368 = tpu.matmul %365, %367, %cst_121 {dimension_numbers = #tpu.dot_dimension_numbers<[1], [0], [0], [1], [0, 0, 1, 1], [], []>} : vector<24x32xbf16>, vector<32x96xbf16>, vector<24x96xf32> -> vector<24x96xf32>
    %c1_122 = arith.constant 1 : index
    %c0_123 = arith.constant 0 : index
    %c0_124 = arith.constant 0 : index
    %369 = vector.load %arg6[%c1_122, %c0_123, %c0_124] : memref<2x1x96xf32, #tpu.memory_space<vmem>>, vector<1x1x96xf32>
    %370 = vector.shape_cast %369 : vector<1x1x96xf32> to vector<1x96xf32>
    %371 = vector.broadcast %370 : vector<1x96xf32> to vector<24x96xf32>
    %372 = arith.addf %368, %371 : vector<24x96xf32>
    %373 = vector.extract_strided_slice %372 {offsets = [0, 0], sizes = [8, 96], strides = [1, 1]} : vector<24x96xf32> to vector<8x96xf32>
    %374 = vector.extract_strided_slice %0 {offsets = [0, 0], sizes = [1, 8], strides = [1, 1]} : vector<3x8xf32> to vector<1x8xf32>
    %375 = vector.extract_strided_slice %373 {offsets = [0, 0], sizes = [8, 8], strides = [1, 1]} : vector<8x96xf32> to vector<8x8xf32>
    %376 = vector.extract_strided_slice %373 {offsets = [0, 32], sizes = [8, 8], strides = [1, 1]} : vector<8x96xf32> to vector<8x8xf32>
    %377 = vector.extract_strided_slice %373 {offsets = [0, 64], sizes = [8, 8], strides = [1, 1]} : vector<8x96xf32> to vector<8x8xf32>
    %cst_125 = arith.constant dense<0.000000e+00> : vector<8x8xf32>
    %378 = tpu.matmul %375, %376, %cst_125 {dimension_numbers = #tpu.dot_dimension_numbers<[1], [1], [0], [0], [0, 0, 1, 0], [], []>} : vector<8x8xf32>, vector<8x8xf32>, vector<8x8xf32> -> vector<8x8xf32>
    %cst_126 = arith.constant 0.353553385 : f32
    %379 = vector.broadcast %cst_126 : f32 to vector<8x8xf32>
    %380 = arith.mulf %378, %379 : vector<8x8xf32>
    %381 = vector.broadcast %374 : vector<1x8xf32> to vector<8x8xf32>
    %382 = arith.addf %380, %381 : vector<8x8xf32>
    %cst_127 = arith.constant dense<0xFF800000> : vector<8xf32>
    %383 = vector.multi_reduction <maximumf>, %382, %cst_127 [1] : vector<8x8xf32> to vector<8xf32>
    %384 = vector.shape_cast %383 : vector<8xf32> to vector<8x1xf32>
    %385 = vector.broadcast %384 : vector<8x1xf32> to vector<8x8xf32>
    %386 = arith.subf %382, %385 : vector<8x8xf32>
    %387 = math.exp %386 : vector<8x8xf32>
    %cst_128 = arith.constant dense<0.000000e+00> : vector<8xf32>
    %388 = vector.multi_reduction <add>, %387, %cst_128 [1] : vector<8x8xf32> to vector<8xf32>
    %389 = vector.shape_cast %388 : vector<8xf32> to vector<8x1xf32>
    %390 = tpu.reciprocal %389 {approx = true} : vector<8x1xf32> -> vector<8x1xf32>
    %391 = vector.broadcast %390 : vector<8x1xf32> to vector<8x8xf32>
    %392 = arith.mulf %387, %391 : vector<8x8xf32>
    %cst_129 = arith.constant dense<0.000000e+00> : vector<8x8xf32>
    %393 = tpu.matmul %392, %377, %cst_129 {dimension_numbers = #tpu.dot_dimension_numbers<[1], [0], [0], [1], [0, 0, 1, 1], [], []>} : vector<8x8xf32>, vector<8x8xf32>, vector<8x8xf32> -> vector<8x8xf32>
    %394 = vector.extract_strided_slice %373 {offsets = [0, 8], sizes = [8, 8], strides = [1, 1]} : vector<8x96xf32> to vector<8x8xf32>
    %395 = vector.extract_strided_slice %373 {offsets = [0, 40], sizes = [8, 8], strides = [1, 1]} : vector<8x96xf32> to vector<8x8xf32>
    %396 = vector.extract_strided_slice %373 {offsets = [0, 72], sizes = [8, 8], strides = [1, 1]} : vector<8x96xf32> to vector<8x8xf32>
    %cst_130 = arith.constant dense<0.000000e+00> : vector<8x8xf32>
    %397 = tpu.matmul %394, %395, %cst_130 {dimension_numbers = #tpu.dot_dimension_numbers<[1], [1], [0], [0], [0, 0, 1, 0], [], []>} : vector<8x8xf32>, vector<8x8xf32>, vector<8x8xf32> -> vector<8x8xf32>
    %cst_131 = arith.constant 0.353553385 : f32
    %398 = vector.broadcast %cst_131 : f32 to vector<8x8xf32>
    %399 = arith.mulf %397, %398 : vector<8x8xf32>
    %400 = vector.broadcast %374 : vector<1x8xf32> to vector<8x8xf32>
    %401 = arith.addf %399, %400 : vector<8x8xf32>
    %cst_132 = arith.constant dense<0xFF800000> : vector<8xf32>
    %402 = vector.multi_reduction <maximumf>, %401, %cst_132 [1] : vector<8x8xf32> to vector<8xf32>
    %403 = vector.shape_cast %402 : vector<8xf32> to vector<8x1xf32>
    %404 = vector.broadcast %403 : vector<8x1xf32> to vector<8x8xf32>
    %405 = arith.subf %401, %404 : vector<8x8xf32>
    %406 = math.exp %405 : vector<8x8xf32>
    %cst_133 = arith.constant dense<0.000000e+00> : vector<8xf32>
    %407 = vector.multi_reduction <add>, %406, %cst_133 [1] : vector<8x8xf32> to vector<8xf32>
    %408 = vector.shape_cast %407 : vector<8xf32> to vector<8x1xf32>
    %409 = tpu.reciprocal %408 {approx = true} : vector<8x1xf32> -> vector<8x1xf32>
    %410 = vector.broadcast %409 : vector<8x1xf32> to vector<8x8xf32>
    %411 = arith.mulf %406, %410 : vector<8x8xf32>
    %cst_134 = arith.constant dense<0.000000e+00> : vector<8x8xf32>
    %412 = tpu.matmul %411, %396, %cst_134 {dimension_numbers = #tpu.dot_dimension_numbers<[1], [0], [0], [1], [0, 0, 1, 1], [], []>} : vector<8x8xf32>, vector<8x8xf32>, vector<8x8xf32> -> vector<8x8xf32>
    %413 = vector.extract_strided_slice %373 {offsets = [0, 16], sizes = [8, 8], strides = [1, 1]} : vector<8x96xf32> to vector<8x8xf32>
    %414 = vector.extract_strided_slice %373 {offsets = [0, 48], sizes = [8, 8], strides = [1, 1]} : vector<8x96xf32> to vector<8x8xf32>
    %415 = vector.extract_strided_slice %373 {offsets = [0, 80], sizes = [8, 8], strides = [1, 1]} : vector<8x96xf32> to vector<8x8xf32>
    %cst_135 = arith.constant dense<0.000000e+00> : vector<8x8xf32>
    %416 = tpu.matmul %413, %414, %cst_135 {dimension_numbers = #tpu.dot_dimension_numbers<[1], [1], [0], [0], [0, 0, 1, 0], [], []>} : vector<8x8xf32>, vector<8x8xf32>, vector<8x8xf32> -> vector<8x8xf32>
    %cst_136 = arith.constant 0.353553385 : f32
    %417 = vector.broadcast %cst_136 : f32 to vector<8x8xf32>
    %418 = arith.mulf %416, %417 : vector<8x8xf32>
    %419 = vector.broadcast %374 : vector<1x8xf32> to vector<8x8xf32>
    %420 = arith.addf %418, %419 : vector<8x8xf32>
    %cst_137 = arith.constant dense<0xFF800000> : vector<8xf32>
    %421 = vector.multi_reduction <maximumf>, %420, %cst_137 [1] : vector<8x8xf32> to vector<8xf32>
    %422 = vector.shape_cast %421 : vector<8xf32> to vector<8x1xf32>
    %423 = vector.broadcast %422 : vector<8x1xf32> to vector<8x8xf32>
    %424 = arith.subf %420, %423 : vector<8x8xf32>
    %425 = math.exp %424 : vector<8x8xf32>
    %cst_138 = arith.constant dense<0.000000e+00> : vector<8xf32>
    %426 = vector.multi_reduction <add>, %425, %cst_138 [1] : vector<8x8xf32> to vector<8xf32>
    %427 = vector.shape_cast %426 : vector<8xf32> to vector<8x1xf32>
    %428 = tpu.reciprocal %427 {approx = true} : vector<8x1xf32> -> vector<8x1xf32>
    %429 = vector.broadcast %428 : vector<8x1xf32> to vector<8x8xf32>
    %430 = arith.mulf %425, %429 : vector<8x8xf32>
    %cst_139 = arith.constant dense<0.000000e+00> : vector<8x8xf32>
    %431 = tpu.matmul %430, %415, %cst_139 {dimension_numbers = #tpu.dot_dimension_numbers<[1], [0], [0], [1], [0, 0, 1, 1], [], []>} : vector<8x8xf32>, vector<8x8xf32>, vector<8x8xf32> -> vector<8x8xf32>
    %432 = vector.extract_strided_slice %373 {offsets = [0, 24], sizes = [8, 8], strides = [1, 1]} : vector<8x96xf32> to vector<8x8xf32>
    %433 = vector.extract_strided_slice %373 {offsets = [0, 56], sizes = [8, 8], strides = [1, 1]} : vector<8x96xf32> to vector<8x8xf32>
    %434 = vector.extract_strided_slice %373 {offsets = [0, 88], sizes = [8, 8], strides = [1, 1]} : vector<8x96xf32> to vector<8x8xf32>
    %cst_140 = arith.constant dense<0.000000e+00> : vector<8x8xf32>
    %435 = tpu.matmul %432, %433, %cst_140 {dimension_numbers = #tpu.dot_dimension_numbers<[1], [1], [0], [0], [0, 0, 1, 0], [], []>} : vector<8x8xf32>, vector<8x8xf32>, vector<8x8xf32> -> vector<8x8xf32>
    %cst_141 = arith.constant 0.353553385 : f32
    %436 = vector.broadcast %cst_141 : f32 to vector<8x8xf32>
    %437 = arith.mulf %435, %436 : vector<8x8xf32>
    %438 = vector.broadcast %374 : vector<1x8xf32> to vector<8x8xf32>
    %439 = arith.addf %437, %438 : vector<8x8xf32>
    %cst_142 = arith.constant dense<0xFF800000> : vector<8xf32>
    %440 = vector.multi_reduction <maximumf>, %439, %cst_142 [1] : vector<8x8xf32> to vector<8xf32>
    %441 = vector.shape_cast %440 : vector<8xf32> to vector<8x1xf32>
    %442 = vector.broadcast %441 : vector<8x1xf32> to vector<8x8xf32>
    %443 = arith.subf %439, %442 : vector<8x8xf32>
    %444 = math.exp %443 : vector<8x8xf32>
    %cst_143 = arith.constant dense<0.000000e+00> : vector<8xf32>
    %445 = vector.multi_reduction <add>, %444, %cst_143 [1] : vector<8x8xf32> to vector<8xf32>
    %446 = vector.shape_cast %445 : vector<8xf32> to vector<8x1xf32>
    %447 = tpu.reciprocal %446 {approx = true} : vector<8x1xf32> -> vector<8x1xf32>
    %448 = vector.broadcast %447 : vector<8x1xf32> to vector<8x8xf32>
    %449 = arith.mulf %444, %448 : vector<8x8xf32>
    %cst_144 = arith.constant dense<0.000000e+00> : vector<8x8xf32>
    %450 = tpu.matmul %449, %434, %cst_144 {dimension_numbers = #tpu.dot_dimension_numbers<[1], [0], [0], [1], [0, 0, 1, 1], [], []>} : vector<8x8xf32>, vector<8x8xf32>, vector<8x8xf32> -> vector<8x8xf32>
    %451 = tpu.concatenate %393, %412, %431, %450 in 1 : vector<8x8xf32>, vector<8x8xf32>, vector<8x8xf32>, vector<8x8xf32> -> vector<8x32xf32>
    %452 = vector.extract_strided_slice %372 {offsets = [8, 0], sizes = [8, 96], strides = [1, 1]} : vector<24x96xf32> to vector<8x96xf32>
    %453 = vector.extract_strided_slice %0 {offsets = [1, 0], sizes = [1, 8], strides = [1, 1]} : vector<3x8xf32> to vector<1x8xf32>
    %454 = vector.extract_strided_slice %452 {offsets = [0, 0], sizes = [8, 8], strides = [1, 1]} : vector<8x96xf32> to vector<8x8xf32>
    %455 = vector.extract_strided_slice %452 {offsets = [0, 32], sizes = [8, 8], strides = [1, 1]} : vector<8x96xf32> to vector<8x8xf32>
    %456 = vector.extract_strided_slice %452 {offsets = [0, 64], sizes = [8, 8], strides = [1, 1]} : vector<8x96xf32> to vector<8x8xf32>
    %cst_145 = arith.constant dense<0.000000e+00> : vector<8x8xf32>
    %457 = tpu.matmul %454, %455, %cst_145 {dimension_numbers = #tpu.dot_dimension_numbers<[1], [1], [0], [0], [0, 0, 1, 0], [], []>} : vector<8x8xf32>, vector<8x8xf32>, vector<8x8xf32> -> vector<8x8xf32>
    %cst_146 = arith.constant 0.353553385 : f32
    %458 = vector.broadcast %cst_146 : f32 to vector<8x8xf32>
    %459 = arith.mulf %457, %458 : vector<8x8xf32>
    %460 = vector.broadcast %453 : vector<1x8xf32> to vector<8x8xf32>
    %461 = arith.addf %459, %460 : vector<8x8xf32>
    %cst_147 = arith.constant dense<0xFF800000> : vector<8xf32>
    %462 = vector.multi_reduction <maximumf>, %461, %cst_147 [1] : vector<8x8xf32> to vector<8xf32>
    %463 = vector.shape_cast %462 : vector<8xf32> to vector<8x1xf32>
    %464 = vector.broadcast %463 : vector<8x1xf32> to vector<8x8xf32>
    %465 = arith.subf %461, %464 : vector<8x8xf32>
    %466 = math.exp %465 : vector<8x8xf32>
    %cst_148 = arith.constant dense<0.000000e+00> : vector<8xf32>
    %467 = vector.multi_reduction <add>, %466, %cst_148 [1] : vector<8x8xf32> to vector<8xf32>
    %468 = vector.shape_cast %467 : vector<8xf32> to vector<8x1xf32>
    %469 = tpu.reciprocal %468 {approx = true} : vector<8x1xf32> -> vector<8x1xf32>
    %470 = vector.broadcast %469 : vector<8x1xf32> to vector<8x8xf32>
    %471 = arith.mulf %466, %470 : vector<8x8xf32>
    %cst_149 = arith.constant dense<0.000000e+00> : vector<8x8xf32>
    %472 = tpu.matmul %471, %456, %cst_149 {dimension_numbers = #tpu.dot_dimension_numbers<[1], [0], [0], [1], [0, 0, 1, 1], [], []>} : vector<8x8xf32>, vector<8x8xf32>, vector<8x8xf32> -> vector<8x8xf32>
    %473 = vector.extract_strided_slice %452 {offsets = [0, 8], sizes = [8, 8], strides = [1, 1]} : vector<8x96xf32> to vector<8x8xf32>
    %474 = vector.extract_strided_slice %452 {offsets = [0, 40], sizes = [8, 8], strides = [1, 1]} : vector<8x96xf32> to vector<8x8xf32>
    %475 = vector.extract_strided_slice %452 {offsets = [0, 72], sizes = [8, 8], strides = [1, 1]} : vector<8x96xf32> to vector<8x8xf32>
    %cst_150 = arith.constant dense<0.000000e+00> : vector<8x8xf32>
    %476 = tpu.matmul %473, %474, %cst_150 {dimension_numbers = #tpu.dot_dimension_numbers<[1], [1], [0], [0], [0, 0, 1, 0], [], []>} : vector<8x8xf32>, vector<8x8xf32>, vector<8x8xf32> -> vector<8x8xf32>
    %cst_151 = arith.constant 0.353553385 : f32
    %477 = vector.broadcast %cst_151 : f32 to vector<8x8xf32>
    %478 = arith.mulf %476, %477 : vector<8x8xf32>
    %479 = vector.broadcast %453 : vector<1x8xf32> to vector<8x8xf32>
    %480 = arith.addf %478, %479 : vector<8x8xf32>
    %cst_152 = arith.constant dense<0xFF800000> : vector<8xf32>
    %481 = vector.multi_reduction <maximumf>, %480, %cst_152 [1] : vector<8x8xf32> to vector<8xf32>
    %482 = vector.shape_cast %481 : vector<8xf32> to vector<8x1xf32>
    %483 = vector.broadcast %482 : vector<8x1xf32> to vector<8x8xf32>
    %484 = arith.subf %480, %483 : vector<8x8xf32>
    %485 = math.exp %484 : vector<8x8xf32>
    %cst_153 = arith.constant dense<0.000000e+00> : vector<8xf32>
    %486 = vector.multi_reduction <add>, %485, %cst_153 [1] : vector<8x8xf32> to vector<8xf32>
    %487 = vector.shape_cast %486 : vector<8xf32> to vector<8x1xf32>
    %488 = tpu.reciprocal %487 {approx = true} : vector<8x1xf32> -> vector<8x1xf32>
    %489 = vector.broadcast %488 : vector<8x1xf32> to vector<8x8xf32>
    %490 = arith.mulf %485, %489 : vector<8x8xf32>
    %cst_154 = arith.constant dense<0.000000e+00> : vector<8x8xf32>
    %491 = tpu.matmul %490, %475, %cst_154 {dimension_numbers = #tpu.dot_dimension_numbers<[1], [0], [0], [1], [0, 0, 1, 1], [], []>} : vector<8x8xf32>, vector<8x8xf32>, vector<8x8xf32> -> vector<8x8xf32>
    %492 = vector.extract_strided_slice %452 {offsets = [0, 16], sizes = [8, 8], strides = [1, 1]} : vector<8x96xf32> to vector<8x8xf32>
    %493 = vector.extract_strided_slice %452 {offsets = [0, 48], sizes = [8, 8], strides = [1, 1]} : vector<8x96xf32> to vector<8x8xf32>
    %494 = vector.extract_strided_slice %452 {offsets = [0, 80], sizes = [8, 8], strides = [1, 1]} : vector<8x96xf32> to vector<8x8xf32>
    %cst_155 = arith.constant dense<0.000000e+00> : vector<8x8xf32>
    %495 = tpu.matmul %492, %493, %cst_155 {dimension_numbers = #tpu.dot_dimension_numbers<[1], [1], [0], [0], [0, 0, 1, 0], [], []>} : vector<8x8xf32>, vector<8x8xf32>, vector<8x8xf32> -> vector<8x8xf32>
    %cst_156 = arith.constant 0.353553385 : f32
    %496 = vector.broadcast %cst_156 : f32 to vector<8x8xf32>
    %497 = arith.mulf %495, %496 : vector<8x8xf32>
    %498 = vector.broadcast %453 : vector<1x8xf32> to vector<8x8xf32>
    %499 = arith.addf %497, %498 : vector<8x8xf32>
    %cst_157 = arith.constant dense<0xFF800000> : vector<8xf32>
    %500 = vector.multi_reduction <maximumf>, %499, %cst_157 [1] : vector<8x8xf32> to vector<8xf32>
    %501 = vector.shape_cast %500 : vector<8xf32> to vector<8x1xf32>
    %502 = vector.broadcast %501 : vector<8x1xf32> to vector<8x8xf32>
    %503 = arith.subf %499, %502 : vector<8x8xf32>
    %504 = math.exp %503 : vector<8x8xf32>
    %cst_158 = arith.constant dense<0.000000e+00> : vector<8xf32>
    %505 = vector.multi_reduction <add>, %504, %cst_158 [1] : vector<8x8xf32> to vector<8xf32>
    %506 = vector.shape_cast %505 : vector<8xf32> to vector<8x1xf32>
    %507 = tpu.reciprocal %506 {approx = true} : vector<8x1xf32> -> vector<8x1xf32>
    %508 = vector.broadcast %507 : vector<8x1xf32> to vector<8x8xf32>
    %509 = arith.mulf %504, %508 : vector<8x8xf32>
    %cst_159 = arith.constant dense<0.000000e+00> : vector<8x8xf32>
    %510 = tpu.matmul %509, %494, %cst_159 {dimension_numbers = #tpu.dot_dimension_numbers<[1], [0], [0], [1], [0, 0, 1, 1], [], []>} : vector<8x8xf32>, vector<8x8xf32>, vector<8x8xf32> -> vector<8x8xf32>
    %511 = vector.extract_strided_slice %452 {offsets = [0, 24], sizes = [8, 8], strides = [1, 1]} : vector<8x96xf32> to vector<8x8xf32>
    %512 = vector.extract_strided_slice %452 {offsets = [0, 56], sizes = [8, 8], strides = [1, 1]} : vector<8x96xf32> to vector<8x8xf32>
    %513 = vector.extract_strided_slice %452 {offsets = [0, 88], sizes = [8, 8], strides = [1, 1]} : vector<8x96xf32> to vector<8x8xf32>
    %cst_160 = arith.constant dense<0.000000e+00> : vector<8x8xf32>
    %514 = tpu.matmul %511, %512, %cst_160 {dimension_numbers = #tpu.dot_dimension_numbers<[1], [1], [0], [0], [0, 0, 1, 0], [], []>} : vector<8x8xf32>, vector<8x8xf32>, vector<8x8xf32> -> vector<8x8xf32>
    %cst_161 = arith.constant 0.353553385 : f32
    %515 = vector.broadcast %cst_161 : f32 to vector<8x8xf32>
    %516 = arith.mulf %514, %515 : vector<8x8xf32>
    %517 = vector.broadcast %453 : vector<1x8xf32> to vector<8x8xf32>
    %518 = arith.addf %516, %517 : vector<8x8xf32>
    %cst_162 = arith.constant dense<0xFF800000> : vector<8xf32>
    %519 = vector.multi_reduction <maximumf>, %518, %cst_162 [1] : vector<8x8xf32> to vector<8xf32>
    %520 = vector.shape_cast %519 : vector<8xf32> to vector<8x1xf32>
    %521 = vector.broadcast %520 : vector<8x1xf32> to vector<8x8xf32>
    %522 = arith.subf %518, %521 : vector<8x8xf32>
    %523 = math.exp %522 : vector<8x8xf32>
    %cst_163 = arith.constant dense<0.000000e+00> : vector<8xf32>
    %524 = vector.multi_reduction <add>, %523, %cst_163 [1] : vector<8x8xf32> to vector<8xf32>
    %525 = vector.shape_cast %524 : vector<8xf32> to vector<8x1xf32>
    %526 = tpu.reciprocal %525 {approx = true} : vector<8x1xf32> -> vector<8x1xf32>
    %527 = vector.broadcast %526 : vector<8x1xf32> to vector<8x8xf32>
    %528 = arith.mulf %523, %527 : vector<8x8xf32>
    %cst_164 = arith.constant dense<0.000000e+00> : vector<8x8xf32>
    %529 = tpu.matmul %528, %513, %cst_164 {dimension_numbers = #tpu.dot_dimension_numbers<[1], [0], [0], [1], [0, 0, 1, 1], [], []>} : vector<8x8xf32>, vector<8x8xf32>, vector<8x8xf32> -> vector<8x8xf32>
    %530 = tpu.concatenate %472, %491, %510, %529 in 1 : vector<8x8xf32>, vector<8x8xf32>, vector<8x8xf32>, vector<8x8xf32> -> vector<8x32xf32>
    %531 = vector.extract_strided_slice %372 {offsets = [16, 0], sizes = [8, 96], strides = [1, 1]} : vector<24x96xf32> to vector<8x96xf32>
    %532 = vector.extract_strided_slice %0 {offsets = [2, 0], sizes = [1, 8], strides = [1, 1]} : vector<3x8xf32> to vector<1x8xf32>
    %533 = vector.extract_strided_slice %531 {offsets = [0, 0], sizes = [8, 8], strides = [1, 1]} : vector<8x96xf32> to vector<8x8xf32>
    %534 = vector.extract_strided_slice %531 {offsets = [0, 32], sizes = [8, 8], strides = [1, 1]} : vector<8x96xf32> to vector<8x8xf32>
    %535 = vector.extract_strided_slice %531 {offsets = [0, 64], sizes = [8, 8], strides = [1, 1]} : vector<8x96xf32> to vector<8x8xf32>
    %cst_165 = arith.constant dense<0.000000e+00> : vector<8x8xf32>
    %536 = tpu.matmul %533, %534, %cst_165 {dimension_numbers = #tpu.dot_dimension_numbers<[1], [1], [0], [0], [0, 0, 1, 0], [], []>} : vector<8x8xf32>, vector<8x8xf32>, vector<8x8xf32> -> vector<8x8xf32>
    %cst_166 = arith.constant 0.353553385 : f32
    %537 = vector.broadcast %cst_166 : f32 to vector<8x8xf32>
    %538 = arith.mulf %536, %537 : vector<8x8xf32>
    %539 = vector.broadcast %532 : vector<1x8xf32> to vector<8x8xf32>
    %540 = arith.addf %538, %539 : vector<8x8xf32>
    %cst_167 = arith.constant dense<0xFF800000> : vector<8xf32>
    %541 = vector.multi_reduction <maximumf>, %540, %cst_167 [1] : vector<8x8xf32> to vector<8xf32>
    %542 = vector.shape_cast %541 : vector<8xf32> to vector<8x1xf32>
    %543 = vector.broadcast %542 : vector<8x1xf32> to vector<8x8xf32>
    %544 = arith.subf %540, %543 : vector<8x8xf32>
    %545 = math.exp %544 : vector<8x8xf32>
    %cst_168 = arith.constant dense<0.000000e+00> : vector<8xf32>
    %546 = vector.multi_reduction <add>, %545, %cst_168 [1] : vector<8x8xf32> to vector<8xf32>
    %547 = vector.shape_cast %546 : vector<8xf32> to vector<8x1xf32>
    %548 = tpu.reciprocal %547 {approx = true} : vector<8x1xf32> -> vector<8x1xf32>
    %549 = vector.broadcast %548 : vector<8x1xf32> to vector<8x8xf32>
    %550 = arith.mulf %545, %549 : vector<8x8xf32>
    %cst_169 = arith.constant dense<0.000000e+00> : vector<8x8xf32>
    %551 = tpu.matmul %550, %535, %cst_169 {dimension_numbers = #tpu.dot_dimension_numbers<[1], [0], [0], [1], [0, 0, 1, 1], [], []>} : vector<8x8xf32>, vector<8x8xf32>, vector<8x8xf32> -> vector<8x8xf32>
    %552 = vector.extract_strided_slice %531 {offsets = [0, 8], sizes = [8, 8], strides = [1, 1]} : vector<8x96xf32> to vector<8x8xf32>
    %553 = vector.extract_strided_slice %531 {offsets = [0, 40], sizes = [8, 8], strides = [1, 1]} : vector<8x96xf32> to vector<8x8xf32>
    %554 = vector.extract_strided_slice %531 {offsets = [0, 72], sizes = [8, 8], strides = [1, 1]} : vector<8x96xf32> to vector<8x8xf32>
    %cst_170 = arith.constant dense<0.000000e+00> : vector<8x8xf32>
    %555 = tpu.matmul %552, %553, %cst_170 {dimension_numbers = #tpu.dot_dimension_numbers<[1], [1], [0], [0], [0, 0, 1, 0], [], []>} : vector<8x8xf32>, vector<8x8xf32>, vector<8x8xf32> -> vector<8x8xf32>
    %cst_171 = arith.constant 0.353553385 : f32
    %556 = vector.broadcast %cst_171 : f32 to vector<8x8xf32>
    %557 = arith.mulf %555, %556 : vector<8x8xf32>
    %558 = vector.broadcast %532 : vector<1x8xf32> to vector<8x8xf32>
    %559 = arith.addf %557, %558 : vector<8x8xf32>
    %cst_172 = arith.constant dense<0xFF800000> : vector<8xf32>
    %560 = vector.multi_reduction <maximumf>, %559, %cst_172 [1] : vector<8x8xf32> to vector<8xf32>
    %561 = vector.shape_cast %560 : vector<8xf32> to vector<8x1xf32>
    %562 = vector.broadcast %561 : vector<8x1xf32> to vector<8x8xf32>
    %563 = arith.subf %559, %562 : vector<8x8xf32>
    %564 = math.exp %563 : vector<8x8xf32>
    %cst_173 = arith.constant dense<0.000000e+00> : vector<8xf32>
    %565 = vector.multi_reduction <add>, %564, %cst_173 [1] : vector<8x8xf32> to vector<8xf32>
    %566 = vector.shape_cast %565 : vector<8xf32> to vector<8x1xf32>
    %567 = tpu.reciprocal %566 {approx = true} : vector<8x1xf32> -> vector<8x1xf32>
    %568 = vector.broadcast %567 : vector<8x1xf32> to vector<8x8xf32>
    %569 = arith.mulf %564, %568 : vector<8x8xf32>
    %cst_174 = arith.constant dense<0.000000e+00> : vector<8x8xf32>
    %570 = tpu.matmul %569, %554, %cst_174 {dimension_numbers = #tpu.dot_dimension_numbers<[1], [0], [0], [1], [0, 0, 1, 1], [], []>} : vector<8x8xf32>, vector<8x8xf32>, vector<8x8xf32> -> vector<8x8xf32>
    %571 = vector.extract_strided_slice %531 {offsets = [0, 16], sizes = [8, 8], strides = [1, 1]} : vector<8x96xf32> to vector<8x8xf32>
    %572 = vector.extract_strided_slice %531 {offsets = [0, 48], sizes = [8, 8], strides = [1, 1]} : vector<8x96xf32> to vector<8x8xf32>
    %573 = vector.extract_strided_slice %531 {offsets = [0, 80], sizes = [8, 8], strides = [1, 1]} : vector<8x96xf32> to vector<8x8xf32>
    %cst_175 = arith.constant dense<0.000000e+00> : vector<8x8xf32>
    %574 = tpu.matmul %571, %572, %cst_175 {dimension_numbers = #tpu.dot_dimension_numbers<[1], [1], [0], [0], [0, 0, 1, 0], [], []>} : vector<8x8xf32>, vector<8x8xf32>, vector<8x8xf32> -> vector<8x8xf32>
    %cst_176 = arith.constant 0.353553385 : f32
    %575 = vector.broadcast %cst_176 : f32 to vector<8x8xf32>
    %576 = arith.mulf %574, %575 : vector<8x8xf32>
    %577 = vector.broadcast %532 : vector<1x8xf32> to vector<8x8xf32>
    %578 = arith.addf %576, %577 : vector<8x8xf32>
    %cst_177 = arith.constant dense<0xFF800000> : vector<8xf32>
    %579 = vector.multi_reduction <maximumf>, %578, %cst_177 [1] : vector<8x8xf32> to vector<8xf32>
    %580 = vector.shape_cast %579 : vector<8xf32> to vector<8x1xf32>
    %581 = vector.broadcast %580 : vector<8x1xf32> to vector<8x8xf32>
    %582 = arith.subf %578, %581 : vector<8x8xf32>
    %583 = math.exp %582 : vector<8x8xf32>
    %cst_178 = arith.constant dense<0.000000e+00> : vector<8xf32>
    %584 = vector.multi_reduction <add>, %583, %cst_178 [1] : vector<8x8xf32> to vector<8xf32>
    %585 = vector.shape_cast %584 : vector<8xf32> to vector<8x1xf32>
    %586 = tpu.reciprocal %585 {approx = true} : vector<8x1xf32> -> vector<8x1xf32>
    %587 = vector.broadcast %586 : vector<8x1xf32> to vector<8x8xf32>
    %588 = arith.mulf %583, %587 : vector<8x8xf32>
    %cst_179 = arith.constant dense<0.000000e+00> : vector<8x8xf32>
    %589 = tpu.matmul %588, %573, %cst_179 {dimension_numbers = #tpu.dot_dimension_numbers<[1], [0], [0], [1], [0, 0, 1, 1], [], []>} : vector<8x8xf32>, vector<8x8xf32>, vector<8x8xf32> -> vector<8x8xf32>
    %590 = vector.extract_strided_slice %531 {offsets = [0, 24], sizes = [8, 8], strides = [1, 1]} : vector<8x96xf32> to vector<8x8xf32>
    %591 = vector.extract_strided_slice %531 {offsets = [0, 56], sizes = [8, 8], strides = [1, 1]} : vector<8x96xf32> to vector<8x8xf32>
    %592 = vector.extract_strided_slice %531 {offsets = [0, 88], sizes = [8, 8], strides = [1, 1]} : vector<8x96xf32> to vector<8x8xf32>
    %cst_180 = arith.constant dense<0.000000e+00> : vector<8x8xf32>
    %593 = tpu.matmul %590, %591, %cst_180 {dimension_numbers = #tpu.dot_dimension_numbers<[1], [1], [0], [0], [0, 0, 1, 0], [], []>} : vector<8x8xf32>, vector<8x8xf32>, vector<8x8xf32> -> vector<8x8xf32>
    %cst_181 = arith.constant 0.353553385 : f32
    %594 = vector.broadcast %cst_181 : f32 to vector<8x8xf32>
    %595 = arith.mulf %593, %594 : vector<8x8xf32>
    %596 = vector.broadcast %532 : vector<1x8xf32> to vector<8x8xf32>
    %597 = arith.addf %595, %596 : vector<8x8xf32>
    %cst_182 = arith.constant dense<0xFF800000> : vector<8xf32>
    %598 = vector.multi_reduction <maximumf>, %597, %cst_182 [1] : vector<8x8xf32> to vector<8xf32>
    %599 = vector.shape_cast %598 : vector<8xf32> to vector<8x1xf32>
    %600 = vector.broadcast %599 : vector<8x1xf32> to vector<8x8xf32>
    %601 = arith.subf %597, %600 : vector<8x8xf32>
    %602 = math.exp %601 : vector<8x8xf32>
    %cst_183 = arith.constant dense<0.000000e+00> : vector<8xf32>
    %603 = vector.multi_reduction <add>, %602, %cst_183 [1] : vector<8x8xf32> to vector<8xf32>
    %604 = vector.shape_cast %603 : vector<8xf32> to vector<8x1xf32>
    %605 = tpu.reciprocal %604 {approx = true} : vector<8x1xf32> -> vector<8x1xf32>
    %606 = vector.broadcast %605 : vector<8x1xf32> to vector<8x8xf32>
    %607 = arith.mulf %602, %606 : vector<8x8xf32>
    %cst_184 = arith.constant dense<0.000000e+00> : vector<8x8xf32>
    %608 = tpu.matmul %607, %592, %cst_184 {dimension_numbers = #tpu.dot_dimension_numbers<[1], [0], [0], [1], [0, 0, 1, 1], [], []>} : vector<8x8xf32>, vector<8x8xf32>, vector<8x8xf32> -> vector<8x8xf32>
    %609 = tpu.concatenate %551, %570, %589, %608 in 1 : vector<8x8xf32>, vector<8x8xf32>, vector<8x8xf32>, vector<8x8xf32> -> vector<8x32xf32>
    %610 = tpu.concatenate %451, %530, %609 in 0 : vector<8x32xf32>, vector<8x32xf32>, vector<8x32xf32> -> vector<24x32xf32>
    %611 = arith.truncf %610 : vector<24x32xf32> to vector<24x32xbf16>
    %c1_185 = arith.constant 1 : index
    %c0_186 = arith.constant 0 : index
    %c0_187 = arith.constant 0 : index
    %612 = vector.load %arg7[%c1_185, %c0_186, %c0_187] : memref<2x32x32xbf16, #tpu.memory_space<vmem>>, vector<1x32x32xbf16>
    %613 = vector.shape_cast %612 : vector<1x32x32xbf16> to vector<32x32xbf16>
    %cst_188 = arith.constant dense<0.000000e+00> : vector<24x32xf32>
    %614 = tpu.matmul %611, %613, %cst_188 {dimension_numbers = #tpu.dot_dimension_numbers<[1], [0], [0], [1], [0, 0, 1, 1], [], []>} : vector<24x32xbf16>, vector<32x32xbf16>, vector<24x32xf32> -> vector<24x32xf32>
    %c1_189 = arith.constant 1 : index
    %c0_190 = arith.constant 0 : index
    %c0_191 = arith.constant 0 : index
    %615 = vector.load %arg8[%c1_189, %c0_190, %c0_191] : memref<2x1x32xf32, #tpu.memory_space<vmem>>, vector<1x1x32xf32>
    %616 = vector.shape_cast %615 : vector<1x1x32xf32> to vector<1x32xf32>
    %617 = vector.broadcast %616 : vector<1x32xf32> to vector<24x32xf32>
    %618 = arith.addf %614, %617 : vector<24x32xf32>
    %c1_192 = arith.constant 1 : index
    %c0_193 = arith.constant 0 : index
    %c0_194 = arith.constant 0 : index
    %619 = vector.load %arg9[%c1_192, %c0_193, %c0_194] : memref<2x2x32xf32, #tpu.memory_space<vmem>>, vector<1x2x32xf32>
    %620 = vector.shape_cast %619 : vector<1x2x32xf32> to vector<2x32xf32>
    %621 = arith.addf %618, %364 : vector<24x32xf32>
    %622 = vector.extract_strided_slice %620 {offsets = [0, 0], sizes = [1, 32], strides = [1, 1]} : vector<2x32xf32> to vector<1x32xf32>
    %623 = vector.extract_strided_slice %620 {offsets = [1, 0], sizes = [1, 32], strides = [1, 1]} : vector<2x32xf32> to vector<1x32xf32>
    %cst_195 = arith.constant dense<0.000000e+00> : vector<24xf32>
    %624 = vector.multi_reduction <add>, %621, %cst_195 [1] : vector<24x32xf32> to vector<24xf32>
    %625 = vector.shape_cast %624 : vector<24xf32> to vector<24x1xf32>
    %cst_196 = arith.constant 3.200000e+01 : f32
    %626 = vector.broadcast %cst_196 : f32 to vector<24x1xf32>
    %627 = arith.divf %625, %626 : vector<24x1xf32>
    %628 = vector.broadcast %627 : vector<24x1xf32> to vector<24x32xf32>
    %629 = arith.subf %621, %628 : vector<24x32xf32>
    %630 = arith.mulf %629, %629 : vector<24x32xf32>
    %cst_197 = arith.constant dense<0.000000e+00> : vector<24xf32>
    %631 = vector.multi_reduction <add>, %630, %cst_197 [1] : vector<24x32xf32> to vector<24xf32>
    %632 = vector.shape_cast %631 : vector<24xf32> to vector<24x1xf32>
    %cst_198 = arith.constant 3.200000e+01 : f32
    %633 = vector.broadcast %cst_198 : f32 to vector<24x1xf32>
    %634 = arith.divf %632, %633 : vector<24x1xf32>
    %635 = vector.broadcast %627 : vector<24x1xf32> to vector<24x32xf32>
    %636 = arith.subf %621, %635 : vector<24x32xf32>
    %cst_199 = arith.constant 9.99999996E-13 : f32
    %637 = vector.broadcast %cst_199 : f32 to vector<24x1xf32>
    %638 = arith.addf %634, %637 : vector<24x1xf32>
    %639 = math.rsqrt %638 : vector<24x1xf32>
    %640 = vector.broadcast %639 : vector<24x1xf32> to vector<24x32xf32>
    %641 = arith.mulf %636, %640 : vector<24x32xf32>
    %642 = vector.broadcast %622 : vector<1x32xf32> to vector<24x32xf32>
    %643 = arith.mulf %641, %642 : vector<24x32xf32>
    %644 = vector.broadcast %623 : vector<1x32xf32> to vector<24x32xf32>
    %645 = arith.addf %643, %644 : vector<24x32xf32>
    %646 = arith.truncf %645 : vector<24x32xf32> to vector<24x32xbf16>
    %c1_200 = arith.constant 1 : index
    %c0_201 = arith.constant 0 : index
    %c0_202 = arith.constant 0 : index
    %647 = vector.load %arg10[%c1_200, %c0_201, %c0_202] : memref<2x32x64xbf16, #tpu.memory_space<vmem>>, vector<1x32x64xbf16>
    %648 = vector.shape_cast %647 : vector<1x32x64xbf16> to vector<32x64xbf16>
    %cst_203 = arith.constant dense<0.000000e+00> : vector<24x64xf32>
    %649 = tpu.matmul %646, %648, %cst_203 {dimension_numbers = #tpu.dot_dimension_numbers<[1], [0], [0], [1], [0, 0, 1, 1], [], []>} : vector<24x32xbf16>, vector<32x64xbf16>, vector<24x64xf32> -> vector<24x64xf32>
    %c1_204 = arith.constant 1 : index
    %c0_205 = arith.constant 0 : index
    %c0_206 = arith.constant 0 : index
    %650 = vector.load %arg11[%c1_204, %c0_205, %c0_206] : memref<2x1x64xf32, #tpu.memory_space<vmem>>, vector<1x1x64xf32>
    %651 = vector.shape_cast %650 : vector<1x1x64xf32> to vector<1x64xf32>
    %652 = vector.broadcast %651 : vector<1x64xf32> to vector<24x64xf32>
    %653 = arith.addf %649, %652 : vector<24x64xf32>
    %654 = arith.mulf %653, %653 : vector<24x64xf32>
    %655 = arith.mulf %653, %654 : vector<24x64xf32>
    %cst_207 = arith.constant 4.471500e-02 : f32
    %656 = vector.broadcast %cst_207 : f32 to vector<24x64xf32>
    %657 = arith.mulf %656, %655 : vector<24x64xf32>
    %658 = arith.addf %653, %657 : vector<24x64xf32>
    %cst_208 = arith.constant 0.797884583 : f32
    %659 = vector.broadcast %cst_208 : f32 to vector<24x64xf32>
    %660 = arith.mulf %659, %658 : vector<24x64xf32>
    %661 = math.tanh %660 : vector<24x64xf32>
    %cst_209 = arith.constant 1.000000e+00 : f32
    %662 = vector.broadcast %cst_209 : f32 to vector<24x64xf32>
    %663 = arith.addf %662, %661 : vector<24x64xf32>
    %cst_210 = arith.constant 5.000000e-01 : f32
    %664 = vector.broadcast %cst_210 : f32 to vector<24x64xf32>
    %665 = arith.mulf %664, %663 : vector<24x64xf32>
    %666 = arith.mulf %653, %665 : vector<24x64xf32>
    %667 = arith.truncf %666 : vector<24x64xf32> to vector<24x64xbf16>
    %c1_211 = arith.constant 1 : index
    %c0_212 = arith.constant 0 : index
    %c0_213 = arith.constant 0 : index
    %668 = vector.load %arg12[%c1_211, %c0_212, %c0_213] : memref<2x64x32xbf16, #tpu.memory_space<vmem>>, vector<1x64x32xbf16>
    %669 = vector.shape_cast %668 : vector<1x64x32xbf16> to vector<64x32xbf16>
    %cst_214 = arith.constant dense<0.000000e+00> : vector<24x32xf32>
    %670 = tpu.matmul %667, %669, %cst_214 {dimension_numbers = #tpu.dot_dimension_numbers<[1], [0], [0], [1], [0, 0, 1, 1], [], []>} : vector<24x64xbf16>, vector<64x32xbf16>, vector<24x32xf32> -> vector<24x32xf32>
    %c1_215 = arith.constant 1 : index
    %c0_216 = arith.constant 0 : index
    %c0_217 = arith.constant 0 : index
    %671 = vector.load %arg13[%c1_215, %c0_216, %c0_217] : memref<2x1x32xf32, #tpu.memory_space<vmem>>, vector<1x1x32xf32>
    %672 = vector.shape_cast %671 : vector<1x1x32xf32> to vector<1x32xf32>
    %673 = vector.broadcast %672 : vector<1x32xf32> to vector<24x32xf32>
    %674 = arith.addf %670, %673 : vector<24x32xf32>
    %c1_218 = arith.constant 1 : index
    %c0_219 = arith.constant 0 : index
    %c0_220 = arith.constant 0 : index
    %675 = vector.load %arg14[%c1_218, %c0_219, %c0_220] : memref<2x2x32xf32, #tpu.memory_space<vmem>>, vector<1x2x32xf32>
    %676 = vector.shape_cast %675 : vector<1x2x32xf32> to vector<2x32xf32>
    %677 = arith.addf %674, %645 : vector<24x32xf32>
    %678 = vector.extract_strided_slice %676 {offsets = [0, 0], sizes = [1, 32], strides = [1, 1]} : vector<2x32xf32> to vector<1x32xf32>
    %679 = vector.extract_strided_slice %676 {offsets = [1, 0], sizes = [1, 32], strides = [1, 1]} : vector<2x32xf32> to vector<1x32xf32>
    %cst_221 = arith.constant dense<0.000000e+00> : vector<24xf32>
    %680 = vector.multi_reduction <add>, %677, %cst_221 [1] : vector<24x32xf32> to vector<24xf32>
    %681 = vector.shape_cast %680 : vector<24xf32> to vector<24x1xf32>
    %cst_222 = arith.constant 3.200000e+01 : f32
    %682 = vector.broadcast %cst_222 : f32 to vector<24x1xf32>
    %683 = arith.divf %681, %682 : vector<24x1xf32>
    %684 = vector.broadcast %683 : vector<24x1xf32> to vector<24x32xf32>
    %685 = arith.subf %677, %684 : vector<24x32xf32>
    %686 = arith.mulf %685, %685 : vector<24x32xf32>
    %cst_223 = arith.constant dense<0.000000e+00> : vector<24xf32>
    %687 = vector.multi_reduction <add>, %686, %cst_223 [1] : vector<24x32xf32> to vector<24xf32>
    %688 = vector.shape_cast %687 : vector<24xf32> to vector<24x1xf32>
    %cst_224 = arith.constant 3.200000e+01 : f32
    %689 = vector.broadcast %cst_224 : f32 to vector<24x1xf32>
    %690 = arith.divf %688, %689 : vector<24x1xf32>
    %691 = vector.broadcast %683 : vector<24x1xf32> to vector<24x32xf32>
    %692 = arith.subf %677, %691 : vector<24x32xf32>
    %cst_225 = arith.constant 9.99999996E-13 : f32
    %693 = vector.broadcast %cst_225 : f32 to vector<24x1xf32>
    %694 = arith.addf %690, %693 : vector<24x1xf32>
    %695 = math.rsqrt %694 : vector<24x1xf32>
    %696 = vector.broadcast %695 : vector<24x1xf32> to vector<24x32xf32>
    %697 = arith.mulf %692, %696 : vector<24x32xf32>
    %698 = vector.broadcast %678 : vector<1x32xf32> to vector<24x32xf32>
    %699 = arith.mulf %697, %698 : vector<24x32xf32>
    %700 = vector.broadcast %679 : vector<1x32xf32> to vector<24x32xf32>
    %701 = arith.addf %699, %700 : vector<24x32xf32>
    %702 = vector.extract_strided_slice %701 {offsets = [0, 0], sizes = [8, 32], strides = [1, 1]} : vector<24x32xf32> to vector<8x32xf32>
    %703 = vector.extract_strided_slice %1 {offsets = [0, 0], sizes = [8, 1], strides = [1, 1]} : vector<24x1xf32> to vector<8x1xf32>
    %704 = vector.broadcast %703 : vector<8x1xf32> to vector<8x32xf32>
    %705 = arith.mulf %702, %704 : vector<8x32xf32>
    %cst_226 = arith.constant dense<0.000000e+00> : vector<32xf32>
    %706 = vector.multi_reduction <add>, %705, %cst_226 [0] : vector<8x32xf32> to vector<32xf32>
    %707 = vector.shape_cast %706 : vector<32xf32> to vector<1x32xf32>
    %cst_227 = arith.constant dense<0.000000e+00> : vector<1xf32>
    %708 = vector.multi_reduction <add>, %703, %cst_227 [0] : vector<8x1xf32> to vector<1xf32>
    %709 = vector.shape_cast %708 : vector<1xf32> to vector<1x1xf32>
    %cst_228 = arith.constant 1.000000e+00 : f32
    %710 = vector.broadcast %cst_228 : f32 to vector<1x1xf32>
    %711 = arith.maximumf %709, %710 : vector<1x1xf32>
    %712 = tpu.reciprocal %711 {approx = true} : vector<1x1xf32> -> vector<1x1xf32>
    %713 = vector.broadcast %712 : vector<1x1xf32> to vector<1x32xf32>
    %714 = arith.mulf %707, %713 : vector<1x32xf32>
    %715 = vector.extract_strided_slice %701 {offsets = [8, 0], sizes = [8, 32], strides = [1, 1]} : vector<24x32xf32> to vector<8x32xf32>
    %716 = vector.extract_strided_slice %1 {offsets = [8, 0], sizes = [8, 1], strides = [1, 1]} : vector<24x1xf32> to vector<8x1xf32>
    %717 = vector.broadcast %716 : vector<8x1xf32> to vector<8x32xf32>
    %718 = arith.mulf %715, %717 : vector<8x32xf32>
    %cst_229 = arith.constant dense<0.000000e+00> : vector<32xf32>
    %719 = vector.multi_reduction <add>, %718, %cst_229 [0] : vector<8x32xf32> to vector<32xf32>
    %720 = vector.shape_cast %719 : vector<32xf32> to vector<1x32xf32>
    %cst_230 = arith.constant dense<0.000000e+00> : vector<1xf32>
    %721 = vector.multi_reduction <add>, %716, %cst_230 [0] : vector<8x1xf32> to vector<1xf32>
    %722 = vector.shape_cast %721 : vector<1xf32> to vector<1x1xf32>
    %cst_231 = arith.constant 1.000000e+00 : f32
    %723 = vector.broadcast %cst_231 : f32 to vector<1x1xf32>
    %724 = arith.maximumf %722, %723 : vector<1x1xf32>
    %725 = tpu.reciprocal %724 {approx = true} : vector<1x1xf32> -> vector<1x1xf32>
    %726 = vector.broadcast %725 : vector<1x1xf32> to vector<1x32xf32>
    %727 = arith.mulf %720, %726 : vector<1x32xf32>
    %728 = vector.extract_strided_slice %701 {offsets = [16, 0], sizes = [8, 32], strides = [1, 1]} : vector<24x32xf32> to vector<8x32xf32>
    %729 = vector.extract_strided_slice %1 {offsets = [16, 0], sizes = [8, 1], strides = [1, 1]} : vector<24x1xf32> to vector<8x1xf32>
    %730 = vector.broadcast %729 : vector<8x1xf32> to vector<8x32xf32>
    %731 = arith.mulf %728, %730 : vector<8x32xf32>
    %cst_232 = arith.constant dense<0.000000e+00> : vector<32xf32>
    %732 = vector.multi_reduction <add>, %731, %cst_232 [0] : vector<8x32xf32> to vector<32xf32>
    %733 = vector.shape_cast %732 : vector<32xf32> to vector<1x32xf32>
    %cst_233 = arith.constant dense<0.000000e+00> : vector<1xf32>
    %734 = vector.multi_reduction <add>, %729, %cst_233 [0] : vector<8x1xf32> to vector<1xf32>
    %735 = vector.shape_cast %734 : vector<1xf32> to vector<1x1xf32>
    %cst_234 = arith.constant 1.000000e+00 : f32
    %736 = vector.broadcast %cst_234 : f32 to vector<1x1xf32>
    %737 = arith.maximumf %735, %736 : vector<1x1xf32>
    %738 = tpu.reciprocal %737 {approx = true} : vector<1x1xf32> -> vector<1x1xf32>
    %739 = vector.broadcast %738 : vector<1x1xf32> to vector<1x32xf32>
    %740 = arith.mulf %733, %739 : vector<1x32xf32>
    %c0_235 = arith.constant 0 : index
    %c0_236 = arith.constant 0 : index
    %741 = vector.load %arg15[%c0_235, %c0_236] : memref<3x64xf32, #tpu.memory_space<vmem>>, vector<3x64xf32>
    %c0_237 = arith.constant 0 : index
    %c0_238 = arith.constant 0 : index
    %742 = vector.load %arg16[%c0_237, %c0_238] : memref<1x64xf32, #tpu.memory_space<vmem>>, vector<1x64xf32>
    %c0_239 = arith.constant 0 : index
    %c0_240 = arith.constant 0 : index
    %743 = vector.load %arg17[%c0_239, %c0_240] : memref<1x64xf32, #tpu.memory_space<vmem>>, vector<1x64xf32>
    %c0_241 = arith.constant 0 : index
    %c0_242 = arith.constant 0 : index
    %744 = vector.load %arg18[%c0_241, %c0_242] : memref<1x1xf32, #tpu.memory_space<vmem>>, vector<1x1xf32>
    %745 = arith.subf %714, %727 : vector<1x32xf32>
    %cst_243 = arith.constant 9.99999997E-7 : f32
    %746 = vector.broadcast %cst_243 : f32 to vector<1x32xf32>
    %747 = arith.addf %745, %746 : vector<1x32xf32>
    %748 = math.absf %747 : vector<1x32xf32>
    %cst_244 = arith.constant dense<0.000000e+00> : vector<1xf32>
    %749 = vector.multi_reduction <add>, %748, %cst_244 [1] : vector<1x32xf32> to vector<1xf32>
    %750 = vector.shape_cast %749 : vector<1xf32> to vector<1x1xf32>
    %751 = arith.mulf %714, %727 : vector<1x32xf32>
    %cst_245 = arith.constant dense<0.000000e+00> : vector<1xf32>
    %752 = vector.multi_reduction <add>, %751, %cst_245 [1] : vector<1x32xf32> to vector<1xf32>
    %753 = vector.shape_cast %752 : vector<1xf32> to vector<1x1xf32>
    %754 = arith.mulf %714, %714 : vector<1x32xf32>
    %cst_246 = arith.constant dense<0.000000e+00> : vector<1xf32>
    %755 = vector.multi_reduction <add>, %754, %cst_246 [1] : vector<1x32xf32> to vector<1xf32>
    %756 = vector.shape_cast %755 : vector<1xf32> to vector<1x1xf32>
    %757 = math.sqrt %756 : vector<1x1xf32>
    %758 = arith.mulf %727, %727 : vector<1x32xf32>
    %cst_247 = arith.constant dense<0.000000e+00> : vector<1xf32>
    %759 = vector.multi_reduction <add>, %758, %cst_247 [1] : vector<1x32xf32> to vector<1xf32>
    %760 = vector.shape_cast %759 : vector<1xf32> to vector<1x1xf32>
    %761 = math.sqrt %760 : vector<1x1xf32>
    %cst_248 = arith.constant 9.99999993E-9 : f32
    %762 = vector.broadcast %cst_248 : f32 to vector<1x1xf32>
    %763 = arith.maximumf %757, %762 : vector<1x1xf32>
    %cst_249 = arith.constant 9.99999993E-9 : f32
    %764 = vector.broadcast %cst_249 : f32 to vector<1x1xf32>
    %765 = arith.maximumf %761, %764 : vector<1x1xf32>
    %766 = arith.mulf %763, %765 : vector<1x1xf32>
    %767 = arith.divf %753, %766 : vector<1x1xf32>
    %768 = vector.extract_strided_slice %741 {offsets = [0, 0], sizes = [1, 64], strides = [1, 1]} : vector<3x64xf32> to vector<1x64xf32>
    %769 = vector.broadcast %750 : vector<1x1xf32> to vector<1x64xf32>
    %770 = arith.mulf %769, %768 : vector<1x64xf32>
    %771 = vector.extract_strided_slice %741 {offsets = [1, 0], sizes = [1, 64], strides = [1, 1]} : vector<3x64xf32> to vector<1x64xf32>
    %772 = vector.broadcast %750 : vector<1x1xf32> to vector<1x64xf32>
    %773 = arith.mulf %772, %771 : vector<1x64xf32>
    %774 = arith.addf %770, %773 : vector<1x64xf32>
    %775 = vector.extract_strided_slice %741 {offsets = [2, 0], sizes = [1, 64], strides = [1, 1]} : vector<3x64xf32> to vector<1x64xf32>
    %776 = vector.broadcast %767 : vector<1x1xf32> to vector<1x64xf32>
    %777 = arith.mulf %776, %775 : vector<1x64xf32>
    %778 = arith.addf %774, %777 : vector<1x64xf32>
    %779 = arith.addf %778, %742 : vector<1x64xf32>
    %cst_250 = arith.constant 0.000000e+00 : f32
    %780 = vector.broadcast %cst_250 : f32 to vector<1x64xf32>
    %781 = arith.maximumf %779, %780 : vector<1x64xf32>
    %782 = arith.mulf %781, %743 : vector<1x64xf32>
    %cst_251 = arith.constant dense<0.000000e+00> : vector<1xf32>
    %783 = vector.multi_reduction <add>, %782, %cst_251 [1] : vector<1x64xf32> to vector<1xf32>
    %784 = vector.shape_cast %783 : vector<1xf32> to vector<1x1xf32>
    %785 = arith.addf %784, %744 : vector<1x1xf32>
    %786 = arith.subf %714, %740 : vector<1x32xf32>
    %cst_252 = arith.constant 9.99999997E-7 : f32
    %787 = vector.broadcast %cst_252 : f32 to vector<1x32xf32>
    %788 = arith.addf %786, %787 : vector<1x32xf32>
    %789 = math.absf %788 : vector<1x32xf32>
    %cst_253 = arith.constant dense<0.000000e+00> : vector<1xf32>
    %790 = vector.multi_reduction <add>, %789, %cst_253 [1] : vector<1x32xf32> to vector<1xf32>
    %791 = vector.shape_cast %790 : vector<1xf32> to vector<1x1xf32>
    %792 = arith.mulf %714, %740 : vector<1x32xf32>
    %cst_254 = arith.constant dense<0.000000e+00> : vector<1xf32>
    %793 = vector.multi_reduction <add>, %792, %cst_254 [1] : vector<1x32xf32> to vector<1xf32>
    %794 = vector.shape_cast %793 : vector<1xf32> to vector<1x1xf32>
    %795 = arith.mulf %714, %714 : vector<1x32xf32>
    %cst_255 = arith.constant dense<0.000000e+00> : vector<1xf32>
    %796 = vector.multi_reduction <add>, %795, %cst_255 [1] : vector<1x32xf32> to vector<1xf32>
    %797 = vector.shape_cast %796 : vector<1xf32> to vector<1x1xf32>
    %798 = math.sqrt %797 : vector<1x1xf32>
    %799 = arith.mulf %740, %740 : vector<1x32xf32>
    %cst_256 = arith.constant dense<0.000000e+00> : vector<1xf32>
    %800 = vector.multi_reduction <add>, %799, %cst_256 [1] : vector<1x32xf32> to vector<1xf32>
    %801 = vector.shape_cast %800 : vector<1xf32> to vector<1x1xf32>
    %802 = math.sqrt %801 : vector<1x1xf32>
    %cst_257 = arith.constant 9.99999993E-9 : f32
    %803 = vector.broadcast %cst_257 : f32 to vector<1x1xf32>
    %804 = arith.maximumf %798, %803 : vector<1x1xf32>
    %cst_258 = arith.constant 9.99999993E-9 : f32
    %805 = vector.broadcast %cst_258 : f32 to vector<1x1xf32>
    %806 = arith.maximumf %802, %805 : vector<1x1xf32>
    %807 = arith.mulf %804, %806 : vector<1x1xf32>
    %808 = arith.divf %794, %807 : vector<1x1xf32>
    %809 = vector.extract_strided_slice %741 {offsets = [0, 0], sizes = [1, 64], strides = [1, 1]} : vector<3x64xf32> to vector<1x64xf32>
    %810 = vector.broadcast %791 : vector<1x1xf32> to vector<1x64xf32>
    %811 = arith.mulf %810, %809 : vector<1x64xf32>
    %812 = vector.extract_strided_slice %741 {offsets = [1, 0], sizes = [1, 64], strides = [1, 1]} : vector<3x64xf32> to vector<1x64xf32>
    %813 = vector.broadcast %791 : vector<1x1xf32> to vector<1x64xf32>
    %814 = arith.mulf %813, %812 : vector<1x64xf32>
    %815 = arith.addf %811, %814 : vector<1x64xf32>
    %816 = vector.extract_strided_slice %741 {offsets = [2, 0], sizes = [1, 64], strides = [1, 1]} : vector<3x64xf32> to vector<1x64xf32>
    %817 = vector.broadcast %808 : vector<1x1xf32> to vector<1x64xf32>
    %818 = arith.mulf %817, %816 : vector<1x64xf32>
    %819 = arith.addf %815, %818 : vector<1x64xf32>
    %820 = arith.addf %819, %742 : vector<1x64xf32>
    %cst_259 = arith.constant 0.000000e+00 : f32
    %821 = vector.broadcast %cst_259 : f32 to vector<1x64xf32>
    %822 = arith.maximumf %820, %821 : vector<1x64xf32>
    %823 = arith.mulf %822, %743 : vector<1x64xf32>
    %cst_260 = arith.constant dense<0.000000e+00> : vector<1xf32>
    %824 = vector.multi_reduction <add>, %823, %cst_260 [1] : vector<1x64xf32> to vector<1xf32>
    %825 = vector.shape_cast %824 : vector<1xf32> to vector<1x1xf32>
    %826 = arith.addf %825, %744 : vector<1x1xf32>
    %827 = tpu.concatenate %785, %826 in 1 : vector<1x1xf32>, vector<1x1xf32> -> vector<1x2xf32>
    %c0_261 = arith.constant 0 : index
    %c0_262 = arith.constant 0 : index
    %828 = vector.load %arg19[%c0_261, %c0_262] : memref<1x2xf32, #tpu.memory_space<vmem>>, vector<1x2xf32>
    tpu.vector_store %arg19[%c0_261, %c0_262], %827 {strides = array<i32>} : memref<1x2xf32, #tpu.memory_space<vmem>>, vector<1x2xf32>,
    return
  }
  func.func @transform_0(%arg0: i32) -> (i32, i32) {
    %c0_i32 = arith.constant 0 : i32
    %c0_i32_0 = arith.constant 0 : i32
    %c0_i32_1 = arith.constant 0 : i32
    return %c0_i32, %c0_i32_0 : i32, i32
  }
  func.func @transform_1(%arg0: i32) -> (i32, i32) {
    %c0_i32 = arith.constant 0 : i32
    %c0_i32_0 = arith.constant 0 : i32
    %c0_i32_1 = arith.constant 0 : i32
    return %c0_i32, %c0_i32_0 : i32, i32
  }
  func.func @transform_2(%arg0: i32) -> (i32, i32) {
    %c0_i32 = arith.constant 0 : i32
    %c0_i32_0 = arith.constant 0 : i32
    %c0_i32_1 = arith.constant 0 : i32
    return %c0_i32, %c0_i32_0 : i32, i32
  }
  func.func @transform_3(%arg0: i32) -> (i32, i32) {
    %c0_i32 = arith.constant 0 : i32
    %c0_i32_0 = arith.constant 0 : i32
    %c0_i32_1 = arith.constant 0 : i32
    return %c0_i32, %c0_i32_0 : i32, i32
  }
  func.func @transform_4(%arg0: i32) -> (i32, i32, i32) {
    %c0_i32 = arith.constant 0 : i32
    %c0_i32_0 = arith.constant 0 : i32
    %c0_i32_1 = arith.constant 0 : i32
    %c0_i32_2 = arith.constant 0 : i32
    return %c0_i32, %c0_i32_0, %c0_i32_1 : i32, i32, i32
  }
  func.func @transform_5(%arg0: i32) -> (i32, i32, i32) {
    %c0_i32 = arith.constant 0 : i32
    %c0_i32_0 = arith.constant 0 : i32
    %c0_i32_1 = arith.constant 0 : i32
    %c0_i32_2 = arith.constant 0 : i32
    return %c0_i32, %c0_i32_0, %c0_i32_1 : i32, i32, i32
  }
  func.func @transform_6(%arg0: i32) -> (i32, i32, i32) {
    %c0_i32 = arith.constant 0 : i32
    %c0_i32_0 = arith.constant 0 : i32
    %c0_i32_1 = arith.constant 0 : i32
    %c0_i32_2 = arith.constant 0 : i32
    return %c0_i32, %c0_i32_0, %c0_i32_1 : i32, i32, i32
  }
  func.func @transform_7(%arg0: i32) -> (i32, i32, i32) {
    %c0_i32 = arith.constant 0 : i32
    %c0_i32_0 = arith.constant 0 : i32
    %c0_i32_1 = arith.constant 0 : i32
    %c0_i32_2 = arith.constant 0 : i32
    return %c0_i32, %c0_i32_0, %c0_i32_1 : i32, i32, i32
  }
  func.func @transform_8(%arg0: i32) -> (i32, i32, i32) {
    %c0_i32 = arith.constant 0 : i32
    %c0_i32_0 = arith.constant 0 : i32
    %c0_i32_1 = arith.constant 0 : i32
    %c0_i32_2 = arith.constant 0 : i32
    return %c0_i32, %c0_i32_0, %c0_i32_1 : i32, i32, i32
  }
  func.func @transform_9(%arg0: i32) -> (i32, i32, i32) {
    %c0_i32 = arith.constant 0 : i32
    %c0_i32_0 = arith.constant 0 : i32
    %c0_i32_1 = arith.constant 0 : i32
    %c0_i32_2 = arith.constant 0 : i32
    return %c0_i32, %c0_i32_0, %c0_i32_1 : i32, i32, i32
  }
  func.func @transform_10(%arg0: i32) -> (i32, i32, i32) {
    %c0_i32 = arith.constant 0 : i32
    %c0_i32_0 = arith.constant 0 : i32
    %c0_i32_1 = arith.constant 0 : i32
    %c0_i32_2 = arith.constant 0 : i32
    return %c0_i32, %c0_i32_0, %c0_i32_1 : i32, i32, i32
  }
  func.func @transform_11(%arg0: i32) -> (i32, i32, i32) {
    %c0_i32 = arith.constant 0 : i32
    %c0_i32_0 = arith.constant 0 : i32
    %c0_i32_1 = arith.constant 0 : i32
    %c0_i32_2 = arith.constant 0 : i32
    return %c0_i32, %c0_i32_0, %c0_i32_1 : i32, i32, i32
  }
  func.func @transform_12(%arg0: i32) -> (i32, i32, i32) {
    %c0_i32 = arith.constant 0 : i32
    %c0_i32_0 = arith.constant 0 : i32
    %c0_i32_1 = arith.constant 0 : i32
    %c0_i32_2 = arith.constant 0 : i32
    return %c0_i32, %c0_i32_0, %c0_i32_1 : i32, i32, i32
  }
  func.func @transform_13(%arg0: i32) -> (i32, i32, i32) {
    %c0_i32 = arith.constant 0 : i32
    %c0_i32_0 = arith.constant 0 : i32
    %c0_i32_1 = arith.constant 0 : i32
    %c0_i32_2 = arith.constant 0 : i32
    return %c0_i32, %c0_i32_0, %c0_i32_1 : i32, i32, i32
  }
  func.func @transform_14(%arg0: i32) -> (i32, i32) {
    %c0_i32 = arith.constant 0 : i32
    %c0_i32_0 = arith.constant 0 : i32
    %c0_i32_1 = arith.constant 0 : i32
    return %c0_i32, %c0_i32_0 : i32, i32
  }
  func.func @transform_15(%arg0: i32) -> (i32, i32) {
    %c0_i32 = arith.constant 0 : i32
    %c0_i32_0 = arith.constant 0 : i32
    %c0_i32_1 = arith.constant 0 : i32
    return %c0_i32, %c0_i32_0 : i32, i32
  }
  func.func @transform_16(%arg0: i32) -> (i32, i32) {
    %c0_i32 = arith.constant 0 : i32
    %c0_i32_0 = arith.constant 0 : i32
    %c0_i32_1 = arith.constant 0 : i32
    return %c0_i32, %c0_i32_0 : i32, i32
  }
  func.func @transform_17(%arg0: i32) -> (i32, i32) {
    %c0_i32 = arith.constant 0 : i32
    %c0_i32_0 = arith.constant 0 : i32
    %c0_i32_1 = arith.constant 0 : i32
    return %c0_i32, %c0_i32_0 : i32, i32
  }
  func.func @transform_18(%arg0: i32) -> (i32, i32) {
    %c0_i32 = arith.constant 0 : i32
    %c0_i32_0 = arith.constant 0 : i32
    %c0_i32_1 = arith.constant 0 : i32
    return %c0_i32, %c0_i32_0 : i32, i32
  }
}

</mosaic_0001>

<llo_original>
// kernel: bert_siamese_forward.1
$region0: #{bert_siamese_forward.1}
  #allocation0 [shape = 'u32[]', space=smem, size = 0x4, offset = 0x4, fixed_abs, tag = 'smem constant byte address 0x4 - core index']
  #allocation1 [shape = 'u32[72,128]{1,0:T(1,128)}', space=vmem, size = 0x9000, scoped, tag = 'internal scratch']
  #allocation2 [shape = 'f32[1,1]{1,0:T(1,128)S(1)}', space=vmem, size = 0x200, scoped, tag = 'scoped memory for bert_siamese_forward.1']
  %s0 = inlined_call_operand.vmem [shape: f32[24,32], index: 0, kind: input, shape index: {}]
  %s1 = inlined_call_operand.vmem [shape: f32[3,8], index: 1, kind: input, shape index: {}]
  %s2 = inlined_call_operand.vmem [shape: f32[24,1], index: 2, kind: input, shape index: {}]
  %s3 = inlined_call_operand.vmem [shape: f32[2,32], index: 3, kind: input, shape index: {}]
  %s4 = inlined_call_operand.vmem [shape: bf16[2,32,96], index: 4, kind: input, shape index: {}]
  %s5 = inlined_call_operand.vmem [shape: f32[2,1,96], index: 5, kind: input, shape index: {}]
  %s6 = inlined_call_operand.vmem [shape: bf16[2,32,32], index: 6, kind: input, shape index: {}]
  %s7 = inlined_call_operand.vmem [shape: f32[2,1,32], index: 7, kind: input, shape index: {}]
  %s8 = inlined_call_operand.vmem [shape: f32[2,2,32], index: 8, kind: input, shape index: {}]
  %s9 = inlined_call_operand.vmem [shape: bf16[2,32,64], index: 9, kind: input, shape index: {}]
  %s10 = inlined_call_operand.vmem [shape: f32[2,1,64], index: 10, kind: input, shape index: {}]
  %s11 = inlined_call_operand.vmem [shape: bf16[2,64,32], index: 11, kind: input, shape index: {}]
  %s12 = inlined_call_operand.vmem [shape: f32[2,1,32], index: 12, kind: input, shape index: {}]
  %s13 = inlined_call_operand.vmem [shape: f32[2,2,32], index: 13, kind: input, shape index: {}]
  %s14 = inlined_call_operand.vmem [shape: f32[3,64], index: 14, kind: input, shape index: {}]
  %s15 = inlined_call_operand.vmem [shape: f32[1,64], index: 15, kind: input, shape index: {}]
  %s16 = inlined_call_operand.vmem [shape: f32[1,64], index: 16, kind: input, shape index: {}]
  %s17 = inlined_call_operand.<no memory space> [shape: f32[1,1], index: 17, kind: input, shape index: {}]
  %s18 = inlined_call_operand.hbm [shape: f32[1,2], index: 18, kind: output, shape index: {}]
  %s19 = sld [smem:[#allocation0]]
  $region82: #{bert_siamese_forward.1} parent=0
    _
  %s21 = ssub.s32 1, %s19
  %s22 = scalar_select 0, %s21, %s19
  %v23 = vstv %s17
  %24 = vst [vmem:[#allocation2] sm:$0x1] %v23
  $region1: #{bert_siamese_forward.1} parent=0
    #allocation3 [shape = 'u8[512]{0}', space=vmem, size = 0x400, scoped, tag = 'output window, operand 0, single buffered']
    #allocation4 [shape = 's32[1]{0}', space=sflag, size = 0x4, scoped, tag = 'scoped memory for bert_siamese_forward.1']
    %25 = vsyncpa [#allocation4], 0
    // Predicated region
    $region2: #{bert_siamese_forward.1} parent=1 // pred_check
      _
    $region3: #{bert_siamese_forward.1} parent=1 // pred_check_branch
      %27 = sbr.rel (0) target = $region5
    $region4: #{bert_siamese_forward.1} parent=1 // pred_region
      _
    $region5: #{bert_siamese_forward.1} parent=1 // pred_fallthru
      _
    // Predicated region
    $region6: #{bert_siamese_forward.1} parent=1 // pred_check
      _
    $region7: #{bert_siamese_forward.1} parent=1 // pred_check_branch
      %29 = sbr.rel (0) target = $region9
    $region8: #{bert_siamese_forward.1} parent=1 // pred_region
      _
    $region9: #{bert_siamese_forward.1} parent=1 // pred_fallthru
      _
    // Predicated region
    $region10: #{bert_siamese_forward.1} parent=1 // pred_check
      _
    $region11: #{bert_siamese_forward.1} parent=1 // pred_check_branch
      %31 = sbr.rel (0) target = $region13
    $region12: #{bert_siamese_forward.1} parent=1 // pred_region
      _
    $region13: #{bert_siamese_forward.1} parent=1 // pred_fallthru
      _
    // Predicated region
    $region14: #{bert_siamese_forward.1} parent=1 // pred_check
      _
    $region15: #{bert_siamese_forward.1} parent=1 // pred_check_branch
      %33 = sbr.rel (0) target = $region17
    $region16: #{bert_siamese_forward.1} parent=1 // pred_region
      _
    $region17: #{bert_siamese_forward.1} parent=1 // pred_fallthru
      _
    // Predicated region
    $region18: #{bert_siamese_forward.1} parent=1 // pred_check
      _
    $region19: #{bert_siamese_forward.1} parent=1 // pred_check_branch
      %35 = sbr.rel (0) target = $region21
    $region20: #{bert_siamese_forward.1} parent=1 // pred_region
      _
    $region21: #{bert_siamese_forward.1} parent=1 // pred_fallthru
      _
    // Predicated region
    $region22: #{bert_siamese_forward.1} parent=1 // pred_check
      _
    $region23: #{bert_siamese_forward.1} parent=1 // pred_check_branch
      %37 = sbr.rel (0) target = $region25
    $region24: #{bert_siamese_forward.1} parent=1 // pred_region
      _
    $region25: #{bert_siamese_forward.1} parent=1 // pred_fallthru
      _
    // Predicated region
    $region26: #{bert_siamese_forward.1} parent=1 // pred_check
      _
    $region27: #{bert_siamese_forward.1} parent=1 // pred_check_branch
      %39 = sbr.rel (0) target = $region29
    $region28: #{bert_siamese_forward.1} parent=1 // pred_region
      _
    $region29: #{bert_siamese_forward.1} parent=1 // pred_fallthru
      _
    // Predicated region
    $region30: #{bert_siamese_forward.1} parent=1 // pred_check
      _
    $region31: #{bert_siamese_forward.1} parent=1 // pred_check_branch
      %41 = sbr.rel (0) target = $region33
    $region32: #{bert_siamese_forward.1} parent=1 // pred_region
      _
    $region33: #{bert_siamese_forward.1} parent=1 // pred_fallthru
      _
    // Predicated region
    $region34: #{bert_siamese_forward.1} parent=1 // pred_check
      _
    $region35: #{bert_siamese_forward.1} parent=1 // pred_check_branch
      %43 = sbr.rel (0) target = $region37
    $region36: #{bert_siamese_forward.1} parent=1 // pred_region
      _
    $region37: #{bert_siamese_forward.1} parent=1 // pred_fallthru
      _
    // Predicated region
    $region38: #{bert_siamese_forward.1} parent=1 // pred_check
      _
    $region39: #{bert_siamese_forward.1} parent=1 // pred_check_branch
      %45 = sbr.rel (0) target = $region41
    $region40: #{bert_siamese_forward.1} parent=1 // pred_region
      _
    $region41: #{bert_siamese_forward.1} parent=1 // pred_fallthru
      _
    // Predicated region
    $region42: #{bert_siamese_forward.1} parent=1 // pred_check
      _
    $region43: #{bert_siamese_forward.1} parent=1 // pred_check_branch
      %47 = sbr.rel (0) target = $region45
    $region44: #{bert_siamese_forward.1} parent=1 // pred_region
      _
    $region45: #{bert_siamese_forward.1} parent=1 // pred_fallthru
      _
    // Predicated region
    $region46: #{bert_siamese_forward.1} parent=1 // pred_check
      _
    $region47: #{bert_siamese_forward.1} parent=1 // pred_check_branch
      %49 = sbr.rel (0) target = $region49
    $region48: #{bert_siamese_forward.1} parent=1 // pred_region
      _
    $region49: #{bert_siamese_forward.1} parent=1 // pred_fallthru
      _
    // Predicated region
    $region50: #{bert_siamese_forward.1} parent=1 // pred_check
      _
    $region51: #{bert_siamese_forward.1} parent=1 // pred_check_branch
      %51 = sbr.rel (0) target = $region53
    $region52: #{bert_siamese_forward.1} parent=1 // pred_region
      _
    $region53: #{bert_siamese_forward.1} parent=1 // pred_fallthru
      _
    // Predicated region
    $region54: #{bert_siamese_forward.1} parent=1 // pred_check
      _
    $region55: #{bert_siamese_forward.1} parent=1 // pred_check_branch
      %53 = sbr.rel (0) target = $region57
    $region56: #{bert_siamese_forward.1} parent=1 // pred_region
      _
    $region57: #{bert_siamese_forward.1} parent=1 // pred_fallthru
      _
    // Predicated region
    $region58: #{bert_siamese_forward.1} parent=1 // pred_check
      _
    $region59: #{bert_siamese_forward.1} parent=1 // pred_check_branch
      %55 = sbr.rel (0) target = $region61
    $region60: #{bert_siamese_forward.1} parent=1 // pred_region
      _
    $region61: #{bert_siamese_forward.1} parent=1 // pred_fallthru
      _
    // Predicated region
    $region62: #{bert_siamese_forward.1} parent=1 // pred_check
      _
    $region63: #{bert_siamese_forward.1} parent=1 // pred_check_branch
      %57 = sbr.rel (0) target = $region65
    $region64: #{bert_siamese_forward.1} parent=1 // pred_region
      _
    $region65: #{bert_siamese_forward.1} parent=1 // pred_fallthru
      _
    // Predicated region
    $region66: #{bert_siamese_forward.1} parent=1 // pred_check
      _
    $region67: #{bert_siamese_forward.1} parent=1 // pred_check_branch
      %59 = sbr.rel (0) target = $region69
    $region68: #{bert_siamese_forward.1} parent=1 // pred_region
      _
    $region69: #{bert_siamese_forward.1} parent=1 // pred_fallthru
      _
    // Predicated region
    $region70: #{bert_siamese_forward.1} parent=1 // pred_check
      _
    $region71: #{bert_siamese_forward.1} parent=1 // pred_check_branch
      %61 = sbr.rel (0) target = $region73
    $region72: #{bert_siamese_forward.1} parent=1 // pred_region
      _
    $region73: #{bert_siamese_forward.1} parent=1 // pred_fallthru
      _
    %v63 = vld [vmem:[%s1] sm:$0x7]
    %v64 = vld [vmem:[%s2] sm:$0xff]
    %v65 = vld [vmem:[%s2 + $0x8] sm:$0xff]
    %v66 = vld [vmem:[%s2 + $0x10] sm:$0xff]
    %v67 = vld [vmem:[%s3] sm:$0x3]
    %v68 = vld [vmem:[%s0] sm:$0xff]
    %v69 = vld [vmem:[%s0 + $0x8] sm:$0xff]
    %v70 = vld [vmem:[%s0 + $0x10] sm:$0xff]
    %vm71 = vcmask 261120
    %v72 = vsel %vm71, %v68, 0.0
    %73 = vadd.xlane.f32.xlu0 %v72
    %v74 = vpop.xlane.xlu0 %73
    %v75 = vsel %vm71, %v69, 0.0
    %76 = vadd.xlane.f32.xlu0 %v75
    %v77 = vpop.xlane.xlu0 %76
    %v78 = vsel %vm71, %v70, 0.0
    %79 = vadd.xlane.f32.xlu0 %v78
    %v80 = vpop.xlane.xlu0 %79
    %v81 = vrcp.pop 32.0
    %v82 = vmul.f32 32.0, %v81
    %v83 = vsub.f32 1.0, %v82
    %v84 = vmul.f32 %v81, %v83
    %v85 = vadd.f32 %v81, %v84
    %vm86 = vweird.f32 %v81
    %v87 = vsel %vm86, %v81, %v85
    %v88 = vmul.f32 %v74, %v87
    %v89 = vmul.f32 %v77, %v87
    %v90 = vmul.f32 %v80, %v87
    %v91 = vsub.f32 %v68, %v88
    %v92 = vsub.f32 %v69, %v89
    %v93 = vsub.f32 %v70, %v90
    %v94 = vmul.f32 %v91, %v91
    %v95 = vmul.f32 %v92, %v92
    %v96 = vmul.f32 %v93, %v93
    %v97 = vsel %vm71, %v94, 0.0
    %98 = vadd.xlane.f32.xlu0 %v97
    %v99 = vpop.xlane.xlu0 %98
    %v100 = vsel %vm71, %v95, 0.0
    %101 = vadd.xlane.f32.xlu0 %v100
    %v102 = vpop.xlane.xlu0 %101
    %v103 = vsel %vm71, %v96, 0.0
    %104 = vadd.xlane.f32.xlu0 %v103
    %v105 = vpop.xlane.xlu0 %104
    %v106 = vmul.f32 %v99, %v87
    %v107 = vmul.f32 %v102, %v87
    %v108 = vmul.f32 %v105, %v87
    %v109 = vadd.f32 %v106, 1e-12
    %v110 = vadd.f32 %v107, 1e-12
    %v111 = vadd.f32 %v108, 1e-12
    %v112 = vrsqrt.pop %v109
    %v113 = vmul.f32 %v112, %v109
    %v114 = vmul.f32 %v113, %v112
    %v115 = vmul.f32 0.5, %v114
    %v116 = vsub.f32 1.5, %v115
    %v117 = vmul.f32 %v112, %v116
    %vm118 = vweird.f32 %v109
    %vm119 = vweird.f32 %v112
    %vm120 = vmor %vm118, %vm119
    %v121 = vsel %vm120, %v112, %v117
    %v122 = vrsqrt.pop %v110
    %v123 = vmul.f32 %v122, %v110
    %v124 = vmul.f32 %v123, %v122
    %v125 = vmul.f32 0.5, %v124
    %v126 = vsub.f32 1.5, %v125
    %v127 = vmul.f32 %v122, %v126
    %vm128 = vweird.f32 %v110
    %vm129 = vweird.f32 %v122
    %vm130 = vmor %vm128, %vm129
    %v131 = vsel %vm130, %v122, %v127
    %v132 = vrsqrt.pop %v111
    %v133 = vmul.f32 %v132, %v111
    %v134 = vmul.f32 %v133, %v132
    %v135 = vmul.f32 0.5, %v134
    %v136 = vsub.f32 1.5, %v135
    %v137 = vmul.f32 %v132, %v136
    %vm138 = vweird.f32 %v111
    %vm139 = vweird.f32 %v132
    %vm140 = vmor %vm138, %vm139
    %v141 = vsel %vm140, %v132, %v137
    %v142 = vmul.f32 %v91, %v121
    %v143 = vmul.f32 %v92, %v131
    %v144 = vmul.f32 %v93, %v141
    %v145 = vperm.slane %v67, 0
    %v146 = vmul.f32 %v142, %v145
    %v147 = vmul.f32 %v143, %v145
    %v148 = vmul.f32 %v144, %v145
    %v149 = vperm.slane %v67, 1
    %v150 = vadd.f32 %v146, %v149
    %v151 = vadd.f32 %v147, %v149
    %v152 = vadd.f32 %v148, %v149
    %v153 = vpack.c.bf16 %v151, %v150
    %v154 = vpack.c.bf16 %v152, %v152
    %v155 = vld [vmem:[%s4] sm:$0xf]
    %v156 = vld [vmem:[%s4 + $0x4] sm:$0xf]
    %v157 = vld [vmem:[%s4 + $0x8] sm:$0xf]
    %v158 = vld [vmem:[%s4 + $0xc] sm:$0xf]
    %v159 = vld [vmem:[%s5] sm:$0x1]
    %v161 = vperm.slane %v159, 0
    %v167 = vunpack.c.l.b16 %v155
    %v168 = vunpack.c.l.b16 %v156
    %v169 = vunpack.c.l.b16 %v157
    %v170 = vunpack.c.l.b16 %v158
    %v171 = vpack.c.b16 %v168, %v167
    %v172 = vpack.c.b16 %v170, %v169
    %v176 = vsel %vm71, %v153, 0
    %v179 = vsel %vm71, %v154, 0
    %181 = vmatpush.bf16.msra.mxu0 0
    %182 = vmatpush.bf16.msra.mxu0 0
    %183 = vmatpush.bf16.msra.mxu0 0
    %184 = vmatpush.bf16.msra.mxu0 0
    %185 = vmatpush.bf16.msra.mxu0 0
    %186 = vmatpush.bf16.msra.mxu0 0
    %187 = vmatpush.bf16.msra.mxu0 %v172
    %188 = vmatpush.bf16.msra.mxu0 %v171
    %189 = vmatmul.bf16.gmra.mxu0 %v176
    %v190 = vpop.f32.mrf.mxu0
    %v191 = vadd.f32 %v161, %v190
    %v192 = vpop.f32.mrf.mxu0
    %v193 = vadd.f32 %v161, %v192
    %194 = vmatmul.bf16.gmra.mxu0 %v179
    %v195 = vpop.f32.mrf.mxu0
    %v196 = vadd.f32 %v161, %v195
    %v197 = vpop.f32.mrf.mxu0
    %198 = vdwg.mxu0
    %200 = vrot.lane.b32.xlu0 %v191, 96
    %v201 = vpop.permute.xlu0 %200
    %vm202 = vcmask 64512
    %v203 = vsel %vm202, %v191, 0
    %v205 = vsel %vm202, %v201, 0
    %207 = vmatpush.xpose.msra.mxu0 0.0
    %208 = vmatpush.xpose.msra.mxu0 0.0
    %209 = vmatpush.xpose.msra.mxu0 0.0
    %210 = vmatpush.xpose.msra.mxu0 0.0
    %211 = vmatpush.xpose.msra.mxu0 0.0
    %212 = vmatpush.xpose.msra.mxu0 0.0
    %213 = vmatpush.xpose.msra.mxu0 0.0
    %214 = vmatpush.xpose.msra.mxu0 0.0
    %215 = vmatpush.xpose.msra.mxu0 0.0
    %216 = vmatpush.xpose.msra.mxu0 0.0
    %217 = vmatpush.xpose.msra.mxu0 0.0
    %218 = vmatpush.xpose.msra.mxu0 0.0
    %219 = vmatpush.xpose.msra.mxu0 0.0
    %220 = vmatpush.xpose.msra.mxu0 0.0
    %221 = vmatpush.xpose.msra.mxu0 0.0
    %222 = vmatpush.xpose.msra.mxu0 %v205
    %223 = vmatmul.f32.gmra.mxu0 %v203
    %v224 = vpop.f32.mrf.mxu0
    %v225 = vadd.f32 0.0, %v224
    %226 = vdwg.mxu0
    %v227 = vmul.f32 %v225, 0.35355338
    %v228 = vperm.slane %v63, 0
    %v229 = vadd.f32 %v227, %v228
    %v230 = vsel %vm202, %v229, -inf
    %231 = vmax.xlane.f32.xlu0 %v230
    %v232 = vpop.xlane.xlu0 %231
    %v233 = vsub.f32 %v229, %v232
    %v234 = vmul.f32 %v233, 1.442695
    %v235 = vpow.pop %v234
    %v236 = vsel %vm202, %v235, 0.0
    %237 = vadd.xlane.f32.xlu0 %v236
    %v238 = vpop.xlane.xlu0 %237
    %v239 = vrcp.pop %v238
    %v240 = vmul.f32 %v235, %v239
    %241 = vrot.lane.b32.xlu0 %v191, 64
    %v242 = vpop.permute.xlu0 %241
    %v245 = vsel %vm202, %v240, 0
    %247 = vmatpush.msra.mxu0 0.0
    %248 = vmatpush.msra.mxu0 0.0
    %249 = vmatpush.msra.mxu0 0.0
    %250 = vmatpush.msra.mxu0 0.0
    %251 = vmatpush.msra.mxu0 0.0
    %252 = vmatpush.msra.mxu0 0.0
    %253 = vmatpush.msra.mxu0 0.0
    %254 = vmatpush.msra.mxu0 0.0
    %255 = vmatpush.msra.mxu0 0.0
    %256 = vmatpush.msra.mxu0 0.0
    %257 = vmatpush.msra.mxu0 0.0
    %258 = vmatpush.msra.mxu0 0.0
    %259 = vmatpush.msra.mxu0 0.0
    %260 = vmatpush.msra.mxu0 0.0
    %261 = vmatpush.msra.mxu0 0.0
    %262 = vmatpush.msra.mxu0 %v242
    %263 = vmatmul.f32.gmra.mxu0 %v245
    %v264 = vpop.f32.mrf.mxu0
    %v265 = vadd.f32 0.0, %v264
    %266 = vdwg.mxu0
    %267 = vrot.lane.b32.xlu0 %v191, 120
    %v268 = vpop.permute.xlu0 %267
    %269 = vrot.lane.b32.xlu0 %v191, 88
    %v270 = vpop.permute.xlu0 %269
    %v271 = vsel %vm202, %v268, 0
    %v273 = vsel %vm202, %v270, 0
    %275 = vmatpush.xpose.msra.mxu0 0.0
    %276 = vmatpush.xpose.msra.mxu0 0.0
    %277 = vmatpush.xpose.msra.mxu0 0.0
    %278 = vmatpush.xpose.msra.mxu0 0.0
    %279 = vmatpush.xpose.msra.mxu0 0.0
    %280 = vmatpush.xpose.msra.mxu0 0.0
    %281 = vmatpush.xpose.msra.mxu0 0.0
    %282 = vmatpush.xpose.msra.mxu0 0.0
    %283 = vmatpush.xpose.msra.mxu0 0.0
    %284 = vmatpush.xpose.msra.mxu0 0.0
    %285 = vmatpush.xpose.msra.mxu0 0.0
    %286 = vmatpush.xpose.msra.mxu0 0.0
    %287 = vmatpush.xpose.msra.mxu0 0.0
    %288 = vmatpush.xpose.msra.mxu0 0.0
    %289 = vmatpush.xpose.msra.mxu0 0.0
    %290 = vmatpush.xpose.msra.mxu0 %v273
    %291 = vmatmul.f32.gmra.mxu0 %v271
    %v292 = vpop.f32.mrf.mxu0
    %v293 = vadd.f32 0.0, %v292
    %294 = vdwg.mxu0
    %v295 = vmul.f32 %v293, 0.35355338
    %v296 = vadd.f32 %v295, %v228
    %v297 = vsel %vm202, %v296, -inf
    %298 = vmax.xlane.f32.xlu0 %v297
    %v299 = vpop.xlane.xlu0 %298
    %v300 = vsub.f32 %v296, %v299
    %v301 = vmul.f32 %v300, 1.442695
    %v302 = vpow.pop %v301
    %v303 = vsel %vm202, %v302, 0.0
    %304 = vadd.xlane.f32.xlu0 %v303
    %v305 = vpop.xlane.xlu0 %304
    %v306 = vrcp.pop %v305
    %v307 = vmul.f32 %v302, %v306
    %308 = vrot.lane.b32.xlu0 %v191, 56
    %v309 = vpop.permute.xlu0 %308
    %v312 = vsel %vm202, %v307, 0
    %314 = vmatpush.msra.mxu0 0.0
    %315 = vmatpush.msra.mxu0 0.0
    %316 = vmatpush.msra.mxu0 0.0
    %317 = vmatpush.msra.mxu0 0.0
    %318 = vmatpush.msra.mxu0 0.0
    %319 = vmatpush.msra.mxu0 0.0
    %320 = vmatpush.msra.mxu0 0.0
    %321 = vmatpush.msra.mxu0 0.0
    %322 = vmatpush.msra.mxu0 0.0
    %323 = vmatpush.msra.mxu0 0.0
    %324 = vmatpush.msra.mxu0 0.0
    %325 = vmatpush.msra.mxu0 0.0
    %326 = vmatpush.msra.mxu0 0.0
    %327 = vmatpush.msra.mxu0 0.0
    %328 = vmatpush.msra.mxu0 0.0
    %329 = vmatpush.msra.mxu0 %v309
    %330 = vmatmul.f32.gmra.mxu0 %v312
    %v331 = vpop.f32.mrf.mxu0
    %v332 = vadd.f32 0.0, %v331
    %333 = vdwg.mxu0
    %334 = vrot.lane.b32.xlu0 %v191, 112
    %v335 = vpop.permute.xlu0 %334
    %336 = vrot.lane.b32.xlu0 %v191, 80
    %v337 = vpop.permute.xlu0 %336
    %v338 = vsel %vm202, %v335, 0
    %v340 = vsel %vm202, %v337, 0
    %342 = vmatpush.xpose.msra.mxu0 0.0
    %343 = vmatpush.xpose.msra.mxu0 0.0
    %344 = vmatpush.xpose.msra.mxu0 0.0
    %345 = vmatpush.xpose.msra.mxu0 0.0
    %346 = vmatpush.xpose.msra.mxu0 0.0
    %347 = vmatpush.xpose.msra.mxu0 0.0
    %348 = vmatpush.xpose.msra.mxu0 0.0
    %349 = vmatpush.xpose.msra.mxu0 0.0
    %350 = vmatpush.xpose.msra.mxu0 0.0
    %351 = vmatpush.xpose.msra.mxu0 0.0
    %352 = vmatpush.xpose.msra.mxu0 0.0
    %353 = vmatpush.xpose.msra.mxu0 0.0
    %354 = vmatpush.xpose.msra.mxu0 0.0
    %355 = vmatpush.xpose.msra.mxu0 0.0
    %356 = vmatpush.xpose.msra.mxu0 0.0
    %357 = vmatpush.xpose.msra.mxu0 %v340
    %358 = vmatmul.f32.gmra.mxu0 %v338
    %v359 = vpop.f32.mrf.mxu0
    %v360 = vadd.f32 0.0, %v359
    %361 = vdwg.mxu0
    %v362 = vmul.f32 %v360, 0.35355338
    %v363 = vadd.f32 %v362, %v228
    %v364 = vsel %vm202, %v363, -inf
    %365 = vmax.xlane.f32.xlu0 %v364
    %v366 = vpop.xlane.xlu0 %365
    %v367 = vsub.f32 %v363, %v366
    %v368 = vmul.f32 %v367, 1.442695
    %v369 = vpow.pop %v368
    %v370 = vsel %vm202, %v369, 0.0
    %371 = vadd.xlane.f32.xlu0 %v370
    %v372 = vpop.xlane.xlu0 %371
    %v373 = vrcp.pop %v372
    %v374 = vmul.f32 %v369, %v373
    %375 = vrot.lane.b32.xlu0 %v191, 48
    %v376 = vpop.permute.xlu0 %375
    %v379 = vsel %vm202, %v374, 0
    %381 = vmatpush.msra.mxu0 0.0
    %382 = vmatpush.msra.mxu0 0.0
    %383 = vmatpush.msra.mxu0 0.0
    %384 = vmatpush.msra.mxu0 0.0
    %385 = vmatpush.msra.mxu0 0.0
    %386 = vmatpush.msra.mxu0 0.0
    %387 = vmatpush.msra.mxu0 0.0
    %388 = vmatpush.msra.mxu0 0.0
    %389 = vmatpush.msra.mxu0 0.0
    %390 = vmatpush.msra.mxu0 0.0
    %391 = vmatpush.msra.mxu0 0.0
    %392 = vmatpush.msra.mxu0 0.0
    %393 = vmatpush.msra.mxu0 0.0
    %394 = vmatpush.msra.mxu0 0.0
    %395 = vmatpush.msra.mxu0 0.0
    %396 = vmatpush.msra.mxu0 %v376
    %397 = vmatmul.f32.gmra.mxu0 %v379
    %v398 = vpop.f32.mrf.mxu0
    %v399 = vadd.f32 0.0, %v398
    %400 = vdwg.mxu0
    %401 = vrot.lane.b32.xlu0 %v191, 104
    %v402 = vpop.permute.xlu0 %401
    %403 = vrot.lane.b32.xlu0 %v191, 72
    %v404 = vpop.permute.xlu0 %403
    %v405 = vsel %vm202, %v402, 0
    %v407 = vsel %vm202, %v404, 0
    %409 = vmatpush.xpose.msra.mxu0 0.0
    %410 = vmatpush.xpose.msra.mxu0 0.0
    %411 = vmatpush.xpose.msra.mxu0 0.0
    %412 = vmatpush.xpose.msra.mxu0 0.0
    %413 = vmatpush.xpose.msra.mxu0 0.0
    %414 = vmatpush.xpose.msra.mxu0 0.0
    %415 = vmatpush.xpose.msra.mxu0 0.0
    %416 = vmatpush.xpose.msra.mxu0 0.0
    %417 = vmatpush.xpose.msra.mxu0 0.0
    %418 = vmatpush.xpose.msra.mxu0 0.0
    %419 = vmatpush.xpose.msra.mxu0 0.0
    %420 = vmatpush.xpose.msra.mxu0 0.0
    %421 = vmatpush.xpose.msra.mxu0 0.0
    %422 = vmatpush.xpose.msra.mxu0 0.0
    %423 = vmatpush.xpose.msra.mxu0 0.0
    %424 = vmatpush.xpose.msra.mxu0 %v407
    %425 = vmatmul.f32.gmra.mxu0 %v405
    %v426 = vpop.f32.mrf.mxu0
    %v427 = vadd.f32 0.0, %v426
    %428 = vdwg.mxu0
    %v429 = vmul.f32 %v427, 0.35355338
    %v430 = vadd.f32 %v429, %v228
    %v431 = vsel %vm202, %v430, -inf
    %432 = vmax.xlane.f32.xlu0 %v431
    %v433 = vpop.xlane.xlu0 %432
    %v434 = vsub.f32 %v430, %v433
    %v435 = vmul.f32 %v434, 1.442695
    %v436 = vpow.pop %v435
    %v437 = vsel %vm202, %v436, 0.0
    %438 = vadd.xlane.f32.xlu0 %v437
    %v439 = vpop.xlane.xlu0 %438
    %v440 = vrcp.pop %v439
    %v441 = vmul.f32 %v436, %v440
    %442 = vrot.lane.b32.xlu0 %v191, 40
    %v443 = vpop.permute.xlu0 %442
    %v446 = vsel %vm202, %v441, 0
    %448 = vmatpush.msra.mxu0 0.0
    %449 = vmatpush.msra.mxu0 0.0
    %450 = vmatpush.msra.mxu0 0.0
    %451 = vmatpush.msra.mxu0 0.0
    %452 = vmatpush.msra.mxu0 0.0
    %453 = vmatpush.msra.mxu0 0.0
    %454 = vmatpush.msra.mxu0 0.0
    %455 = vmatpush.msra.mxu0 0.0
    %456 = vmatpush.msra.mxu0 0.0
    %457 = vmatpush.msra.mxu0 0.0
    %458 = vmatpush.msra.mxu0 0.0
    %459 = vmatpush.msra.mxu0 0.0
    %460 = vmatpush.msra.mxu0 0.0
    %461 = vmatpush.msra.mxu0 0.0
    %462 = vmatpush.msra.mxu0 0.0
    %463 = vmatpush.msra.mxu0 %v443
    %464 = vmatmul.f32.gmra.mxu0 %v446
    %v465 = vpop.f32.mrf.mxu0
    %v466 = vadd.f32 0.0, %v465
    %467 = vdwg.mxu0
    %469 = vrot.lane.b32.xlu0 %v332, 8
    %v470 = vpop.permute.xlu0 %469
    %473 = vrot.lane.b32.xlu0 %v399, 16
    %v474 = vpop.permute.xlu0 %473
    %477 = vrot.lane.b32.xlu0 %v466, 24
    %v478 = vpop.permute.xlu0 %477
    %v480 = vsel %vm202, %v265, %v470
    %vm481 = vcmask 130048
    %v482 = vsel %vm481, %v480, %v474
    %vm483 = vcmask 195584
    %v484 = vsel %vm483, %v482, %v478
    %486 = vrot.lane.b32.xlu0 %v193, 96
    %v487 = vpop.permute.xlu0 %486
    %v488 = vsel %vm202, %v193, 0
    %v490 = vsel %vm202, %v487, 0
    %492 = vmatpush.xpose.msra.mxu0 0.0
    %493 = vmatpush.xpose.msra.mxu0 0.0
    %494 = vmatpush.xpose.msra.mxu0 0.0
    %495 = vmatpush.xpose.msra.mxu0 0.0
    %496 = vmatpush.xpose.msra.mxu0 0.0
    %497 = vmatpush.xpose.msra.mxu0 0.0
    %498 = vmatpush.xpose.msra.mxu0 0.0
    %499 = vmatpush.xpose.msra.mxu0 0.0
    %500 = vmatpush.xpose.msra.mxu0 0.0
    %501 = vmatpush.xpose.msra.mxu0 0.0
    %502 = vmatpush.xpose.msra.mxu0 0.0
    %503 = vmatpush.xpose.msra.mxu0 0.0
    %504 = vmatpush.xpose.msra.mxu0 0.0
    %505 = vmatpush.xpose.msra.mxu0 0.0
    %506 = vmatpush.xpose.msra.mxu0 0.0
    %507 = vmatpush.xpose.msra.mxu0 %v490
    %508 = vmatmul.f32.gmra.mxu0 %v488
    %v509 = vpop.f32.mrf.mxu0
    %v510 = vadd.f32 0.0, %v509
    %511 = vdwg.mxu0
    %v512 = vmul.f32 %v510, 0.35355338
    %v513 = vperm.slane %v63, 1
    %v514 = vadd.f32 %v512, %v513
    %v515 = vsel %vm202, %v514, -inf
    %516 = vmax.xlane.f32.xlu0 %v515
    %v517 = vpop.xlane.xlu0 %516
    %v518 = vsub.f32 %v514, %v517
    %v519 = vmul.f32 %v518, 1.442695
    %v520 = vpow.pop %v519
    %v521 = vsel %vm202, %v520, 0.0
    %522 = vadd.xlane.f32.xlu0 %v521
    %v523 = vpop.xlane.xlu0 %522
    %v524 = vrcp.pop %v523
    %v525 = vmul.f32 %v520, %v524
    %526 = vrot.lane.b32.xlu0 %v193, 64
    %v527 = vpop.permute.xlu0 %526
    %v530 = vsel %vm202, %v525, 0
    %532 = vmatpush.msra.mxu0 0.0
    %533 = vmatpush.msra.mxu0 0.0
    %534 = vmatpush.msra.mxu0 0.0
    %535 = vmatpush.msra.mxu0 0.0
    %536 = vmatpush.msra.mxu0 0.0
    %537 = vmatpush.msra.mxu0 0.0
    %538 = vmatpush.msra.mxu0 0.0
    %539 = vmatpush.msra.mxu0 0.0
    %540 = vmatpush.msra.mxu0 0.0
    %541 = vmatpush.msra.mxu0 0.0
    %542 = vmatpush.msra.mxu0 0.0
    %543 = vmatpush.msra.mxu0 0.0
    %544 = vmatpush.msra.mxu0 0.0
    %545 = vmatpush.msra.mxu0 0.0
    %546 = vmatpush.msra.mxu0 0.0
    %547 = vmatpush.msra.mxu0 %v527
    %548 = vmatmul.f32.gmra.mxu0 %v530
    %v549 = vpop.f32.mrf.mxu0
    %v550 = vadd.f32 0.0, %v549
    %551 = vdwg.mxu0
    %552 = vrot.lane.b32.xlu0 %v193, 120
    %v553 = vpop.permute.xlu0 %552
    %554 = vrot.lane.b32.xlu0 %v193, 88
    %v555 = vpop.permute.xlu0 %554
    %v556 = vsel %vm202, %v553, 0
    %v558 = vsel %vm202, %v555, 0
    %560 = vmatpush.xpose.msra.mxu0 0.0
    %561 = vmatpush.xpose.msra.mxu0 0.0
    %562 = vmatpush.xpose.msra.mxu0 0.0
    %563 = vmatpush.xpose.msra.mxu0 0.0
    %564 = vmatpush.xpose.msra.mxu0 0.0
    %565 = vmatpush.xpose.msra.mxu0 0.0
    %566 = vmatpush.xpose.msra.mxu0 0.0
    %567 = vmatpush.xpose.msra.mxu0 0.0
    %568 = vmatpush.xpose.msra.mxu0 0.0
    %569 = vmatpush.xpose.msra.mxu0 0.0
    %570 = vmatpush.xpose.msra.mxu0 0.0
    %571 = vmatpush.xpose.msra.mxu0 0.0
    %572 = vmatpush.xpose.msra.mxu0 0.0
    %573 = vmatpush.xpose.msra.mxu0 0.0
    %574 = vmatpush.xpose.msra.mxu0 0.0
    %575 = vmatpush.xpose.msra.mxu0 %v558
    %576 = vmatmul.f32.gmra.mxu0 %v556
    %v577 = vpop.f32.mrf.mxu0
    %v578 = vadd.f32 0.0, %v577
    %579 = vdwg.mxu0
    %v580 = vmul.f32 %v578, 0.35355338
    %v581 = vadd.f32 %v580, %v513
    %v582 = vsel %vm202, %v581, -inf
    %583 = vmax.xlane.f32.xlu0 %v582
    %v584 = vpop.xlane.xlu0 %583
    %v585 = vsub.f32 %v581, %v584
    %v586 = vmul.f32 %v585, 1.442695
    %v587 = vpow.pop %v586
    %v588 = vsel %vm202, %v587, 0.0
    %589 = vadd.xlane.f32.xlu0 %v588
    %v590 = vpop.xlane.xlu0 %589
    %v591 = vrcp.pop %v590
    %v592 = vmul.f32 %v587, %v591
    %593 = vrot.lane.b32.xlu0 %v193, 56
    %v594 = vpop.permute.xlu0 %593
    %v597 = vsel %vm202, %v592, 0
    %599 = vmatpush.msra.mxu0 0.0
    %600 = vmatpush.msra.mxu0 0.0
    %601 = vmatpush.msra.mxu0 0.0
    %602 = vmatpush.msra.mxu0 0.0
    %603 = vmatpush.msra.mxu0 0.0
    %604 = vmatpush.msra.mxu0 0.0
    %605 = vmatpush.msra.mxu0 0.0
    %606 = vmatpush.msra.mxu0 0.0
    %607 = vmatpush.msra.mxu0 0.0
    %608 = vmatpush.msra.mxu0 0.0
    %609 = vmatpush.msra.mxu0 0.0
    %610 = vmatpush.msra.mxu0 0.0
    %611 = vmatpush.msra.mxu0 0.0
    %612 = vmatpush.msra.mxu0 0.0
    %613 = vmatpush.msra.mxu0 0.0
    %614 = vmatpush.msra.mxu0 %v594
    %615 = vmatmul.f32.gmra.mxu0 %v597
    %v616 = vpop.f32.mrf.mxu0
    %v617 = vadd.f32 0.0, %v616
    %618 = vdwg.mxu0
    %619 = vrot.lane.b32.xlu0 %v193, 112
    %v620 = vpop.permute.xlu0 %619
    %621 = vrot.lane.b32.xlu0 %v193, 80
    %v622 = vpop.permute.xlu0 %621
    %v623 = vsel %vm202, %v620, 0
    %v625 = vsel %vm202, %v622, 0
    %627 = vmatpush.xpose.msra.mxu0 0.0
    %628 = vmatpush.xpose.msra.mxu0 0.0
    %629 = vmatpush.xpose.msra.mxu0 0.0
    %630 = vmatpush.xpose.msra.mxu0 0.0
    %631 = vmatpush.xpose.msra.mxu0 0.0
    %632 = vmatpush.xpose.msra.mxu0 0.0
    %633 = vmatpush.xpose.msra.mxu0 0.0
    %634 = vmatpush.xpose.msra.mxu0 0.0
    %635 = vmatpush.xpose.msra.mxu0 0.0
    %636 = vmatpush.xpose.msra.mxu0 0.0
    %637 = vmatpush.xpose.msra.mxu0 0.0
    %638 = vmatpush.xpose.msra.mxu0 0.0
    %639 = vmatpush.xpose.msra.mxu0 0.0
    %640 = vmatpush.xpose.msra.mxu0 0.0
    %641 = vmatpush.xpose.msra.mxu0 0.0
    %642 = vmatpush.xpose.msra.mxu0 %v625
    %643 = vmatmul.f32.gmra.mxu0 %v623
    %v644 = vpop.f32.mrf.mxu0
    %v645 = vadd.f32 0.0, %v644
    %646 = vdwg.mxu0
    %v647 = vmul.f32 %v645, 0.35355338
    %v648 = vadd.f32 %v647, %v513
    %v649 = vsel %vm202, %v648, -inf
    %650 = vmax.xlane.f32.xlu0 %v649
    %v651 = vpop.xlane.xlu0 %650
    %v652 = vsub.f32 %v648, %v651
    %v653 = vmul.f32 %v652, 1.442695
    %v654 = vpow.pop %v653
    %v655 = vsel %vm202, %v654, 0.0
    %656 = vadd.xlane.f32.xlu0 %v655
    %v657 = vpop.xlane.xlu0 %656
    %v658 = vrcp.pop %v657
    %v659 = vmul.f32 %v654, %v658
    %660 = vrot.lane.b32.xlu0 %v193, 48
    %v661 = vpop.permute.xlu0 %660
    %v664 = vsel %vm202, %v659, 0
    %666 = vmatpush.msra.mxu0 0.0
    %667 = vmatpush.msra.mxu0 0.0
    %668 = vmatpush.msra.mxu0 0.0
    %669 = vmatpush.msra.mxu0 0.0
    %670 = vmatpush.msra.mxu0 0.0
    %671 = vmatpush.msra.mxu0 0.0
    %672 = vmatpush.msra.mxu0 0.0
    %673 = vmatpush.msra.mxu0 0.0
    %674 = vmatpush.msra.mxu0 0.0
    %675 = vmatpush.msra.mxu0 0.0
    %676 = vmatpush.msra.mxu0 0.0
    %677 = vmatpush.msra.mxu0 0.0
    %678 = vmatpush.msra.mxu0 0.0
    %679 = vmatpush.msra.mxu0 0.0
    %680 = vmatpush.msra.mxu0 0.0
    %681 = vmatpush.msra.mxu0 %v661
    %682 = vmatmul.f32.gmra.mxu0 %v664
    %v683 = vpop.f32.mrf.mxu0
    %v684 = vadd.f32 0.0, %v683
    %685 = vdwg.mxu0
    %686 = vrot.lane.b32.xlu0 %v193, 104
    %v687 = vpop.permute.xlu0 %686
    %688 = vrot.lane.b32.xlu0 %v193, 72
    %v689 = vpop.permute.xlu0 %688
    %v690 = vsel %vm202, %v687, 0
    %v692 = vsel %vm202, %v689, 0
    %694 = vmatpush.xpose.msra.mxu0 0.0
    %695 = vmatpush.xpose.msra.mxu0 0.0
    %696 = vmatpush.xpose.msra.mxu0 0.0
    %697 = vmatpush.xpose.msra.mxu0 0.0
    %698 = vmatpush.xpose.msra.mxu0 0.0
    %699 = vmatpush.xpose.msra.mxu0 0.0
    %700 = vmatpush.xpose.msra.mxu0 0.0
    %701 = vmatpush.xpose.msra.mxu0 0.0
    %702 = vmatpush.xpose.msra.mxu0 0.0
    %703 = vmatpush.xpose.msra.mxu0 0.0
    %704 = vmatpush.xpose.msra.mxu0 0.0
    %705 = vmatpush.xpose.msra.mxu0 0.0
    %706 = vmatpush.xpose.msra.mxu0 0.0
    %707 = vmatpush.xpose.msra.mxu0 0.0
    %708 = vmatpush.xpose.msra.mxu0 0.0
    %709 = vmatpush.xpose.msra.mxu0 %v692
    %710 = vmatmul.f32.gmra.mxu0 %v690
    %v711 = vpop.f32.mrf.mxu0
    %v712 = vadd.f32 0.0, %v711
    %713 = vdwg.mxu0
    %v714 = vmul.f32 %v712, 0.35355338
    %v715 = vadd.f32 %v714, %v513
    %v716 = vsel %vm202, %v715, -inf
    %717 = vmax.xlane.f32.xlu0 %v716
    %v718 = vpop.xlane.xlu0 %717
    %v719 = vsub.f32 %v715, %v718
    %v720 = vmul.f32 %v719, 1.442695
    %v721 = vpow.pop %v720
    %v722 = vsel %vm202, %v721, 0.0
    %723 = vadd.xlane.f32.xlu0 %v722
    %v724 = vpop.xlane.xlu0 %723
    %v725 = vrcp.pop %v724
    %v726 = vmul.f32 %v721, %v725
    %727 = vrot.lane.b32.xlu0 %v193, 40
    %v728 = vpop.permute.xlu0 %727
    %v731 = vsel %vm202, %v726, 0
    %733 = vmatpush.msra.mxu0 0.0
    %734 = vmatpush.msra.mxu0 0.0
    %735 = vmatpush.msra.mxu0 0.0
    %736 = vmatpush.msra.mxu0 0.0
    %737 = vmatpush.msra.mxu0 0.0
    %738 = vmatpush.msra.mxu0 0.0
    %739 = vmatpush.msra.mxu0 0.0
    %740 = vmatpush.msra.mxu0 0.0
    %741 = vmatpush.msra.mxu0 0.0
    %742 = vmatpush.msra.mxu0 0.0
    %743 = vmatpush.msra.mxu0 0.0
    %744 = vmatpush.msra.mxu0 0.0
    %745 = vmatpush.msra.mxu0 0.0
    %746 = vmatpush.msra.mxu0 0.0
    %747 = vmatpush.msra.mxu0 0.0
    %748 = vmatpush.msra.mxu0 %v728
    %749 = vmatmul.f32.gmra.mxu0 %v731
    %v750 = vpop.f32.mrf.mxu0
    %v751 = vadd.f32 0.0, %v750
    %752 = vdwg.mxu0
    %754 = vrot.lane.b32.xlu0 %v617, 8
    %v755 = vpop.permute.xlu0 %754
    %758 = vrot.lane.b32.xlu0 %v684, 16
    %v759 = vpop.permute.xlu0 %758
    %762 = vrot.lane.b32.xlu0 %v751, 24
    %v763 = vpop.permute.xlu0 %762
    %v765 = vsel %vm202, %v550, %v755
    %v766 = vsel %vm481, %v765, %v759
    %v767 = vsel %vm483, %v766, %v763
    %769 = vrot.lane.b32.xlu0 %v196, 96
    %v770 = vpop.permute.xlu0 %769
    %v771 = vsel %vm202, %v196, 0
    %v773 = vsel %vm202, %v770, 0
    %775 = vmatpush.xpose.msra.mxu0 0.0
    %776 = vmatpush.xpose.msra.mxu0 0.0
    %777 = vmatpush.xpose.msra.mxu0 0.0
    %778 = vmatpush.xpose.msra.mxu0 0.0
    %779 = vmatpush.xpose.msra.mxu0 0.0
    %780 = vmatpush.xpose.msra.mxu0 0.0
    %781 = vmatpush.xpose.msra.mxu0 0.0
    %782 = vmatpush.xpose.msra.mxu0 0.0
    %783 = vmatpush.xpose.msra.mxu0 0.0
    %784 = vmatpush.xpose.msra.mxu0 0.0
    %785 = vmatpush.xpose.msra.mxu0 0.0
    %786 = vmatpush.xpose.msra.mxu0 0.0
    %787 = vmatpush.xpose.msra.mxu0 0.0
    %788 = vmatpush.xpose.msra.mxu0 0.0
    %789 = vmatpush.xpose.msra.mxu0 0.0
    %790 = vmatpush.xpose.msra.mxu0 %v773
    %791 = vmatmul.f32.gmra.mxu0 %v771
    %v792 = vpop.f32.mrf.mxu0
    %v793 = vadd.f32 0.0, %v792
    %794 = vdwg.mxu0
    %v795 = vmul.f32 %v793, 0.35355338
    %v796 = vperm.slane %v63, 2
    %v797 = vadd.f32 %v795, %v796
    %v798 = vsel %vm202, %v797, -inf
    %799 = vmax.xlane.f32.xlu0 %v798
    %v800 = vpop.xlane.xlu0 %799
    %v801 = vsub.f32 %v797, %v800
    %v802 = vmul.f32 %v801, 1.442695
    %v803 = vpow.pop %v802
    %v804 = vsel %vm202, %v803, 0.0
    %805 = vadd.xlane.f32.xlu0 %v804
    %v806 = vpop.xlane.xlu0 %805
    %v807 = vrcp.pop %v806
    %v808 = vmul.f32 %v803, %v807
    %809 = vrot.lane.b32.xlu0 %v196, 64
    %v810 = vpop.permute.xlu0 %809
    %v813 = vsel %vm202, %v808, 0
    %815 = vmatpush.msra.mxu0 0.0
    %816 = vmatpush.msra.mxu0 0.0
    %817 = vmatpush.msra.mxu0 0.0
    %818 = vmatpush.msra.mxu0 0.0
    %819 = vmatpush.msra.mxu0 0.0
    %820 = vmatpush.msra.mxu0 0.0
    %821 = vmatpush.msra.mxu0 0.0
    %822 = vmatpush.msra.mxu0 0.0
    %823 = vmatpush.msra.mxu0 0.0
    %824 = vmatpush.msra.mxu0 0.0
    %825 = vmatpush.msra.mxu0 0.0
    %826 = vmatpush.msra.mxu0 0.0
    %827 = vmatpush.msra.mxu0 0.0
    %828 = vmatpush.msra.mxu0 0.0
    %829 = vmatpush.msra.mxu0 0.0
    %830 = vmatpush.msra.mxu0 %v810
    %831 = vmatmul.f32.gmra.mxu0 %v813
    %v832 = vpop.f32.mrf.mxu0
    %v833 = vadd.f32 0.0, %v832
    %834 = vdwg.mxu0
    %835 = vrot.lane.b32.xlu0 %v196, 120
    %v836 = vpop.permute.xlu0 %835
    %837 = vrot.lane.b32.xlu0 %v196, 88
    %v838 = vpop.permute.xlu0 %837
    %v839 = vsel %vm202, %v836, 0
    %v841 = vsel %vm202, %v838, 0
    %843 = vmatpush.xpose.msra.mxu0 0.0
    %844 = vmatpush.xpose.msra.mxu0 0.0
    %845 = vmatpush.xpose.msra.mxu0 0.0
    %846 = vmatpush.xpose.msra.mxu0 0.0
    %847 = vmatpush.xpose.msra.mxu0 0.0
    %848 = vmatpush.xpose.msra.mxu0 0.0
    %849 = vmatpush.xpose.msra.mxu0 0.0
    %850 = vmatpush.xpose.msra.mxu0 0.0
    %851 = vmatpush.xpose.msra.mxu0 0.0
    %852 = vmatpush.xpose.msra.mxu0 0.0
    %853 = vmatpush.xpose.msra.mxu0 0.0
    %854 = vmatpush.xpose.msra.mxu0 0.0
    %855 = vmatpush.xpose.msra.mxu0 0.0
    %856 = vmatpush.xpose.msra.mxu0 0.0
    %857 = vmatpush.xpose.msra.mxu0 0.0
    %858 = vmatpush.xpose.msra.mxu0 %v841
    %859 = vmatmul.f32.gmra.mxu0 %v839
    %v860 = vpop.f32.mrf.mxu0
    %v861 = vadd.f32 0.0, %v860
    %862 = vdwg.mxu0
    %v863 = vmul.f32 %v861, 0.35355338
    %v864 = vadd.f32 %v863, %v796
    %v865 = vsel %vm202, %v864, -inf
    %866 = vmax.xlane.f32.xlu0 %v865
    %v867 = vpop.xlane.xlu0 %866
    %v868 = vsub.f32 %v864, %v867
    %v869 = vmul.f32 %v868, 1.442695
    %v870 = vpow.pop %v869
    %v871 = vsel %vm202, %v870, 0.0
    %872 = vadd.xlane.f32.xlu0 %v871
    %v873 = vpop.xlane.xlu0 %872
    %v874 = vrcp.pop %v873
    %v875 = vmul.f32 %v870, %v874
    %876 = vrot.lane.b32.xlu0 %v196, 56
    %v877 = vpop.permute.xlu0 %876
    %v880 = vsel %vm202, %v875, 0
    %882 = vmatpush.msra.mxu0 0.0
    %883 = vmatpush.msra.mxu0 0.0
    %884 = vmatpush.msra.mxu0 0.0
    %885 = vmatpush.msra.mxu0 0.0
    %886 = vmatpush.msra.mxu0 0.0
    %887 = vmatpush.msra.mxu0 0.0
    %888 = vmatpush.msra.mxu0 0.0
    %889 = vmatpush.msra.mxu0 0.0
    %890 = vmatpush.msra.mxu0 0.0
    %891 = vmatpush.msra.mxu0 0.0
    %892 = vmatpush.msra.mxu0 0.0
    %893 = vmatpush.msra.mxu0 0.0
    %894 = vmatpush.msra.mxu0 0.0
    %895 = vmatpush.msra.mxu0 0.0
    %896 = vmatpush.msra.mxu0 0.0
    %897 = vmatpush.msra.mxu0 %v877
    %898 = vmatmul.f32.gmra.mxu0 %v880
    %v899 = vpop.f32.mrf.mxu0
    %v900 = vadd.f32 0.0, %v899
    %901 = vdwg.mxu0
    %902 = vrot.lane.b32.xlu0 %v196, 112
    %v903 = vpop.permute.xlu0 %902
    %904 = vrot.lane.b32.xlu0 %v196, 80
    %v905 = vpop.permute.xlu0 %904
    %v906 = vsel %vm202, %v903, 0
    %v908 = vsel %vm202, %v905, 0
    %910 = vmatpush.xpose.msra.mxu0 0.0
    %911 = vmatpush.xpose.msra.mxu0 0.0
    %912 = vmatpush.xpose.msra.mxu0 0.0
    %913 = vmatpush.xpose.msra.mxu0 0.0
    %914 = vmatpush.xpose.msra.mxu0 0.0
    %915 = vmatpush.xpose.msra.mxu0 0.0
    %916 = vmatpush.xpose.msra.mxu0 0.0
    %917 = vmatpush.xpose.msra.mxu0 0.0
    %918 = vmatpush.xpose.msra.mxu0 0.0
    %919 = vmatpush.xpose.msra.mxu0 0.0
    %920 = vmatpush.xpose.msra.mxu0 0.0
    %921 = vmatpush.xpose.msra.mxu0 0.0
    %922 = vmatpush.xpose.msra.mxu0 0.0
    %923 = vmatpush.xpose.msra.mxu0 0.0
    %924 = vmatpush.xpose.msra.mxu0 0.0
    %925 = vmatpush.xpose.msra.mxu0 %v908
    %926 = vmatmul.f32.gmra.mxu0 %v906
    %v927 = vpop.f32.mrf.mxu0
    %v928 = vadd.f32 0.0, %v927
    %929 = vdwg.mxu0
    %v930 = vmul.f32 %v928, 0.35355338
    %v931 = vadd.f32 %v930, %v796
    %v932 = vsel %vm202, %v931, -inf
    %933 = vmax.xlane.f32.xlu0 %v932
    %v934 = vpop.xlane.xlu0 %933
    %v935 = vsub.f32 %v931, %v934
    %v936 = vmul.f32 %v935, 1.442695
    %v937 = vpow.pop %v936
    %v938 = vsel %vm202, %v937, 0.0
    %939 = vadd.xlane.f32.xlu0 %v938
    %v940 = vpop.xlane.xlu0 %939
    %v941 = vrcp.pop %v940
    %v942 = vmul.f32 %v937, %v941
    %943 = vrot.lane.b32.xlu0 %v196, 48
    %v944 = vpop.permute.xlu0 %943
    %v947 = vsel %vm202, %v942, 0
    %949 = vmatpush.msra.mxu0 0.0
    %950 = vmatpush.msra.mxu0 0.0
    %951 = vmatpush.msra.mxu0 0.0
    %952 = vmatpush.msra.mxu0 0.0
    %953 = vmatpush.msra.mxu0 0.0
    %954 = vmatpush.msra.mxu0 0.0
    %955 = vmatpush.msra.mxu0 0.0
    %956 = vmatpush.msra.mxu0 0.0
    %957 = vmatpush.msra.mxu0 0.0
    %958 = vmatpush.msra.mxu0 0.0
    %959 = vmatpush.msra.mxu0 0.0
    %960 = vmatpush.msra.mxu0 0.0
    %961 = vmatpush.msra.mxu0 0.0
    %962 = vmatpush.msra.mxu0 0.0
    %963 = vmatpush.msra.mxu0 0.0
    %964 = vmatpush.msra.mxu0 %v944
    %965 = vmatmul.f32.gmra.mxu0 %v947
    %v966 = vpop.f32.mrf.mxu0
    %v967 = vadd.f32 0.0, %v966
    %968 = vdwg.mxu0
    %969 = vrot.lane.b32.xlu0 %v196, 104
    %v970 = vpop.permute.xlu0 %969
    %971 = vrot.lane.b32.xlu0 %v196, 72
    %v972 = vpop.permute.xlu0 %971
    %v973 = vsel %vm202, %v970, 0
    %v975 = vsel %vm202, %v972, 0
    %977 = vmatpush.xpose.msra.mxu0 0.0
    %978 = vmatpush.xpose.msra.mxu0 0.0
    %979 = vmatpush.xpose.msra.mxu0 0.0
    %980 = vmatpush.xpose.msra.mxu0 0.0
    %981 = vmatpush.xpose.msra.mxu0 0.0
    %982 = vmatpush.xpose.msra.mxu0 0.0
    %983 = vmatpush.xpose.msra.mxu0 0.0
    %984 = vmatpush.xpose.msra.mxu0 0.0
    %985 = vmatpush.xpose.msra.mxu0 0.0
    %986 = vmatpush.xpose.msra.mxu0 0.0
    %987 = vmatpush.xpose.msra.mxu0 0.0
    %988 = vmatpush.xpose.msra.mxu0 0.0
    %989 = vmatpush.xpose.msra.mxu0 0.0
    %990 = vmatpush.xpose.msra.mxu0 0.0
    %991 = vmatpush.xpose.msra.mxu0 0.0
    %992 = vmatpush.xpose.msra.mxu0 %v975
    %993 = vmatmul.f32.gmra.mxu0 %v973
    %v994 = vpop.f32.mrf.mxu0
    %v995 = vadd.f32 0.0, %v994
    %996 = vdwg.mxu0
    %v997 = vmul.f32 %v995, 0.35355338
    %v998 = vadd.f32 %v997, %v796
    %v999 = vsel %vm202, %v998, -inf
    %1000 = vmax.xlane.f32.xlu0 %v999
    %v1001 = vpop.xlane.xlu0 %1000
    %v1002 = vsub.f32 %v998, %v1001
    %v1003 = vmul.f32 %v1002, 1.442695
    %v1004 = vpow.pop %v1003
    %v1005 = vsel %vm202, %v1004, 0.0
    %1006 = vadd.xlane.f32.xlu0 %v1005
    %v1007 = vpop.xlane.xlu0 %1006
    %v1008 = vrcp.pop %v1007
    %v1009 = vmul.f32 %v1004, %v1008
    %1010 = vrot.lane.b32.xlu0 %v196, 40
    %v1011 = vpop.permute.xlu0 %1010
    %v1014 = vsel %vm202, %v1009, 0
    %1016 = vmatpush.msra.mxu0 0.0
    %1017 = vmatpush.msra.mxu0 0.0
    %1018 = vmatpush.msra.mxu0 0.0
    %1019 = vmatpush.msra.mxu0 0.0
    %1020 = vmatpush.msra.mxu0 0.0
    %1021 = vmatpush.msra.mxu0 0.0
    %1022 = vmatpush.msra.mxu0 0.0
    %1023 = vmatpush.msra.mxu0 0.0
    %1024 = vmatpush.msra.mxu0 0.0
    %1025 = vmatpush.msra.mxu0 0.0
    %1026 = vmatpush.msra.mxu0 0.0
    %1027 = vmatpush.msra.mxu0 0.0
    %1028 = vmatpush.msra.mxu0 0.0
    %1029 = vmatpush.msra.mxu0 0.0
    %1030 = vmatpush.msra.mxu0 0.0
    %1031 = vmatpush.msra.mxu0 %v1011
    %1032 = vmatmul.f32.gmra.mxu0 %v1014
    %v1033 = vpop.f32.mrf.mxu0
    %v1034 = vadd.f32 0.0, %v1033
    %1035 = vdwg.mxu0
    %1037 = vrot.lane.b32.xlu0 %v900, 8
    %v1038 = vpop.permute.xlu0 %1037
    %1041 = vrot.lane.b32.xlu0 %v967, 16
    %v1042 = vpop.permute.xlu0 %1041
    %1045 = vrot.lane.b32.xlu0 %v1034, 24
    %v1046 = vpop.permute.xlu0 %1045
    %v1048 = vsel %vm202, %v833, %v1038
    %v1049 = vsel %vm481, %v1048, %v1042
    %v1050 = vsel %vm483, %v1049, %v1046
    %v1051 = vpack.c.bf16 %v767, %v484
    %v1052 = vpack.c.bf16 %v1050, %v1050
    %v1053 = vld [vmem:[%s6] sm:$0xf]
    %v1054 = vld [vmem:[%s6 + $0x4] sm:$0xf]
    %v1055 = vld [vmem:[%s6 + $0x8] sm:$0xf]
    %v1056 = vld [vmem:[%s6 + $0xc] sm:$0xf]
    %v1057 = vld [vmem:[%s7] sm:$0x1]
    %v1059 = vperm.slane %v1057, 0
    %v1065 = vunpack.c.l.b16 %v1053
    %v1066 = vunpack.c.l.b16 %v1054
    %v1067 = vunpack.c.l.b16 %v1055
    %v1068 = vunpack.c.l.b16 %v1056
    %v1069 = vpack.c.b16 %v1066, %v1065
    %v1070 = vpack.c.b16 %v1068, %v1067
    %v1074 = vsel %vm71, %v1051, 0
    %v1077 = vsel %vm71, %v1052, 0
    %1079 = vmatpush.bf16.msra.mxu0 0
    %1080 = vmatpush.bf16.msra.mxu0 0
    %1081 = vmatpush.bf16.msra.mxu0 0
    %1082 = vmatpush.bf16.msra.mxu0 0
    %1083 = vmatpush.bf16.msra.mxu0 0
    %1084 = vmatpush.bf16.msra.mxu0 0
    %1085 = vmatpush.bf16.msra.mxu0 %v1070
    %1086 = vmatpush.bf16.msra.mxu0 %v1069
    %1087 = vmatmul.bf16.gmra.mxu0 %v1074
    %v1088 = vpop.f32.mrf.mxu0
    %v1089 = vadd.f32 %v1059, %v1088
    %v1090 = vpop.f32.mrf.mxu0
    %v1091 = vadd.f32 %v1059, %v1090
    %1092 = vmatmul.bf16.gmra.mxu0 %v1077
    %v1093 = vpop.f32.mrf.mxu0
    %v1094 = vadd.f32 %v1059, %v1093
    %v1095 = vpop.f32.mrf.mxu0
    %1096 = vdwg.mxu0
    %v1097 = vld [vmem:[%s8] sm:$0x3]
    %v1098 = vadd.f32 %v1089, %v150
    %v1099 = vadd.f32 %v1091, %v151
    %v1100 = vadd.f32 %v1094, %v152
    %v1101 = vsel %vm71, %v1098, 0.0
    %1102 = vadd.xlane.f32.xlu0 %v1101
    %v1103 = vpop.xlane.xlu0 %1102
    %v1104 = vsel %vm71, %v1099, 0.0
    %1105 = vadd.xlane.f32.xlu0 %v1104
    %v1106 = vpop.xlane.xlu0 %1105
    %v1107 = vsel %vm71, %v1100, 0.0
    %1108 = vadd.xlane.f32.xlu0 %v1107
    %v1109 = vpop.xlane.xlu0 %1108
    %v1110 = vmul.f32 %v1103, %v87
    %v1111 = vmul.f32 %v1106, %v87
    %v1112 = vmul.f32 %v1109, %v87
    %v1113 = vsub.f32 %v1098, %v1110
    %v1114 = vsub.f32 %v1099, %v1111
    %v1115 = vsub.f32 %v1100, %v1112
    %v1116 = vmul.f32 %v1113, %v1113
    %v1117 = vmul.f32 %v1114, %v1114
    %v1118 = vmul.f32 %v1115, %v1115
    %v1119 = vsel %vm71, %v1116, 0.0
    %1120 = vadd.xlane.f32.xlu0 %v1119
    %v1121 = vpop.xlane.xlu0 %1120
    %v1122 = vsel %vm71, %v1117, 0.0
    %1123 = vadd.xlane.f32.xlu0 %v1122
    %v1124 = vpop.xlane.xlu0 %1123
    %v1125 = vsel %vm71, %v1118, 0.0
    %1126 = vadd.xlane.f32.xlu0 %v1125
    %v1127 = vpop.xlane.xlu0 %1126
    %v1128 = vmul.f32 %v1121, %v87
    %v1129 = vmul.f32 %v1124, %v87
    %v1130 = vmul.f32 %v1127, %v87
    %v1131 = vadd.f32 %v1128, 1e-12
    %v1132 = vadd.f32 %v1129, 1e-12
    %v1133 = vadd.f32 %v1130, 1e-12
    %v1134 = vrsqrt.pop %v1131
    %v1135 = vmul.f32 %v1134, %v1131
    %v1136 = vmul.f32 %v1135, %v1134
    %v1137 = vmul.f32 0.5, %v1136
    %v1138 = vsub.f32 1.5, %v1137
    %v1139 = vmul.f32 %v1134, %v1138
    %vm1140 = vweird.f32 %v1131
    %vm1141 = vweird.f32 %v1134
    %vm1142 = vmor %vm1140, %vm1141
    %v1143 = vsel %vm1142, %v1134, %v1139
    %v1144 = vrsqrt.pop %v1132
    %v1145 = vmul.f32 %v1144, %v1132
    %v1146 = vmul.f32 %v1145, %v1144
    %v1147 = vmul.f32 0.5, %v1146
    %v1148 = vsub.f32 1.5, %v1147
    %v1149 = vmul.f32 %v1144, %v1148
    %vm1150 = vweird.f32 %v1132
    %vm1151 = vweird.f32 %v1144
    %vm1152 = vmor %vm1150, %vm1151
    %v1153 = vsel %vm1152, %v1144, %v1149
    %v1154 = vrsqrt.pop %v1133
    %v1155 = vmul.f32 %v1154, %v1133
    %v1156 = vmul.f32 %v1155, %v1154
    %v1157 = vmul.f32 0.5, %v1156
    %v1158 = vsub.f32 1.5, %v1157
    %v1159 = vmul.f32 %v1154, %v1158
    %vm1160 = vweird.f32 %v1133
    %vm1161 = vweird.f32 %v1154
    %vm1162 = vmor %vm1160, %vm1161
    %v1163 = vsel %vm1162, %v1154, %v1159
    %v1164 = vmul.f32 %v1113, %v1143
    %v1165 = vmul.f32 %v1114, %v1153
    %v1166 = vmul.f32 %v1115, %v1163
    %v1167 = vperm.slane %v1097, 0
    %v1168 = vmul.f32 %v1164, %v1167
    %v1169 = vmul.f32 %v1165, %v1167
    %v1170 = vmul.f32 %v1166, %v1167
    %v1171 = vperm.slane %v1097, 1
    %v1172 = vadd.f32 %v1168, %v1171
    %v1173 = vadd.f32 %v1169, %v1171
    %v1174 = vadd.f32 %v1170, %v1171
    %v1175 = vpack.c.bf16 %v1173, %v1172
    %v1176 = vpack.c.bf16 %v1174, %v1174
    %v1177 = vld [vmem:[%s9] sm:$0xf]
    %v1178 = vld [vmem:[%s9 + $0x4] sm:$0xf]
    %v1179 = vld [vmem:[%s9 + $0x8] sm:$0xf]
    %v1180 = vld [vmem:[%s9 + $0xc] sm:$0xf]
    %v1181 = vld [vmem:[%s10] sm:$0x1]
    %v1183 = vperm.slane %v1181, 0
    %v1189 = vunpack.c.l.b16 %v1177
    %v1190 = vunpack.c.l.b16 %v1178
    %v1191 = vunpack.c.l.b16 %v1179
    %v1192 = vunpack.c.l.b16 %v1180
    %v1193 = vpack.c.b16 %v1190, %v1189
    %v1194 = vpack.c.b16 %v1192, %v1191
    %v1198 = vsel %vm71, %v1175, 0
    %v1201 = vsel %vm71, %v1176, 0
    %1203 = vmatpush.bf16.msra.mxu0 0
    %1204 = vmatpush.bf16.msra.mxu0 0
    %1205 = vmatpush.bf16.msra.mxu0 0
    %1206 = vmatpush.bf16.msra.mxu0 0
    %1207 = vmatpush.bf16.msra.mxu0 0
    %1208 = vmatpush.bf16.msra.mxu0 0
    %1209 = vmatpush.bf16.msra.mxu0 %v1194
    %1210 = vmatpush.bf16.msra.mxu0 %v1193
    %1211 = vmatmul.bf16.gmra.mxu0 %v1198
    %v1212 = vpop.f32.mrf.mxu0
    %v1213 = vadd.f32 %v1183, %v1212
    %v1214 = vpop.f32.mrf.mxu0
    %v1215 = vadd.f32 %v1183, %v1214
    %1216 = vmatmul.bf16.gmra.mxu0 %v1201
    %v1217 = vpop.f32.mrf.mxu0
    %v1218 = vadd.f32 %v1183, %v1217
    %v1219 = vpop.f32.mrf.mxu0
    %1220 = vdwg.mxu0
    %v1221 = vmul.f32 %v1213, %v1213
    %v1222 = vmul.f32 %v1215, %v1215
    %v1223 = vmul.f32 %v1218, %v1218
    %v1224 = vmul.f32 %v1213, %v1221
    %v1225 = vmul.f32 %v1215, %v1222
    %v1226 = vmul.f32 %v1218, %v1223
    %v1227 = vmul.f32 %v1224, 0.044715
    %v1228 = vmul.f32 %v1225, 0.044715
    %v1229 = vmul.f32 %v1226, 0.044715
    %v1230 = vadd.f32 %v1213, %v1227
    %v1231 = vadd.f32 %v1215, %v1228
    %v1232 = vadd.f32 %v1218, %v1229
    %v1233 = vmul.f32 %v1230, 0.7978846
    %v1234 = vmul.f32 %v1231, 0.7978846
    %v1235 = vmul.f32 %v1232, 0.7978846
    %v1236 = vtanh.pop %v1233
    %v1237 = vtanh.pop %v1234
    %v1238 = vtanh.pop %v1235
    %v1239 = vadd.f32 %v1236, 1.0
    %v1240 = vadd.f32 %v1237, 1.0
    %v1241 = vadd.f32 %v1238, 1.0
    %v1242 = vmul.f32 %v1239, 0.5
    %v1243 = vmul.f32 %v1240, 0.5
    %v1244 = vmul.f32 %v1241, 0.5
    %v1245 = vmul.f32 %v1213, %v1242
    %v1246 = vmul.f32 %v1215, %v1243
    %v1247 = vmul.f32 %v1218, %v1244
    %v1248 = vpack.c.bf16 %v1246, %v1245
    %v1249 = vpack.c.bf16 %v1247, %v1247
    %v1250 = vld [vmem:[%s11] sm:$0xf]
    %v1251 = vld [vmem:[%s11 + $0x4] sm:$0xf]
    %v1252 = vld [vmem:[%s11 + $0x8] sm:$0xf]
    %v1253 = vld [vmem:[%s11 + $0xc] sm:$0xf]
    %v1254 = vld [vmem:[%s11 + $0x10] sm:$0xf]
    %v1255 = vld [vmem:[%s11 + $0x14] sm:$0xf]
    %v1256 = vld [vmem:[%s11 + $0x18] sm:$0xf]
    %v1257 = vld [vmem:[%s11 + $0x1c] sm:$0xf]
    %v1258 = vld [vmem:[%s12] sm:$0x1]
    %v1260 = vperm.slane %v1258, 0
    %v1270 = vunpack.c.l.b16 %v1250
    %v1271 = vunpack.c.l.b16 %v1251
    %v1272 = vunpack.c.l.b16 %v1252
    %v1273 = vunpack.c.l.b16 %v1253
    %v1274 = vunpack.c.l.b16 %v1254
    %v1275 = vunpack.c.l.b16 %v1255
    %v1276 = vunpack.c.l.b16 %v1256
    %v1277 = vunpack.c.l.b16 %v1257
    %v1278 = vpack.c.b16 %v1271, %v1270
    %v1279 = vpack.c.b16 %v1273, %v1272
    %v1280 = vpack.c.b16 %v1275, %v1274
    %v1281 = vpack.c.b16 %v1277, %v1276
    %vm1286 = vcmask 523264
    %v1288 = vsel %vm1286, %v1248, 0
    %v1291 = vsel %vm1286, %v1249, 0
    %1293 = vmatpush.bf16.msra.mxu0 0
    %1294 = vmatpush.bf16.msra.mxu0 0
    %1295 = vmatpush.bf16.msra.mxu0 0
    %1296 = vmatpush.bf16.msra.mxu0 0
    %1297 = vmatpush.bf16.msra.mxu0 %v1281
    %1298 = vmatpush.bf16.msra.mxu0 %v1280
    %1299 = vmatpush.bf16.msra.mxu0 %v1279
    %1300 = vmatpush.bf16.msra.mxu0 %v1278
    %1301 = vmatmul.bf16.gmra.mxu0 %v1288
    %v1302 = vpop.f32.mrf.mxu0
    %v1303 = vadd.f32 %v1260, %v1302
    %v1304 = vpop.f32.mrf.mxu0
    %v1305 = vadd.f32 %v1260, %v1304
    %1306 = vmatmul.bf16.gmra.mxu0 %v1291
    %v1307 = vpop.f32.mrf.mxu0
    %v1308 = vadd.f32 %v1260, %v1307
    %v1309 = vpop.f32.mrf.mxu0
    %1310 = vdwg.mxu0
    %v1311 = vld [vmem:[%s13] sm:$0x3]
    %v1312 = vadd.f32 %v1303, %v1172
    %v1313 = vadd.f32 %v1305, %v1173
    %v1314 = vadd.f32 %v1308, %v1174
    %v1315 = vsel %vm71, %v1312, 0.0
    %1316 = vadd.xlane.f32.xlu0 %v1315
    %v1317 = vpop.xlane.xlu0 %1316
    %v1318 = vsel %vm71, %v1313, 0.0
    %1319 = vadd.xlane.f32.xlu0 %v1318
    %v1320 = vpop.xlane.xlu0 %1319
    %v1321 = vsel %vm71, %v1314, 0.0
    %1322 = vadd.xlane.f32.xlu0 %v1321
    %v1323 = vpop.xlane.xlu0 %1322
    %v1324 = vmul.f32 %v1317, %v87
    %v1325 = vmul.f32 %v1320, %v87
    %v1326 = vmul.f32 %v1323, %v87
    %v1327 = vsub.f32 %v1312, %v1324
    %v1328 = vsub.f32 %v1313, %v1325
    %v1329 = vsub.f32 %v1314, %v1326
    %v1330 = vmul.f32 %v1327, %v1327
    %v1331 = vmul.f32 %v1328, %v1328
    %v1332 = vmul.f32 %v1329, %v1329
    %v1333 = vsel %vm71, %v1330, 0.0
    %1334 = vadd.xlane.f32.xlu0 %v1333
    %v1335 = vpop.xlane.xlu0 %1334
    %v1336 = vsel %vm71, %v1331, 0.0
    %1337 = vadd.xlane.f32.xlu0 %v1336
    %v1338 = vpop.xlane.xlu0 %1337
    %v1339 = vsel %vm71, %v1332, 0.0
    %1340 = vadd.xlane.f32.xlu0 %v1339
    %v1341 = vpop.xlane.xlu0 %1340
    %v1342 = vmul.f32 %v1335, %v87
    %v1343 = vmul.f32 %v1338, %v87
    %v1344 = vmul.f32 %v1341, %v87
    %v1345 = vadd.f32 %v1342, 1e-12
    %v1346 = vadd.f32 %v1343, 1e-12
    %v1347 = vadd.f32 %v1344, 1e-12
    %v1348 = vrsqrt.pop %v1345
    %v1349 = vmul.f32 %v1348, %v1345
    %v1350 = vmul.f32 %v1349, %v1348
    %v1351 = vmul.f32 0.5, %v1350
    %v1352 = vsub.f32 1.5, %v1351
    %v1353 = vmul.f32 %v1348, %v1352
    %vm1354 = vweird.f32 %v1345
    %vm1355 = vweird.f32 %v1348
    %vm1356 = vmor %vm1354, %vm1355
    %v1357 = vsel %vm1356, %v1348, %v1353
    %v1358 = vrsqrt.pop %v1346
    %v1359 = vmul.f32 %v1358, %v1346
    %v1360 = vmul.f32 %v1359, %v1358
    %v1361 = vmul.f32 0.5, %v1360
    %v1362 = vsub.f32 1.5, %v1361
    %v1363 = vmul.f32 %v1358, %v1362
    %vm1364 = vweird.f32 %v1346
    %vm1365 = vweird.f32 %v1358
    %vm1366 = vmor %vm1364, %vm1365
    %v1367 = vsel %vm1366, %v1358, %v1363
    %v1368 = vrsqrt.pop %v1347
    %v1369 = vmul.f32 %v1368, %v1347
    %v1370 = vmul.f32 %v1369, %v1368
    %v1371 = vmul.f32 0.5, %v1370
    %v1372 = vsub.f32 1.5, %v1371
    %v1373 = vmul.f32 %v1368, %v1372
    %vm1374 = vweird.f32 %v1347
    %vm1375 = vweird.f32 %v1368
    %vm1376 = vmor %vm1374, %vm1375
    %v1377 = vsel %vm1376, %v1368, %v1373
    %v1378 = vmul.f32 %v1327, %v1357
    %v1379 = vmul.f32 %v1328, %v1367
    %v1380 = vmul.f32 %v1329, %v1377
    %v1381 = vperm.slane %v1311, 0
    %v1382 = vmul.f32 %v1378, %v1381
    %v1383 = vmul.f32 %v1379, %v1381
    %v1384 = vmul.f32 %v1380, %v1381
    %v1385 = vperm.slane %v1311, 1
    %v1386 = vadd.f32 %v1382, %v1385
    %v1387 = vadd.f32 %v1383, %v1385
    %v1388 = vadd.f32 %v1384, %v1385
    %v1389 = vpack.c.bf16 %v1387, %v1386
    %v1390 = vpack.c.bf16 %v1388, %v1388
    %s1391 = scalar_lea.vmem %s4, 16
    %v1392 = vld [vmem:[%s1391] sm:$0xf]
    %v1393 = vld [vmem:[%s1391 + $0x4] sm:$0xf]
    %v1394 = vld [vmem:[%s1391 + $0x8] sm:$0xf]
    %v1395 = vld [vmem:[%s1391 + $0xc] sm:$0xf]
    %s1396 = scalar_lea.vmem %s5, 1
    %v1397 = vld [vmem:[%s1396] sm:$0x1]
    %v1399 = vperm.slane %v1397, 0
    %v1405 = vunpack.c.l.b16 %v1392
    %v1406 = vunpack.c.l.b16 %v1393
    %v1407 = vunpack.c.l.b16 %v1394
    %v1408 = vunpack.c.l.b16 %v1395
    %v1409 = vpack.c.b16 %v1406, %v1405
    %v1410 = vpack.c.b16 %v1408, %v1407
    %v1414 = vsel %vm71, %v1389, 0
    %v1417 = vsel %vm71, %v1390, 0
    %1419 = vmatpush.bf16.msra.mxu0 0
    %1420 = vmatpush.bf16.msra.mxu0 0
    %1421 = vmatpush.bf16.msra.mxu0 0
    %1422 = vmatpush.bf16.msra.mxu0 0
    %1423 = vmatpush.bf16.msra.mxu0 0
    %1424 = vmatpush.bf16.msra.mxu0 0
    %1425 = vmatpush.bf16.msra.mxu0 %v1410
    %1426 = vmatpush.bf16.msra.mxu0 %v1409
    %1427 = vmatmul.bf16.gmra.mxu0 %v1414
    %v1428 = vpop.f32.mrf.mxu0
    %v1429 = vadd.f32 %v1399, %v1428
    %v1430 = vpop.f32.mrf.mxu0
    %v1431 = vadd.f32 %v1399, %v1430
    %1432 = vmatmul.bf16.gmra.mxu0 %v1417
    %v1433 = vpop.f32.mrf.mxu0
    %v1434 = vadd.f32 %v1399, %v1433
    %v1435 = vpop.f32.mrf.mxu0
    %1436 = vdwg.mxu0
    %1438 = vrot.lane.b32.xlu0 %v1429, 96
    %v1439 = vpop.permute.xlu0 %1438
    %v1440 = vsel %vm202, %v1429, 0
    %v1442 = vsel %vm202, %v1439, 0
    %1444 = vmatpush.xpose.msra.mxu0 0.0
    %1445 = vmatpush.xpose.msra.mxu0 0.0
    %1446 = vmatpush.xpose.msra.mxu0 0.0
    %1447 = vmatpush.xpose.msra.mxu0 0.0
    %1448 = vmatpush.xpose.msra.mxu0 0.0
    %1449 = vmatpush.xpose.msra.mxu0 0.0
    %1450 = vmatpush.xpose.msra.mxu0 0.0
    %1451 = vmatpush.xpose.msra.mxu0 0.0
    %1452 = vmatpush.xpose.msra.mxu0 0.0
    %1453 = vmatpush.xpose.msra.mxu0 0.0
    %1454 = vmatpush.xpose.msra.mxu0 0.0
    %1455 = vmatpush.xpose.msra.mxu0 0.0
    %1456 = vmatpush.xpose.msra.mxu0 0.0
    %1457 = vmatpush.xpose.msra.mxu0 0.0
    %1458 = vmatpush.xpose.msra.mxu0 0.0
    %1459 = vmatpush.xpose.msra.mxu0 %v1442
    %1460 = vmatmul.f32.gmra.mxu0 %v1440
    %v1461 = vpop.f32.mrf.mxu0
    %v1462 = vadd.f32 0.0, %v1461
    %1463 = vdwg.mxu0
    %v1464 = vmul.f32 %v1462, 0.35355338
    %v1465 = vadd.f32 %v1464, %v228
    %v1466 = vsel %vm202, %v1465, -inf
    %1467 = vmax.xlane.f32.xlu0 %v1466
    %v1468 = vpop.xlane.xlu0 %1467
    %v1469 = vsub.f32 %v1465, %v1468
    %v1470 = vmul.f32 %v1469, 1.442695
    %v1471 = vpow.pop %v1470
    %v1472 = vsel %vm202, %v1471, 0.0
    %1473 = vadd.xlane.f32.xlu0 %v1472
    %v1474 = vpop.xlane.xlu0 %1473
    %v1475 = vrcp.pop %v1474
    %v1476 = vmul.f32 %v1471, %v1475
    %1477 = vrot.lane.b32.xlu0 %v1429, 64
    %v1478 = vpop.permute.xlu0 %1477
    %v1481 = vsel %vm202, %v1476, 0
    %1483 = vmatpush.msra.mxu0 0.0
    %1484 = vmatpush.msra.mxu0 0.0
    %1485 = vmatpush.msra.mxu0 0.0
    %1486 = vmatpush.msra.mxu0 0.0
    %1487 = vmatpush.msra.mxu0 0.0
    %1488 = vmatpush.msra.mxu0 0.0
    %1489 = vmatpush.msra.mxu0 0.0
    %1490 = vmatpush.msra.mxu0 0.0
    %1491 = vmatpush.msra.mxu0 0.0
    %1492 = vmatpush.msra.mxu0 0.0
    %1493 = vmatpush.msra.mxu0 0.0
    %1494 = vmatpush.msra.mxu0 0.0
    %1495 = vmatpush.msra.mxu0 0.0
    %1496 = vmatpush.msra.mxu0 0.0
    %1497 = vmatpush.msra.mxu0 0.0
    %1498 = vmatpush.msra.mxu0 %v1478
    %1499 = vmatmul.f32.gmra.mxu0 %v1481
    %v1500 = vpop.f32.mrf.mxu0
    %v1501 = vadd.f32 0.0, %v1500
    %1502 = vdwg.mxu0
    %1503 = vrot.lane.b32.xlu0 %v1429, 120
    %v1504 = vpop.permute.xlu0 %1503
    %1505 = vrot.lane.b32.xlu0 %v1429, 88
    %v1506 = vpop.permute.xlu0 %1505
    %v1507 = vsel %vm202, %v1504, 0
    %v1509 = vsel %vm202, %v1506, 0
    %1511 = vmatpush.xpose.msra.mxu0 0.0
    %1512 = vmatpush.xpose.msra.mxu0 0.0
    %1513 = vmatpush.xpose.msra.mxu0 0.0
    %1514 = vmatpush.xpose.msra.mxu0 0.0
    %1515 = vmatpush.xpose.msra.mxu0 0.0
    %1516 = vmatpush.xpose.msra.mxu0 0.0
    %1517 = vmatpush.xpose.msra.mxu0 0.0
    %1518 = vmatpush.xpose.msra.mxu0 0.0
    %1519 = vmatpush.xpose.msra.mxu0 0.0
    %1520 = vmatpush.xpose.msra.mxu0 0.0
    %1521 = vmatpush.xpose.msra.mxu0 0.0
    %1522 = vmatpush.xpose.msra.mxu0 0.0
    %1523 = vmatpush.xpose.msra.mxu0 0.0
    %1524 = vmatpush.xpose.msra.mxu0 0.0
    %1525 = vmatpush.xpose.msra.mxu0 0.0
    %1526 = vmatpush.xpose.msra.mxu0 %v1509
    %1527 = vmatmul.f32.gmra.mxu0 %v1507
    %v1528 = vpop.f32.mrf.mxu0
    %v1529 = vadd.f32 0.0, %v1528
    %1530 = vdwg.mxu0
    %v1531 = vmul.f32 %v1529, 0.35355338
    %v1532 = vadd.f32 %v1531, %v228
    %v1533 = vsel %vm202, %v1532, -inf
    %1534 = vmax.xlane.f32.xlu0 %v1533
    %v1535 = vpop.xlane.xlu0 %1534
    %v1536 = vsub.f32 %v1532, %v1535
    %v1537 = vmul.f32 %v1536, 1.442695
    %v1538 = vpow.pop %v1537
    %v1539 = vsel %vm202, %v1538, 0.0
    %1540 = vadd.xlane.f32.xlu0 %v1539
    %v1541 = vpop.xlane.xlu0 %1540
    %v1542 = vrcp.pop %v1541
    %v1543 = vmul.f32 %v1538, %v1542
    %1544 = vrot.lane.b32.xlu0 %v1429, 56
    %v1545 = vpop.permute.xlu0 %1544
    %v1548 = vsel %vm202, %v1543, 0
    %1550 = vmatpush.msra.mxu0 0.0
    %1551 = vmatpush.msra.mxu0 0.0
    %1552 = vmatpush.msra.mxu0 0.0
    %1553 = vmatpush.msra.mxu0 0.0
    %1554 = vmatpush.msra.mxu0 0.0
    %1555 = vmatpush.msra.mxu0 0.0
    %1556 = vmatpush.msra.mxu0 0.0
    %1557 = vmatpush.msra.mxu0 0.0
    %1558 = vmatpush.msra.mxu0 0.0
    %1559 = vmatpush.msra.mxu0 0.0
    %1560 = vmatpush.msra.mxu0 0.0
    %1561 = vmatpush.msra.mxu0 0.0
    %1562 = vmatpush.msra.mxu0 0.0
    %1563 = vmatpush.msra.mxu0 0.0
    %1564 = vmatpush.msra.mxu0 0.0
    %1565 = vmatpush.msra.mxu0 %v1545
    %1566 = vmatmul.f32.gmra.mxu0 %v1548
    %v1567 = vpop.f32.mrf.mxu0
    %v1568 = vadd.f32 0.0, %v1567
    %1569 = vdwg.mxu0
    %1570 = vrot.lane.b32.xlu0 %v1429, 112
    %v1571 = vpop.permute.xlu0 %1570
    %1572 = vrot.lane.b32.xlu0 %v1429, 80
    %v1573 = vpop.permute.xlu0 %1572
    %v1574 = vsel %vm202, %v1571, 0
    %v1576 = vsel %vm202, %v1573, 0
    %1578 = vmatpush.xpose.msra.mxu0 0.0
    %1579 = vmatpush.xpose.msra.mxu0 0.0
    %1580 = vmatpush.xpose.msra.mxu0 0.0
    %1581 = vmatpush.xpose.msra.mxu0 0.0
    %1582 = vmatpush.xpose.msra.mxu0 0.0
    %1583 = vmatpush.xpose.msra.mxu0 0.0
    %1584 = vmatpush.xpose.msra.mxu0 0.0
    %1585 = vmatpush.xpose.msra.mxu0 0.0
    %1586 = vmatpush.xpose.msra.mxu0 0.0
    %1587 = vmatpush.xpose.msra.mxu0 0.0
    %1588 = vmatpush.xpose.msra.mxu0 0.0
    %1589 = vmatpush.xpose.msra.mxu0 0.0
    %1590 = vmatpush.xpose.msra.mxu0 0.0
    %1591 = vmatpush.xpose.msra.mxu0 0.0
    %1592 = vmatpush.xpose.msra.mxu0 0.0
    %1593 = vmatpush.xpose.msra.mxu0 %v1576
    %1594 = vmatmul.f32.gmra.mxu0 %v1574
    %v1595 = vpop.f32.mrf.mxu0
    %v1596 = vadd.f32 0.0, %v1595
    %1597 = vdwg.mxu0
    %v1598 = vmul.f32 %v1596, 0.35355338
    %v1599 = vadd.f32 %v1598, %v228
    %v1600 = vsel %vm202, %v1599, -inf
    %1601 = vmax.xlane.f32.xlu0 %v1600
    %v1602 = vpop.xlane.xlu0 %1601
    %v1603 = vsub.f32 %v1599, %v1602
    %v1604 = vmul.f32 %v1603, 1.442695
    %v1605 = vpow.pop %v1604
    %v1606 = vsel %vm202, %v1605, 0.0
    %1607 = vadd.xlane.f32.xlu0 %v1606
    %v1608 = vpop.xlane.xlu0 %1607
    %v1609 = vrcp.pop %v1608
    %v1610 = vmul.f32 %v1605, %v1609
    %1611 = vrot.lane.b32.xlu0 %v1429, 48
    %v1612 = vpop.permute.xlu0 %1611
    %v1615 = vsel %vm202, %v1610, 0
    %1617 = vmatpush.msra.mxu0 0.0
    %1618 = vmatpush.msra.mxu0 0.0
    %1619 = vmatpush.msra.mxu0 0.0
    %1620 = vmatpush.msra.mxu0 0.0
    %1621 = vmatpush.msra.mxu0 0.0
    %1622 = vmatpush.msra.mxu0 0.0
    %1623 = vmatpush.msra.mxu0 0.0
    %1624 = vmatpush.msra.mxu0 0.0
    %1625 = vmatpush.msra.mxu0 0.0
    %1626 = vmatpush.msra.mxu0 0.0
    %1627 = vmatpush.msra.mxu0 0.0
    %1628 = vmatpush.msra.mxu0 0.0
    %1629 = vmatpush.msra.mxu0 0.0
    %1630 = vmatpush.msra.mxu0 0.0
    %1631 = vmatpush.msra.mxu0 0.0
    %1632 = vmatpush.msra.mxu0 %v1612
    %1633 = vmatmul.f32.gmra.mxu0 %v1615
    %v1634 = vpop.f32.mrf.mxu0
    %v1635 = vadd.f32 0.0, %v1634
    %1636 = vdwg.mxu0
    %1637 = vrot.lane.b32.xlu0 %v1429, 104
    %v1638 = vpop.permute.xlu0 %1637
    %1639 = vrot.lane.b32.xlu0 %v1429, 72
    %v1640 = vpop.permute.xlu0 %1639
    %v1641 = vsel %vm202, %v1638, 0
    %v1643 = vsel %vm202, %v1640, 0
    %1645 = vmatpush.xpose.msra.mxu0 0.0
    %1646 = vmatpush.xpose.msra.mxu0 0.0
    %1647 = vmatpush.xpose.msra.mxu0 0.0
    %1648 = vmatpush.xpose.msra.mxu0 0.0
    %1649 = vmatpush.xpose.msra.mxu0 0.0
    %1650 = vmatpush.xpose.msra.mxu0 0.0
    %1651 = vmatpush.xpose.msra.mxu0 0.0
    %1652 = vmatpush.xpose.msra.mxu0 0.0
    %1653 = vmatpush.xpose.msra.mxu0 0.0
    %1654 = vmatpush.xpose.msra.mxu0 0.0
    %1655 = vmatpush.xpose.msra.mxu0 0.0
    %1656 = vmatpush.xpose.msra.mxu0 0.0
    %1657 = vmatpush.xpose.msra.mxu0 0.0
    %1658 = vmatpush.xpose.msra.mxu0 0.0
    %1659 = vmatpush.xpose.msra.mxu0 0.0
    %1660 = vmatpush.xpose.msra.mxu0 %v1643
    %1661 = vmatmul.f32.gmra.mxu0 %v1641
    %v1662 = vpop.f32.mrf.mxu0
    %v1663 = vadd.f32 0.0, %v1662
    %1664 = vdwg.mxu0
    %v1665 = vmul.f32 %v1663, 0.35355338
    %v1666 = vadd.f32 %v1665, %v228
    %v1667 = vsel %vm202, %v1666, -inf
    %1668 = vmax.xlane.f32.xlu0 %v1667
    %v1669 = vpop.xlane.xlu0 %1668
    %v1670 = vsub.f32 %v1666, %v1669
    %v1671 = vmul.f32 %v1670, 1.442695
    %v1672 = vpow.pop %v1671
    %v1673 = vsel %vm202, %v1672, 0.0
    %1674 = vadd.xlane.f32.xlu0 %v1673
    %v1675 = vpop.xlane.xlu0 %1674
    %v1676 = vrcp.pop %v1675
    %v1677 = vmul.f32 %v1672, %v1676
    %1678 = vrot.lane.b32.xlu0 %v1429, 40
    %v1679 = vpop.permute.xlu0 %1678
    %v1682 = vsel %vm202, %v1677, 0
    %1684 = vmatpush.msra.mxu0 0.0
    %1685 = vmatpush.msra.mxu0 0.0
    %1686 = vmatpush.msra.mxu0 0.0
    %1687 = vmatpush.msra.mxu0 0.0
    %1688 = vmatpush.msra.mxu0 0.0
    %1689 = vmatpush.msra.mxu0 0.0
    %1690 = vmatpush.msra.mxu0 0.0
    %1691 = vmatpush.msra.mxu0 0.0
    %1692 = vmatpush.msra.mxu0 0.0
    %1693 = vmatpush.msra.mxu0 0.0
    %1694 = vmatpush.msra.mxu0 0.0
    %1695 = vmatpush.msra.mxu0 0.0
    %1696 = vmatpush.msra.mxu0 0.0
    %1697 = vmatpush.msra.mxu0 0.0
    %1698 = vmatpush.msra.mxu0 0.0
    %1699 = vmatpush.msra.mxu0 %v1679
    %1700 = vmatmul.f32.gmra.mxu0 %v1682
    %v1701 = vpop.f32.mrf.mxu0
    %v1702 = vadd.f32 0.0, %v1701
    %1703 = vdwg.mxu0
    %1705 = vrot.lane.b32.xlu0 %v1568, 8
    %v1706 = vpop.permute.xlu0 %1705
    %1709 = vrot.lane.b32.xlu0 %v1635, 16
    %v1710 = vpop.permute.xlu0 %1709
    %1713 = vrot.lane.b32.xlu0 %v1702, 24
    %v1714 = vpop.permute.xlu0 %1713
    %v1716 = vsel %vm202, %v1501, %v1706
    %v1717 = vsel %vm481, %v1716, %v1710
    %v1718 = vsel %vm483, %v1717, %v1714
    %1720 = vrot.lane.b32.xlu0 %v1431, 96
    %v1721 = vpop.permute.xlu0 %1720
    %v1722 = vsel %vm202, %v1431, 0
    %v1724 = vsel %vm202, %v1721, 0
    %1726 = vmatpush.xpose.msra.mxu0 0.0
    %1727 = vmatpush.xpose.msra.mxu0 0.0
    %1728 = vmatpush.xpose.msra.mxu0 0.0
    %1729 = vmatpush.xpose.msra.mxu0 0.0
    %1730 = vmatpush.xpose.msra.mxu0 0.0
    %1731 = vmatpush.xpose.msra.mxu0 0.0
    %1732 = vmatpush.xpose.msra.mxu0 0.0
    %1733 = vmatpush.xpose.msra.mxu0 0.0
    %1734 = vmatpush.xpose.msra.mxu0 0.0
    %1735 = vmatpush.xpose.msra.mxu0 0.0
    %1736 = vmatpush.xpose.msra.mxu0 0.0
    %1737 = vmatpush.xpose.msra.mxu0 0.0
    %1738 = vmatpush.xpose.msra.mxu0 0.0
    %1739 = vmatpush.xpose.msra.mxu0 0.0
    %1740 = vmatpush.xpose.msra.mxu0 0.0
    %1741 = vmatpush.xpose.msra.mxu0 %v1724
    %1742 = vmatmul.f32.gmra.mxu0 %v1722
    %v1743 = vpop.f32.mrf.mxu0
    %v1744 = vadd.f32 0.0, %v1743
    %1745 = vdwg.mxu0
    %v1746 = vmul.f32 %v1744, 0.35355338
    %v1747 = vadd.f32 %v1746, %v513
    %v1748 = vsel %vm202, %v1747, -inf
    %1749 = vmax.xlane.f32.xlu0 %v1748
    %v1750 = vpop.xlane.xlu0 %1749
    %v1751 = vsub.f32 %v1747, %v1750
    %v1752 = vmul.f32 %v1751, 1.442695
    %v1753 = vpow.pop %v1752
    %v1754 = vsel %vm202, %v1753, 0.0
    %1755 = vadd.xlane.f32.xlu0 %v1754
    %v1756 = vpop.xlane.xlu0 %1755
    %v1757 = vrcp.pop %v1756
    %v1758 = vmul.f32 %v1753, %v1757
    %1759 = vrot.lane.b32.xlu0 %v1431, 64
    %v1760 = vpop.permute.xlu0 %1759
    %v1763 = vsel %vm202, %v1758, 0
    %1765 = vmatpush.msra.mxu0 0.0
    %1766 = vmatpush.msra.mxu0 0.0
    %1767 = vmatpush.msra.mxu0 0.0
    %1768 = vmatpush.msra.mxu0 0.0
    %1769 = vmatpush.msra.mxu0 0.0
    %1770 = vmatpush.msra.mxu0 0.0
    %1771 = vmatpush.msra.mxu0 0.0
    %1772 = vmatpush.msra.mxu0 0.0
    %1773 = vmatpush.msra.mxu0 0.0
    %1774 = vmatpush.msra.mxu0 0.0
    %1775 = vmatpush.msra.mxu0 0.0
    %1776 = vmatpush.msra.mxu0 0.0
    %1777 = vmatpush.msra.mxu0 0.0
    %1778 = vmatpush.msra.mxu0 0.0
    %1779 = vmatpush.msra.mxu0 0.0
    %1780 = vmatpush.msra.mxu0 %v1760
    %1781 = vmatmul.f32.gmra.mxu0 %v1763
    %v1782 = vpop.f32.mrf.mxu0
    %v1783 = vadd.f32 0.0, %v1782
    %1784 = vdwg.mxu0
    %1785 = vrot.lane.b32.xlu0 %v1431, 120
    %v1786 = vpop.permute.xlu0 %1785
    %1787 = vrot.lane.b32.xlu0 %v1431, 88
    %v1788 = vpop.permute.xlu0 %1787
    %v1789 = vsel %vm202, %v1786, 0
    %v1791 = vsel %vm202, %v1788, 0
    %1793 = vmatpush.xpose.msra.mxu0 0.0
    %1794 = vmatpush.xpose.msra.mxu0 0.0
    %1795 = vmatpush.xpose.msra.mxu0 0.0
    %1796 = vmatpush.xpose.msra.mxu0 0.0
    %1797 = vmatpush.xpose.msra.mxu0 0.0
    %1798 = vmatpush.xpose.msra.mxu0 0.0
    %1799 = vmatpush.xpose.msra.mxu0 0.0
    %1800 = vmatpush.xpose.msra.mxu0 0.0
    %1801 = vmatpush.xpose.msra.mxu0 0.0
    %1802 = vmatpush.xpose.msra.mxu0 0.0
    %1803 = vmatpush.xpose.msra.mxu0 0.0
    %1804 = vmatpush.xpose.msra.mxu0 0.0
    %1805 = vmatpush.xpose.msra.mxu0 0.0
    %1806 = vmatpush.xpose.msra.mxu0 0.0
    %1807 = vmatpush.xpose.msra.mxu0 0.0
    %1808 = vmatpush.xpose.msra.mxu0 %v1791
    %1809 = vmatmul.f32.gmra.mxu0 %v1789
    %v1810 = vpop.f32.mrf.mxu0
    %v1811 = vadd.f32 0.0, %v1810
    %1812 = vdwg.mxu0
    %v1813 = vmul.f32 %v1811, 0.35355338
    %v1814 = vadd.f32 %v1813, %v513
    %v1815 = vsel %vm202, %v1814, -inf
    %1816 = vmax.xlane.f32.xlu0 %v1815
    %v1817 = vpop.xlane.xlu0 %1816
    %v1818 = vsub.f32 %v1814, %v1817
    %v1819 = vmul.f32 %v1818, 1.442695
    %v1820 = vpow.pop %v1819
    %v1821 = vsel %vm202, %v1820, 0.0
    %1822 = vadd.xlane.f32.xlu0 %v1821
    %v1823 = vpop.xlane.xlu0 %1822
    %v1824 = vrcp.pop %v1823
    %v1825 = vmul.f32 %v1820, %v1824
    %1826 = vrot.lane.b32.xlu0 %v1431, 56
    %v1827 = vpop.permute.xlu0 %1826
    %v1830 = vsel %vm202, %v1825, 0
    %1832 = vmatpush.msra.mxu0 0.0
    %1833 = vmatpush.msra.mxu0 0.0
    %1834 = vmatpush.msra.mxu0 0.0
    %1835 = vmatpush.msra.mxu0 0.0
    %1836 = vmatpush.msra.mxu0 0.0
    %1837 = vmatpush.msra.mxu0 0.0
    %1838 = vmatpush.msra.mxu0 0.0
    %1839 = vmatpush.msra.mxu0 0.0
    %1840 = vmatpush.msra.mxu0 0.0
    %1841 = vmatpush.msra.mxu0 0.0
    %1842 = vmatpush.msra.mxu0 0.0
    %1843 = vmatpush.msra.mxu0 0.0
    %1844 = vmatpush.msra.mxu0 0.0
    %1845 = vmatpush.msra.mxu0 0.0
    %1846 = vmatpush.msra.mxu0 0.0
    %1847 = vmatpush.msra.mxu0 %v1827
    %1848 = vmatmul.f32.gmra.mxu0 %v1830
    %v1849 = vpop.f32.mrf.mxu0
    %v1850 = vadd.f32 0.0, %v1849
    %1851 = vdwg.mxu0
    %1852 = vrot.lane.b32.xlu0 %v1431, 112
    %v1853 = vpop.permute.xlu0 %1852
    %1854 = vrot.lane.b32.xlu0 %v1431, 80
    %v1855 = vpop.permute.xlu0 %1854
    %v1856 = vsel %vm202, %v1853, 0
    %v1858 = vsel %vm202, %v1855, 0
    %1860 = vmatpush.xpose.msra.mxu0 0.0
    %1861 = vmatpush.xpose.msra.mxu0 0.0
    %1862 = vmatpush.xpose.msra.mxu0 0.0
    %1863 = vmatpush.xpose.msra.mxu0 0.0
    %1864 = vmatpush.xpose.msra.mxu0 0.0
    %1865 = vmatpush.xpose.msra.mxu0 0.0
    %1866 = vmatpush.xpose.msra.mxu0 0.0
    %1867 = vmatpush.xpose.msra.mxu0 0.0
    %1868 = vmatpush.xpose.msra.mxu0 0.0
    %1869 = vmatpush.xpose.msra.mxu0 0.0
    %1870 = vmatpush.xpose.msra.mxu0 0.0
    %1871 = vmatpush.xpose.msra.mxu0 0.0
    %1872 = vmatpush.xpose.msra.mxu0 0.0
    %1873 = vmatpush.xpose.msra.mxu0 0.0
    %1874 = vmatpush.xpose.msra.mxu0 0.0
    %1875 = vmatpush.xpose.msra.mxu0 %v1858
    %1876 = vmatmul.f32.gmra.mxu0 %v1856
    %v1877 = vpop.f32.mrf.mxu0
    %v1878 = vadd.f32 0.0, %v1877
    %1879 = vdwg.mxu0
    %v1880 = vmul.f32 %v1878, 0.35355338
    %v1881 = vadd.f32 %v1880, %v513
    %v1882 = vsel %vm202, %v1881, -inf
    %1883 = vmax.xlane.f32.xlu0 %v1882
    %v1884 = vpop.xlane.xlu0 %1883
    %v1885 = vsub.f32 %v1881, %v1884
    %v1886 = vmul.f32 %v1885, 1.442695
    %v1887 = vpow.pop %v1886
    %v1888 = vsel %vm202, %v1887, 0.0
    %1889 = vadd.xlane.f32.xlu0 %v1888
    %v1890 = vpop.xlane.xlu0 %1889
    %v1891 = vrcp.pop %v1890
    %v1892 = vmul.f32 %v1887, %v1891
    %1893 = vrot.lane.b32.xlu0 %v1431, 48
    %v1894 = vpop.permute.xlu0 %1893
    %v1897 = vsel %vm202, %v1892, 0
    %1899 = vmatpush.msra.mxu0 0.0
    %1900 = vmatpush.msra.mxu0 0.0
    %1901 = vmatpush.msra.mxu0 0.0
    %1902 = vmatpush.msra.mxu0 0.0
    %1903 = vmatpush.msra.mxu0 0.0
    %1904 = vmatpush.msra.mxu0 0.0
    %1905 = vmatpush.msra.mxu0 0.0
    %1906 = vmatpush.msra.mxu0 0.0
    %1907 = vmatpush.msra.mxu0 0.0
    %1908 = vmatpush.msra.mxu0 0.0
    %1909 = vmatpush.msra.mxu0 0.0
    %1910 = vmatpush.msra.mxu0 0.0
    %1911 = vmatpush.msra.mxu0 0.0
    %1912 = vmatpush.msra.mxu0 0.0
    %1913 = vmatpush.msra.mxu0 0.0
    %1914 = vmatpush.msra.mxu0 %v1894
    %1915 = vmatmul.f32.gmra.mxu0 %v1897
    %v1916 = vpop.f32.mrf.mxu0
    %v1917 = vadd.f32 0.0, %v1916
    %1918 = vdwg.mxu0
    %1919 = vrot.lane.b32.xlu0 %v1431, 104
    %v1920 = vpop.permute.xlu0 %1919
    %1921 = vrot.lane.b32.xlu0 %v1431, 72
    %v1922 = vpop.permute.xlu0 %1921
    %v1923 = vsel %vm202, %v1920, 0
    %v1925 = vsel %vm202, %v1922, 0
    %1927 = vmatpush.xpose.msra.mxu0 0.0
    %1928 = vmatpush.xpose.msra.mxu0 0.0
    %1929 = vmatpush.xpose.msra.mxu0 0.0
    %1930 = vmatpush.xpose.msra.mxu0 0.0
    %1931 = vmatpush.xpose.msra.mxu0 0.0
    %1932 = vmatpush.xpose.msra.mxu0 0.0
    %1933 = vmatpush.xpose.msra.mxu0 0.0
    %1934 = vmatpush.xpose.msra.mxu0 0.0
    %1935 = vmatpush.xpose.msra.mxu0 0.0
    %1936 = vmatpush.xpose.msra.mxu0 0.0
    %1937 = vmatpush.xpose.msra.mxu0 0.0
    %1938 = vmatpush.xpose.msra.mxu0 0.0
    %1939 = vmatpush.xpose.msra.mxu0 0.0
    %1940 = vmatpush.xpose.msra.mxu0 0.0
    %1941 = vmatpush.xpose.msra.mxu0 0.0
    %1942 = vmatpush.xpose.msra.mxu0 %v1925
    %1943 = vmatmul.f32.gmra.mxu0 %v1923
    %v1944 = vpop.f32.mrf.mxu0
    %v1945 = vadd.f32 0.0, %v1944
    %1946 = vdwg.mxu0
    %v1947 = vmul.f32 %v1945, 0.35355338
    %v1948 = vadd.f32 %v1947, %v513
    %v1949 = vsel %vm202, %v1948, -inf
    %1950 = vmax.xlane.f32.xlu0 %v1949
    %v1951 = vpop.xlane.xlu0 %1950
    %v1952 = vsub.f32 %v1948, %v1951
    %v1953 = vmul.f32 %v1952, 1.442695
    %v1954 = vpow.pop %v1953
    %v1955 = vsel %vm202, %v1954, 0.0
    %1956 = vadd.xlane.f32.xlu0 %v1955
    %v1957 = vpop.xlane.xlu0 %1956
    %v1958 = vrcp.pop %v1957
    %v1959 = vmul.f32 %v1954, %v1958
    %1960 = vrot.lane.b32.xlu0 %v1431, 40
    %v1961 = vpop.permute.xlu0 %1960
    %v1964 = vsel %vm202, %v1959, 0
    %1966 = vmatpush.msra.mxu0 0.0
    %1967 = vmatpush.msra.mxu0 0.0
    %1968 = vmatpush.msra.mxu0 0.0
    %1969 = vmatpush.msra.mxu0 0.0
    %1970 = vmatpush.msra.mxu0 0.0
    %1971 = vmatpush.msra.mxu0 0.0
    %1972 = vmatpush.msra.mxu0 0.0
    %1973 = vmatpush.msra.mxu0 0.0
    %1974 = vmatpush.msra.mxu0 0.0
    %1975 = vmatpush.msra.mxu0 0.0
    %1976 = vmatpush.msra.mxu0 0.0
    %1977 = vmatpush.msra.mxu0 0.0
    %1978 = vmatpush.msra.mxu0 0.0
    %1979 = vmatpush.msra.mxu0 0.0
    %1980 = vmatpush.msra.mxu0 0.0
    %1981 = vmatpush.msra.mxu0 %v1961
    %1982 = vmatmul.f32.gmra.mxu0 %v1964
    %v1983 = vpop.f32.mrf.mxu0
    %v1984 = vadd.f32 0.0, %v1983
    %1985 = vdwg.mxu0
    %1987 = vrot.lane.b32.xlu0 %v1850, 8
    %v1988 = vpop.permute.xlu0 %1987
    %1991 = vrot.lane.b32.xlu0 %v1917, 16
    %v1992 = vpop.permute.xlu0 %1991
    %1995 = vrot.lane.b32.xlu0 %v1984, 24
    %v1996 = vpop.permute.xlu0 %1995
    %v1998 = vsel %vm202, %v1783, %v1988
    %v1999 = vsel %vm481, %v1998, %v1992
    %v2000 = vsel %vm483, %v1999, %v1996
    %2002 = vrot.lane.b32.xlu0 %v1434, 96
    %v2003 = vpop.permute.xlu0 %2002
    %v2004 = vsel %vm202, %v1434, 0
    %v2006 = vsel %vm202, %v2003, 0
    %2008 = vmatpush.xpose.msra.mxu0 0.0
    %2009 = vmatpush.xpose.msra.mxu0 0.0
    %2010 = vmatpush.xpose.msra.mxu0 0.0
    %2011 = vmatpush.xpose.msra.mxu0 0.0
    %2012 = vmatpush.xpose.msra.mxu0 0.0
    %2013 = vmatpush.xpose.msra.mxu0 0.0
    %2014 = vmatpush.xpose.msra.mxu0 0.0
    %2015 = vmatpush.xpose.msra.mxu0 0.0
    %2016 = vmatpush.xpose.msra.mxu0 0.0
    %2017 = vmatpush.xpose.msra.mxu0 0.0
    %2018 = vmatpush.xpose.msra.mxu0 0.0
    %2019 = vmatpush.xpose.msra.mxu0 0.0
    %2020 = vmatpush.xpose.msra.mxu0 0.0
    %2021 = vmatpush.xpose.msra.mxu0 0.0
    %2022 = vmatpush.xpose.msra.mxu0 0.0
    %2023 = vmatpush.xpose.msra.mxu0 %v2006
    %2024 = vmatmul.f32.gmra.mxu0 %v2004
    %v2025 = vpop.f32.mrf.mxu0
    %v2026 = vadd.f32 0.0, %v2025
    %2027 = vdwg.mxu0
    %v2028 = vmul.f32 %v2026, 0.35355338
    %v2029 = vadd.f32 %v2028, %v796
    %v2030 = vsel %vm202, %v2029, -inf
    %2031 = vmax.xlane.f32.xlu0 %v2030
    %v2032 = vpop.xlane.xlu0 %2031
    %v2033 = vsub.f32 %v2029, %v2032
    %v2034 = vmul.f32 %v2033, 1.442695
    %v2035 = vpow.pop %v2034
    %v2036 = vsel %vm202, %v2035, 0.0
    %2037 = vadd.xlane.f32.xlu0 %v2036
    %v2038 = vpop.xlane.xlu0 %2037
    %v2039 = vrcp.pop %v2038
    %v2040 = vmul.f32 %v2035, %v2039
    %2041 = vrot.lane.b32.xlu0 %v1434, 64
    %v2042 = vpop.permute.xlu0 %2041
    %v2045 = vsel %vm202, %v2040, 0
    %2047 = vmatpush.msra.mxu0 0.0
    %2048 = vmatpush.msra.mxu0 0.0
    %2049 = vmatpush.msra.mxu0 0.0
    %2050 = vmatpush.msra.mxu0 0.0
    %2051 = vmatpush.msra.mxu0 0.0
    %2052 = vmatpush.msra.mxu0 0.0
    %2053 = vmatpush.msra.mxu0 0.0
    %2054 = vmatpush.msra.mxu0 0.0
    %2055 = vmatpush.msra.mxu0 0.0
    %2056 = vmatpush.msra.mxu0 0.0
    %2057 = vmatpush.msra.mxu0 0.0
    %2058 = vmatpush.msra.mxu0 0.0
    %2059 = vmatpush.msra.mxu0 0.0
    %2060 = vmatpush.msra.mxu0 0.0
    %2061 = vmatpush.msra.mxu0 0.0
    %2062 = vmatpush.msra.mxu0 %v2042
    %2063 = vmatmul.f32.gmra.mxu0 %v2045
    %v2064 = vpop.f32.mrf.mxu0
    %v2065 = vadd.f32 0.0, %v2064
    %2066 = vdwg.mxu0
    %2067 = vrot.lane.b32.xlu0 %v1434, 120
    %v2068 = vpop.permute.xlu0 %2067
    %2069 = vrot.lane.b32.xlu0 %v1434, 88
    %v2070 = vpop.permute.xlu0 %2069
    %v2071 = vsel %vm202, %v2068, 0
    %v2073 = vsel %vm202, %v2070, 0
    %2075 = vmatpush.xpose.msra.mxu0 0.0
    %2076 = vmatpush.xpose.msra.mxu0 0.0
    %2077 = vmatpush.xpose.msra.mxu0 0.0
    %2078 = vmatpush.xpose.msra.mxu0 0.0
    %2079 = vmatpush.xpose.msra.mxu0 0.0
    %2080 = vmatpush.xpose.msra.mxu0 0.0
    %2081 = vmatpush.xpose.msra.mxu0 0.0
    %2082 = vmatpush.xpose.msra.mxu0 0.0
    %2083 = vmatpush.xpose.msra.mxu0 0.0
    %2084 = vmatpush.xpose.msra.mxu0 0.0
    %2085 = vmatpush.xpose.msra.mxu0 0.0
    %2086 = vmatpush.xpose.msra.mxu0 0.0
    %2087 = vmatpush.xpose.msra.mxu0 0.0
    %2088 = vmatpush.xpose.msra.mxu0 0.0
    %2089 = vmatpush.xpose.msra.mxu0 0.0
    %2090 = vmatpush.xpose.msra.mxu0 %v2073
    %2091 = vmatmul.f32.gmra.mxu0 %v2071
    %v2092 = vpop.f32.mrf.mxu0
    %v2093 = vadd.f32 0.0, %v2092
    %2094 = vdwg.mxu0
    %v2095 = vmul.f32 %v2093, 0.35355338
    %v2096 = vadd.f32 %v2095, %v796
    %v2097 = vsel %vm202, %v2096, -inf
    %2098 = vmax.xlane.f32.xlu0 %v2097
    %v2099 = vpop.xlane.xlu0 %2098
    %v2100 = vsub.f32 %v2096, %v2099
    %v2101 = vmul.f32 %v2100, 1.442695
    %v2102 = vpow.pop %v2101
    %v2103 = vsel %vm202, %v2102, 0.0
    %2104 = vadd.xlane.f32.xlu0 %v2103
    %v2105 = vpop.xlane.xlu0 %2104
    %v2106 = vrcp.pop %v2105
    %v2107 = vmul.f32 %v2102, %v2106
    %2108 = vrot.lane.b32.xlu0 %v1434, 56
    %v2109 = vpop.permute.xlu0 %2108
    %v2112 = vsel %vm202, %v2107, 0
    %2114 = vmatpush.msra.mxu0 0.0
    %2115 = vmatpush.msra.mxu0 0.0
    %2116 = vmatpush.msra.mxu0 0.0
    %2117 = vmatpush.msra.mxu0 0.0
    %2118 = vmatpush.msra.mxu0 0.0
    %2119 = vmatpush.msra.mxu0 0.0
    %2120 = vmatpush.msra.mxu0 0.0
    %2121 = vmatpush.msra.mxu0 0.0
    %2122 = vmatpush.msra.mxu0 0.0
    %2123 = vmatpush.msra.mxu0 0.0
    %2124 = vmatpush.msra.mxu0 0.0
    %2125 = vmatpush.msra.mxu0 0.0
    %2126 = vmatpush.msra.mxu0 0.0
    %2127 = vmatpush.msra.mxu0 0.0
    %2128 = vmatpush.msra.mxu0 0.0
    %2129 = vmatpush.msra.mxu0 %v2109
    %2130 = vmatmul.f32.gmra.mxu0 %v2112
    %v2131 = vpop.f32.mrf.mxu0
    %v2132 = vadd.f32 0.0, %v2131
    %2133 = vdwg.mxu0
    %2134 = vrot.lane.b32.xlu0 %v1434, 112
    %v2135 = vpop.permute.xlu0 %2134
    %2136 = vrot.lane.b32.xlu0 %v1434, 80
    %v2137 = vpop.permute.xlu0 %2136
    %v2138 = vsel %vm202, %v2135, 0
    %v2140 = vsel %vm202, %v2137, 0
    %2142 = vmatpush.xpose.msra.mxu0 0.0
    %2143 = vmatpush.xpose.msra.mxu0 0.0
    %2144 = vmatpush.xpose.msra.mxu0 0.0
    %2145 = vmatpush.xpose.msra.mxu0 0.0
    %2146 = vmatpush.xpose.msra.mxu0 0.0
    %2147 = vmatpush.xpose.msra.mxu0 0.0
    %2148 = vmatpush.xpose.msra.mxu0 0.0
    %2149 = vmatpush.xpose.msra.mxu0 0.0
    %2150 = vmatpush.xpose.msra.mxu0 0.0
    %2151 = vmatpush.xpose.msra.mxu0 0.0
    %2152 = vmatpush.xpose.msra.mxu0 0.0
    %2153 = vmatpush.xpose.msra.mxu0 0.0
    %2154 = vmatpush.xpose.msra.mxu0 0.0
    %2155 = vmatpush.xpose.msra.mxu0 0.0
    %2156 = vmatpush.xpose.msra.mxu0 0.0
    %2157 = vmatpush.xpose.msra.mxu0 %v2140
    %2158 = vmatmul.f32.gmra.mxu0 %v2138
    %v2159 = vpop.f32.mrf.mxu0
    %v2160 = vadd.f32 0.0, %v2159
    %2161 = vdwg.mxu0
    %v2162 = vmul.f32 %v2160, 0.35355338
    %v2163 = vadd.f32 %v2162, %v796
    %v2164 = vsel %vm202, %v2163, -inf
    %2165 = vmax.xlane.f32.xlu0 %v2164
    %v2166 = vpop.xlane.xlu0 %2165
    %v2167 = vsub.f32 %v2163, %v2166
    %v2168 = vmul.f32 %v2167, 1.442695
    %v2169 = vpow.pop %v2168
    %v2170 = vsel %vm202, %v2169, 0.0
    %2171 = vadd.xlane.f32.xlu0 %v2170
    %v2172 = vpop.xlane.xlu0 %2171
    %v2173 = vrcp.pop %v2172
    %v2174 = vmul.f32 %v2169, %v2173
    %2175 = vrot.lane.b32.xlu0 %v1434, 48
    %v2176 = vpop.permute.xlu0 %2175
    %v2179 = vsel %vm202, %v2174, 0
    %2181 = vmatpush.msra.mxu0 0.0
    %2182 = vmatpush.msra.mxu0 0.0
    %2183 = vmatpush.msra.mxu0 0.0
    %2184 = vmatpush.msra.mxu0 0.0
    %2185 = vmatpush.msra.mxu0 0.0
    %2186 = vmatpush.msra.mxu0 0.0
    %2187 = vmatpush.msra.mxu0 0.0
    %2188 = vmatpush.msra.mxu0 0.0
    %2189 = vmatpush.msra.mxu0 0.0
    %2190 = vmatpush.msra.mxu0 0.0
    %2191 = vmatpush.msra.mxu0 0.0
    %2192 = vmatpush.msra.mxu0 0.0
    %2193 = vmatpush.msra.mxu0 0.0
    %2194 = vmatpush.msra.mxu0 0.0
    %2195 = vmatpush.msra.mxu0 0.0
    %2196 = vmatpush.msra.mxu0 %v2176
    %2197 = vmatmul.f32.gmra.mxu0 %v2179
    %v2198 = vpop.f32.mrf.mxu0
    %v2199 = vadd.f32 0.0, %v2198
    %2200 = vdwg.mxu0
    %2201 = vrot.lane.b32.xlu0 %v1434, 104
    %v2202 = vpop.permute.xlu0 %2201
    %2203 = vrot.lane.b32.xlu0 %v1434, 72
    %v2204 = vpop.permute.xlu0 %2203
    %v2205 = vsel %vm202, %v2202, 0
    %v2207 = vsel %vm202, %v2204, 0
    %2209 = vmatpush.xpose.msra.mxu0 0.0
    %2210 = vmatpush.xpose.msra.mxu0 0.0
    %2211 = vmatpush.xpose.msra.mxu0 0.0
    %2212 = vmatpush.xpose.msra.mxu0 0.0
    %2213 = vmatpush.xpose.msra.mxu0 0.0
    %2214 = vmatpush.xpose.msra.mxu0 0.0
    %2215 = vmatpush.xpose.msra.mxu0 0.0
    %2216 = vmatpush.xpose.msra.mxu0 0.0
    %2217 = vmatpush.xpose.msra.mxu0 0.0
    %2218 = vmatpush.xpose.msra.mxu0 0.0
    %2219 = vmatpush.xpose.msra.mxu0 0.0
    %2220 = vmatpush.xpose.msra.mxu0 0.0
    %2221 = vmatpush.xpose.msra.mxu0 0.0
    %2222 = vmatpush.xpose.msra.mxu0 0.0
    %2223 = vmatpush.xpose.msra.mxu0 0.0
    %2224 = vmatpush.xpose.msra.mxu0 %v2207
    %2225 = vmatmul.f32.gmra.mxu0 %v2205
    %v2226 = vpop.f32.mrf.mxu0
    %v2227 = vadd.f32 0.0, %v2226
    %2228 = vdwg.mxu0
    %v2229 = vmul.f32 %v2227, 0.35355338
    %v2230 = vadd.f32 %v2229, %v796
    %v2231 = vsel %vm202, %v2230, -inf
    %2232 = vmax.xlane.f32.xlu0 %v2231
    %v2233 = vpop.xlane.xlu0 %2232
    %v2234 = vsub.f32 %v2230, %v2233
    %v2235 = vmul.f32 %v2234, 1.442695
    %v2236 = vpow.pop %v2235
    %v2237 = vsel %vm202, %v2236, 0.0
    %2238 = vadd.xlane.f32.xlu0 %v2237
    %v2239 = vpop.xlane.xlu0 %2238
    %v2240 = vrcp.pop %v2239
    %v2241 = vmul.f32 %v2236, %v2240
    %2242 = vrot.lane.b32.xlu0 %v1434, 40
    %v2243 = vpop.permute.xlu0 %2242
    %v2246 = vsel %vm202, %v2241, 0
    %2248 = vmatpush.msra.mxu0 0.0
    %2249 = vmatpush.msra.mxu0 0.0
    %2250 = vmatpush.msra.mxu0 0.0
    %2251 = vmatpush.msra.mxu0 0.0
    %2252 = vmatpush.msra.mxu0 0.0
    %2253 = vmatpush.msra.mxu0 0.0
    %2254 = vmatpush.msra.mxu0 0.0
    %2255 = vmatpush.msra.mxu0 0.0
    %2256 = vmatpush.msra.mxu0 0.0
    %2257 = vmatpush.msra.mxu0 0.0
    %2258 = vmatpush.msra.mxu0 0.0
    %2259 = vmatpush.msra.mxu0 0.0
    %2260 = vmatpush.msra.mxu0 0.0
    %2261 = vmatpush.msra.mxu0 0.0
    %2262 = vmatpush.msra.mxu0 0.0
    %2263 = vmatpush.msra.mxu0 %v2243
    %2264 = vmatmul.f32.gmra.mxu0 %v2246
    %v2265 = vpop.f32.mrf.mxu0
    %v2266 = vadd.f32 0.0, %v2265
    %2267 = vdwg.mxu0
    %2269 = vrot.lane.b32.xlu0 %v2132, 8
    %v2270 = vpop.permute.xlu0 %2269
    %2273 = vrot.lane.b32.xlu0 %v2199, 16
    %v2274 = vpop.permute.xlu0 %2273
    %2277 = vrot.lane.b32.xlu0 %v2266, 24
    %v2278 = vpop.permute.xlu0 %2277
    %v2280 = vsel %vm202, %v2065, %v2270
    %v2281 = vsel %vm481, %v2280, %v2274
    %v2282 = vsel %vm483, %v2281, %v2278
    %v2283 = vpack.c.bf16 %v2000, %v1718
    %v2284 = vpack.c.bf16 %v2282, %v2282
    %s2285 = scalar_lea.vmem %s6, 16
    %v2286 = vld [vmem:[%s2285] sm:$0xf]
    %v2287 = vld [vmem:[%s2285 + $0x4] sm:$0xf]
    %v2288 = vld [vmem:[%s2285 + $0x8] sm:$0xf]
    %v2289 = vld [vmem:[%s2285 + $0xc] sm:$0xf]
    %s2290 = scalar_lea.vmem %s7, 1
    %v2291 = vld [vmem:[%s2290] sm:$0x1]
    %v2293 = vperm.slane %v2291, 0
    %v2299 = vunpack.c.l.b16 %v2286
    %v2300 = vunpack.c.l.b16 %v2287
    %v2301 = vunpack.c.l.b16 %v2288
    %v2302 = vunpack.c.l.b16 %v2289
    %v2303 = vpack.c.b16 %v2300, %v2299
    %v2304 = vpack.c.b16 %v2302, %v2301
    %v2308 = vsel %vm71, %v2283, 0
    %v2311 = vsel %vm71, %v2284, 0
    %2313 = vmatpush.bf16.msra.mxu0 0
    %2314 = vmatpush.bf16.msra.mxu0 0
    %2315 = vmatpush.bf16.msra.mxu0 0
    %2316 = vmatpush.bf16.msra.mxu0 0
    %2317 = vmatpush.bf16.msra.mxu0 0
    %2318 = vmatpush.bf16.msra.mxu0 0
    %2319 = vmatpush.bf16.msra.mxu0 %v2304
    %2320 = vmatpush.bf16.msra.mxu0 %v2303
    %2321 = vmatmul.bf16.gmra.mxu0 %v2308
    %v2322 = vpop.f32.mrf.mxu0
    %v2323 = vadd.f32 %v2293, %v2322
    %v2324 = vpop.f32.mrf.mxu0
    %v2325 = vadd.f32 %v2293, %v2324
    %2326 = vmatmul.bf16.gmra.mxu0 %v2311
    %v2327 = vpop.f32.mrf.mxu0
    %v2328 = vadd.f32 %v2293, %v2327
    %v2329 = vpop.f32.mrf.mxu0
    %2330 = vdwg.mxu0
    %s2331 = scalar_lea.vmem %s8, 2
    %v2332 = vld [vmem:[%s2331] sm:$0x3]
    %v2333 = vadd.f32 %v2323, %v1386
    %v2334 = vadd.f32 %v2325, %v1387
    %v2335 = vadd.f32 %v2328, %v1388
    %v2336 = vsel %vm71, %v2333, 0.0
    %2337 = vadd.xlane.f32.xlu0 %v2336
    %v2338 = vpop.xlane.xlu0 %2337
    %v2339 = vsel %vm71, %v2334, 0.0
    %2340 = vadd.xlane.f32.xlu0 %v2339
    %v2341 = vpop.xlane.xlu0 %2340
    %v2342 = vsel %vm71, %v2335, 0.0
    %2343 = vadd.xlane.f32.xlu0 %v2342
    %v2344 = vpop.xlane.xlu0 %2343
    %v2345 = vmul.f32 %v2338, %v87
    %v2346 = vmul.f32 %v2341, %v87
    %v2347 = vmul.f32 %v2344, %v87
    %v2348 = vsub.f32 %v2333, %v2345
    %v2349 = vsub.f32 %v2334, %v2346
    %v2350 = vsub.f32 %v2335, %v2347
    %v2351 = vmul.f32 %v2348, %v2348
    %v2352 = vmul.f32 %v2349, %v2349
    %v2353 = vmul.f32 %v2350, %v2350
    %v2354 = vsel %vm71, %v2351, 0.0
    %2355 = vadd.xlane.f32.xlu0 %v2354
    %v2356 = vpop.xlane.xlu0 %2355
    %v2357 = vsel %vm71, %v2352, 0.0
    %2358 = vadd.xlane.f32.xlu0 %v2357
    %v2359 = vpop.xlane.xlu0 %2358
    %v2360 = vsel %vm71, %v2353, 0.0
    %2361 = vadd.xlane.f32.xlu0 %v2360
    %v2362 = vpop.xlane.xlu0 %2361
    %v2363 = vmul.f32 %v2356, %v87
    %v2364 = vmul.f32 %v2359, %v87
    %v2365 = vmul.f32 %v2362, %v87
    %v2366 = vadd.f32 %v2363, 1e-12
    %v2367 = vadd.f32 %v2364, 1e-12
    %v2368 = vadd.f32 %v2365, 1e-12
    %v2369 = vrsqrt.pop %v2366
    %v2370 = vmul.f32 %v2369, %v2366
    %v2371 = vmul.f32 %v2370, %v2369
    %v2372 = vmul.f32 0.5, %v2371
    %v2373 = vsub.f32 1.5, %v2372
    %v2374 = vmul.f32 %v2369, %v2373
    %vm2375 = vweird.f32 %v2366
    %vm2376 = vweird.f32 %v2369
    %vm2377 = vmor %vm2375, %vm2376
    %v2378 = vsel %vm2377, %v2369, %v2374
    %v2379 = vrsqrt.pop %v2367
    %v2380 = vmul.f32 %v2379, %v2367
    %v2381 = vmul.f32 %v2380, %v2379
    %v2382 = vmul.f32 0.5, %v2381
    %v2383 = vsub.f32 1.5, %v2382
    %v2384 = vmul.f32 %v2379, %v2383
    %vm2385 = vweird.f32 %v2367
    %vm2386 = vweird.f32 %v2379
    %vm2387 = vmor %vm2385, %vm2386
    %v2388 = vsel %vm2387, %v2379, %v2384
    %v2389 = vrsqrt.pop %v2368
    %v2390 = vmul.f32 %v2389, %v2368
    %v2391 = vmul.f32 %v2390, %v2389
    %v2392 = vmul.f32 0.5, %v2391
    %v2393 = vsub.f32 1.5, %v2392
    %v2394 = vmul.f32 %v2389, %v2393
    %vm2395 = vweird.f32 %v2368
    %vm2396 = vweird.f32 %v2389
    %vm2397 = vmor %vm2395, %vm2396
    %v2398 = vsel %vm2397, %v2389, %v2394
    %v2399 = vmul.f32 %v2348, %v2378
    %v2400 = vmul.f32 %v2349, %v2388
    %v2401 = vmul.f32 %v2350, %v2398
    %v2402 = vperm.slane %v2332, 0
    %v2403 = vmul.f32 %v2399, %v2402
    %v2404 = vmul.f32 %v2400, %v2402
    %v2405 = vmul.f32 %v2401, %v2402
    %v2406 = vperm.slane %v2332, 1
    %v2407 = vadd.f32 %v2403, %v2406
    %v2408 = vadd.f32 %v2404, %v2406
    %v2409 = vadd.f32 %v2405, %v2406
    %v2410 = vpack.c.bf16 %v2408, %v2407
    %v2411 = vpack.c.bf16 %v2409, %v2409
    %s2412 = scalar_lea.vmem %s9, 16
    %v2413 = vld [vmem:[%s2412] sm:$0xf]
    %v2414 = vld [vmem:[%s2412 + $0x4] sm:$0xf]
    %v2415 = vld [vmem:[%s2412 + $0x8] sm:$0xf]
    %v2416 = vld [vmem:[%s2412 + $0xc] sm:$0xf]
    %s2417 = scalar_lea.vmem %s10, 1
    %v2418 = vld [vmem:[%s2417] sm:$0x1]
    %v2420 = vperm.slane %v2418, 0
    %v2426 = vunpack.c.l.b16 %v2413
    %v2427 = vunpack.c.l.b16 %v2414
    %v2428 = vunpack.c.l.b16 %v2415
    %v2429 = vunpack.c.l.b16 %v2416
    %v2430 = vpack.c.b16 %v2427, %v2426
    %v2431 = vpack.c.b16 %v2429, %v2428
    %v2435 = vsel %vm71, %v2410, 0
    %v2438 = vsel %vm71, %v2411, 0
    %2440 = vmatpush.bf16.msra.mxu0 0
    %2441 = vmatpush.bf16.msra.mxu0 0
    %2442 = vmatpush.bf16.msra.mxu0 0
    %2443 = vmatpush.bf16.msra.mxu0 0
    %2444 = vmatpush.bf16.msra.mxu0 0
    %2445 = vmatpush.bf16.msra.mxu0 0
    %2446 = vmatpush.bf16.msra.mxu0 %v2431
    %2447 = vmatpush.bf16.msra.mxu0 %v2430
    %2448 = vmatmul.bf16.gmra.mxu0 %v2435
    %v2449 = vpop.f32.mrf.mxu0
    %v2450 = vadd.f32 %v2420, %v2449
    %v2451 = vpop.f32.mrf.mxu0
    %v2452 = vadd.f32 %v2420, %v2451
    %2453 = vmatmul.bf16.gmra.mxu0 %v2438
    %v2454 = vpop.f32.mrf.mxu0
    %v2455 = vadd.f32 %v2420, %v2454
    %v2456 = vpop.f32.mrf.mxu0
    %2457 = vdwg.mxu0
    %v2458 = vmul.f32 %v2450, %v2450
    %v2459 = vmul.f32 %v2452, %v2452
    %v2460 = vmul.f32 %v2455, %v2455
    %v2461 = vmul.f32 %v2450, %v2458
    %v2462 = vmul.f32 %v2452, %v2459
    %v2463 = vmul.f32 %v2455, %v2460
    %v2464 = vmul.f32 %v2461, 0.044715
    %v2465 = vmul.f32 %v2462, 0.044715
    %v2466 = vmul.f32 %v2463, 0.044715
    %v2467 = vadd.f32 %v2450, %v2464
    %v2468 = vadd.f32 %v2452, %v2465
    %v2469 = vadd.f32 %v2455, %v2466
    %v2470 = vmul.f32 %v2467, 0.7978846
    %v2471 = vmul.f32 %v2468, 0.7978846
    %v2472 = vmul.f32 %v2469, 0.7978846
    %v2473 = vtanh.pop %v2470
    %v2474 = vtanh.pop %v2471
    %v2475 = vtanh.pop %v2472
    %v2476 = vadd.f32 %v2473, 1.0
    %v2477 = vadd.f32 %v2474, 1.0
    %v2478 = vadd.f32 %v2475, 1.0
    %v2479 = vmul.f32 %v2476, 0.5
    %v2480 = vmul.f32 %v2477, 0.5
    %v2481 = vmul.f32 %v2478, 0.5
    %v2482 = vmul.f32 %v2450, %v2479
    %v2483 = vmul.f32 %v2452, %v2480
    %v2484 = vmul.f32 %v2455, %v2481
    %v2485 = vpack.c.bf16 %v2483, %v2482
    %v2486 = vpack.c.bf16 %v2484, %v2484
    %s2487 = scalar_lea.vmem %s11, 32
    %v2488 = vld [vmem:[%s2487] sm:$0xf]
    %v2489 = vld [vmem:[%s2487 + $0x4] sm:$0xf]
    %v2490 = vld [vmem:[%s2487 + $0x8] sm:$0xf]
    %v2491 = vld [vmem:[%s2487 + $0xc] sm:$0xf]
    %v2492 = vld [vmem:[%s2487 + $0x10] sm:$0xf]
    %v2493 = vld [vmem:[%s2487 + $0x14] sm:$0xf]
    %v2494 = vld [vmem:[%s2487 + $0x18] sm:$0xf]
    %v2495 = vld [vmem:[%s2487 + $0x1c] sm:$0xf]
    %s2496 = scalar_lea.vmem %s12, 1
    %v2497 = vld [vmem:[%s2496] sm:$0x1]
    %v2499 = vperm.slane %v2497, 0
    %v2509 = vunpack.c.l.b16 %v2488
    %v2510 = vunpack.c.l.b16 %v2489
    %v2511 = vunpack.c.l.b16 %v2490
    %v2512 = vunpack.c.l.b16 %v2491
    %v2513 = vunpack.c.l.b16 %v2492
    %v2514 = vunpack.c.l.b16 %v2493
    %v2515 = vunpack.c.l.b16 %v2494
    %v2516 = vunpack.c.l.b16 %v2495
    %v2517 = vpack.c.b16 %v2510, %v2509
    %v2518 = vpack.c.b16 %v2512, %v2511
    %v2519 = vpack.c.b16 %v2514, %v2513
    %v2520 = vpack.c.b16 %v2516, %v2515
    %v2526 = vsel %vm1286, %v2485, 0
    %v2529 = vsel %vm1286, %v2486, 0
    %2531 = vmatpush.bf16.msra.mxu0 0
    %2532 = vmatpush.bf16.msra.mxu0 0
    %2533 = vmatpush.bf16.msra.mxu0 0
    %2534 = vmatpush.bf16.msra.mxu0 0
    %2535 = vmatpush.bf16.msra.mxu0 %v2520
    %2536 = vmatpush.bf16.msra.mxu0 %v2519
    %2537 = vmatpush.bf16.msra.mxu0 %v2518
    %2538 = vmatpush.bf16.msra.mxu0 %v2517
    %2539 = vmatmul.bf16.gmra.mxu0 %v2526
    %v2540 = vpop.f32.mrf.mxu0
    %v2541 = vadd.f32 %v2499, %v2540
    %v2542 = vpop.f32.mrf.mxu0
    %v2543 = vadd.f32 %v2499, %v2542
    %2544 = vmatmul.bf16.gmra.mxu0 %v2529
    %v2545 = vpop.f32.mrf.mxu0
    %v2546 = vadd.f32 %v2499, %v2545
    %v2547 = vpop.f32.mrf.mxu0
    %2548 = vdwg.mxu0
    %s2549 = scalar_lea.vmem %s13, 2
    %v2550 = vld [vmem:[%s2549] sm:$0x3]
    %v2551 = vadd.f32 %v2541, %v2407
    %v2552 = vadd.f32 %v2543, %v2408
    %v2553 = vadd.f32 %v2546, %v2409
    %v2554 = vsel %vm71, %v2551, 0.0
    %2555 = vadd.xlane.f32.xlu0 %v2554
    %v2556 = vpop.xlane.xlu0 %2555
    %v2557 = vsel %vm71, %v2552, 0.0
    %2558 = vadd.xlane.f32.xlu0 %v2557
    %v2559 = vpop.xlane.xlu0 %2558
    %v2560 = vsel %vm71, %v2553, 0.0
    %2561 = vadd.xlane.f32.xlu0 %v2560
    %v2562 = vpop.xlane.xlu0 %2561
    %v2563 = vmul.f32 %v2556, %v87
    %v2564 = vmul.f32 %v2559, %v87
    %v2565 = vmul.f32 %v2562, %v87
    %v2566 = vsub.f32 %v2551, %v2563
    %v2567 = vsub.f32 %v2552, %v2564
    %v2568 = vsub.f32 %v2553, %v2565
    %v2569 = vmul.f32 %v2566, %v2566
    %v2570 = vmul.f32 %v2567, %v2567
    %v2571 = vmul.f32 %v2568, %v2568
    %v2572 = vsel %vm71, %v2569, 0.0
    %2573 = vadd.xlane.f32.xlu0 %v2572
    %v2574 = vpop.xlane.xlu0 %2573
    %v2575 = vsel %vm71, %v2570, 0.0
    %2576 = vadd.xlane.f32.xlu0 %v2575
    %v2577 = vpop.xlane.xlu0 %2576
    %v2578 = vsel %vm71, %v2571, 0.0
    %2579 = vadd.xlane.f32.xlu0 %v2578
    %v2580 = vpop.xlane.xlu0 %2579
    %v2581 = vmul.f32 %v2574, %v87
    %v2582 = vmul.f32 %v2577, %v87
    %v2583 = vmul.f32 %v2580, %v87
    %v2584 = vadd.f32 %v2581, 1e-12
    %v2585 = vadd.f32 %v2582, 1e-12
    %v2586 = vadd.f32 %v2583, 1e-12
    %v2587 = vrsqrt.pop %v2584
    %v2588 = vmul.f32 %v2587, %v2584
    %v2589 = vmul.f32 %v2588, %v2587
    %v2590 = vmul.f32 0.5, %v2589
    %v2591 = vsub.f32 1.5, %v2590
    %v2592 = vmul.f32 %v2587, %v2591
    %vm2593 = vweird.f32 %v2584
    %vm2594 = vweird.f32 %v2587
    %vm2595 = vmor %vm2593, %vm2594
    %v2596 = vsel %vm2595, %v2587, %v2592
    %v2597 = vrsqrt.pop %v2585
    %v2598 = vmul.f32 %v2597, %v2585
    %v2599 = vmul.f32 %v2598, %v2597
    %v2600 = vmul.f32 0.5, %v2599
    %v2601 = vsub.f32 1.5, %v2600
    %v2602 = vmul.f32 %v2597, %v2601
    %vm2603 = vweird.f32 %v2585
    %vm2604 = vweird.f32 %v2597
    %vm2605 = vmor %vm2603, %vm2604
    %v2606 = vsel %vm2605, %v2597, %v2602
    %v2607 = vrsqrt.pop %v2586
    %v2608 = vmul.f32 %v2607, %v2586
    %v2609 = vmul.f32 %v2608, %v2607
    %v2610 = vmul.f32 0.5, %v2609
    %v2611 = vsub.f32 1.5, %v2610
    %v2612 = vmul.f32 %v2607, %v2611
    %vm2613 = vweird.f32 %v2586
    %vm2614 = vweird.f32 %v2607
    %vm2615 = vmor %vm2613, %vm2614
    %v2616 = vsel %vm2615, %v2607, %v2612
    %v2617 = vmul.f32 %v2566, %v2596
    %v2618 = vmul.f32 %v2567, %v2606
    %v2619 = vmul.f32 %v2568, %v2616
    %v2620 = vperm.slane %v2550, 0
    %v2621 = vmul.f32 %v2617, %v2620
    %v2622 = vmul.f32 %v2618, %v2620
    %v2623 = vmul.f32 %v2619, %v2620
    %v2624 = vperm.slane %v2550, 1
    %v2625 = vadd.f32 %v2621, %v2624
    %v2626 = vadd.f32 %v2622, %v2624
    %v2627 = vadd.f32 %v2623, %v2624
    %2629 = vset.pattern.permute.xlu0 0
    %2630 = vperm.xlu0 %2629, %v64
    %v2631 = vpop.permute.xlu0 %2630
    %v2633 = vmul.f32 %v2625, %v2631
    %v2634 = vsel %vm71, %v2633, 0.0
    %v2635 = vrot.slane %v2634, 4
    %v2636 = vadd.f32 %v2634, %v2635
    %v2637 = vrot.slane %v2636, 2
    %v2638 = vadd.f32 %v2636, %v2637
    %v2639 = vrot.slane %v2638, 1
    %v2640 = vadd.f32 %v2638, %v2639
    %vm2641 = vcmask 7168
    %v2642 = vsel %vm2641, %v64, 0.0
    %v2643 = vrot.slane %v2642, 4
    %v2644 = vadd.f32 %v2642, %v2643
    %v2645 = vrot.slane %v2644, 2
    %v2646 = vadd.f32 %v2644, %v2645
    %v2647 = vrot.slane %v2646, 1
    %v2648 = vadd.f32 %v2646, %v2647
    %v2649 = vmax.f32 %v2648, 1.0
    %v2650 = vrcp.pop %v2649
    %2652 = vset.pattern.permute.xlu0 0
    %2653 = vperm.xlu0 %2652, %v2650
    %v2654 = vpop.permute.xlu0 %2653
    %v2656 = vmul.f32 %v2640, %v2654
    %2658 = vset.pattern.permute.xlu0 0
    %2659 = vperm.xlu0 %2658, %v65
    %v2660 = vpop.permute.xlu0 %2659
    %v2662 = vmul.f32 %v2626, %v2660
    %v2663 = vsel %vm71, %v2662, 0.0
    %v2664 = vrot.slane %v2663, 4
    %v2665 = vadd.f32 %v2663, %v2664
    %v2666 = vrot.slane %v2665, 2
    %v2667 = vadd.f32 %v2665, %v2666
    %v2668 = vrot.slane %v2667, 1
    %v2669 = vadd.f32 %v2667, %v2668
    %v2670 = vsel %vm2641, %v65, 0.0
    %v2671 = vrot.slane %v2670, 4
    %v2672 = vadd.f32 %v2670, %v2671
    %v2673 = vrot.slane %v2672, 2
    %v2674 = vadd.f32 %v2672, %v2673
    %v2675 = vrot.slane %v2674, 1
    %v2676 = vadd.f32 %v2674, %v2675
    %v2677 = vmax.f32 %v2676, 1.0
    %v2678 = vrcp.pop %v2677
    %2680 = vset.pattern.permute.xlu0 0
    %2681 = vperm.xlu0 %2680, %v2678
    %v2682 = vpop.permute.xlu0 %2681
    %v2684 = vmul.f32 %v2669, %v2682
    %2686 = vset.pattern.permute.xlu0 0
    %2687 = vperm.xlu0 %2686, %v66
    %v2688 = vpop.permute.xlu0 %2687
    %v2690 = vmul.f32 %v2627, %v2688
    %v2691 = vsel %vm71, %v2690, 0.0
    %v2692 = vrot.slane %v2691, 4
    %v2693 = vadd.f32 %v2691, %v2692
    %v2694 = vrot.slane %v2693, 2
    %v2695 = vadd.f32 %v2693, %v2694
    %v2696 = vrot.slane %v2695, 1
    %v2697 = vadd.f32 %v2695, %v2696
    %v2698 = vsel %vm2641, %v66, 0.0
    %v2699 = vrot.slane %v2698, 4
    %v2700 = vadd.f32 %v2698, %v2699
    %v2701 = vrot.slane %v2700, 2
    %v2702 = vadd.f32 %v2700, %v2701
    %v2703 = vrot.slane %v2702, 1
    %v2704 = vadd.f32 %v2702, %v2703
    %v2705 = vmax.f32 %v2704, 1.0
    %v2706 = vrcp.pop %v2705
    %2708 = vset.pattern.permute.xlu0 0
    %2709 = vperm.xlu0 %2708, %v2706
    %v2710 = vpop.permute.xlu0 %2709
    %v2712 = vmul.f32 %v2697, %v2710
    %v2713 = vld [vmem:[%s14] sm:$0x7]
    %v2714 = vld [vmem:[%s15] sm:$0x1]
    %v2715 = vld [vmem:[%s16] sm:$0x1]
    %v2716 = vld [vmem:[#allocation2] sm:$0x1]
    %v2717 = vsub.f32 %v2656, %v2684
    %v2718 = vadd.f32 %v2717, 1e-06
    %v2719 = vand.u32 2147483647, %v2718
    %v2720 = vsel %vm71, %v2719, 0.0
    %2721 = vadd.xlane.f32.xlu0 %v2720
    %v2722 = vpop.xlane.xlu0 %2721
    %v2723 = vmul.f32 %v2656, %v2684
    %v2724 = vsel %vm71, %v2723, 0.0
    %2725 = vadd.xlane.f32.xlu0 %v2724
    %v2726 = vpop.xlane.xlu0 %2725
    %v2727 = vmul.f32 %v2656, %v2656
    %v2728 = vsel %vm71, %v2727, 0.0
    %2729 = vadd.xlane.f32.xlu0 %v2728
    %v2730 = vpop.xlane.xlu0 %2729
    %v2731 = vrsqrt.pop %v2730
    %v2732 = vmul.f32 %v2731, %v2730
    %v2733 = vmul.f32 %v2732, %v2731
    %v2734 = vmul.f32 0.5, %v2733
    %v2735 = vsub.f32 1.5, %v2734
    %v2736 = vmul.f32 %v2731, %v2735
    %v2737 = vmul.f32 %v2730, %v2736
    %vm2738 = vcmp.eq.f32.partialorder %v2730, inf
    %v2739 = vsel %vm2738, %v2730, %v2737
    %vm2740 = vcmp.eq.f32.partialorder %v2730, 0.0
    %v2741 = vand.u32 %v2730, 2147483648
    %v2742 = vsel %vm2740, %v2741, %v2739
    %v2743 = vmul.f32 %v2684, %v2684
    %v2744 = vsel %vm71, %v2743, 0.0
    %2745 = vadd.xlane.f32.xlu0 %v2744
    %v2746 = vpop.xlane.xlu0 %2745
    %v2747 = vrsqrt.pop %v2746
    %v2748 = vmul.f32 %v2747, %v2746
    %v2749 = vmul.f32 %v2748, %v2747
    %v2750 = vmul.f32 0.5, %v2749
    %v2751 = vsub.f32 1.5, %v2750
    %v2752 = vmul.f32 %v2747, %v2751
    %v2753 = vmul.f32 %v2746, %v2752
    %vm2754 = vcmp.eq.f32.partialorder %v2746, inf
    %v2755 = vsel %vm2754, %v2746, %v2753
    %vm2756 = vcmp.eq.f32.partialorder %v2746, 0.0
    %v2757 = vand.u32 %v2746, 2147483648
    %v2758 = vsel %vm2756, %v2757, %v2755
    %v2759 = vmax.f32 %v2742, 1e-08
    %v2760 = vmax.f32 %v2758, 1e-08
    %v2761 = vmul.f32 %v2759, %v2760
    %v2762 = vrcp.pop %v2761
    %v2763 = vmul.f32 %v2761, %v2762
    %v2764 = vsub.f32 1.0, %v2763
    %v2765 = vmul.f32 %v2762, %v2764
    %v2766 = vadd.f32 %v2762, %v2765
    %vm2767 = vweird.f32 %v2761
    %vm2768 = vweird.f32 %v2762
    %vm2769 = vmor %vm2767, %vm2768
    %v2770 = vsel %vm2769, %v2762, %v2766
    %v2771 = vand.u32 2147483647, %v2761
    %vm2772 = vcmp.eq.f32.partialorder %v2771, 8.507059e+37
    %v2773 = vand.u32 %v2761, 2147483648
    %v2774 = vor.u32 1.1754944e-38, %v2773
    %v2775 = vsel %vm2772, %v2774, %v2770
    %v2776 = vmul.f32 %v2726, %v2775
    %v2777 = vmul.f32 %v2722, %v2713
    %v2779 = vrot.slane %v2777, 1
    %v2781 = vadd.f32 %v2777, %v2779
    %v2782 = vmul.f32 %v2776, %v2713
    %v2784 = vrot.slane %v2782, 2
    %v2786 = vadd.f32 %v2781, %v2784
    %v2787 = vadd.f32 %v2786, %v2714
    %v2788 = vmax.f32 %v2787, 0.0
    %v2789 = vmul.f32 %v2788, %v2715
    %vm2790 = vcmask 516096
    %v2791 = vsel %vm2790, %v2789, 0.0
    %2792 = vadd.xlane.f32.xlu0 %v2791
    %v2793 = vpop.xlane.xlu0 %2792
    %v2794 = vadd.f32 %v2793, %v2716
    %v2795 = vsub.f32 %v2656, %v2712
    %v2796 = vadd.f32 %v2795, 1e-06
    %v2797 = vand.u32 2147483647, %v2796
    %v2798 = vsel %vm71, %v2797, 0.0
    %2799 = vadd.xlane.f32.xlu0 %v2798
    %v2800 = vpop.xlane.xlu0 %2799
    %v2801 = vmul.f32 %v2656, %v2712
    %v2802 = vsel %vm71, %v2801, 0.0
    %2803 = vadd.xlane.f32.xlu0 %v2802
    %v2804 = vpop.xlane.xlu0 %2803
    %v2805 = vmul.f32 %v2712, %v2712
    %v2806 = vsel %vm71, %v2805, 0.0
    %2807 = vadd.xlane.f32.xlu0 %v2806
    %v2808 = vpop.xlane.xlu0 %2807
    %v2809 = vrsqrt.pop %v2808
    %v2810 = vmul.f32 %v2809, %v2808
    %v2811 = vmul.f32 %v2810, %v2809
    %v2812 = vmul.f32 0.5, %v2811
    %v2813 = vsub.f32 1.5, %v2812
    %v2814 = vmul.f32 %v2809, %v2813
    %v2815 = vmul.f32 %v2808, %v2814
    %vm2816 = vcmp.eq.f32.partialorder %v2808, inf
    %v2817 = vsel %vm2816, %v2808, %v2815
    %vm2818 = vcmp.eq.f32.partialorder %v2808, 0.0
    %v2819 = vand.u32 %v2808, 2147483648
    %v2820 = vsel %vm2818, %v2819, %v2817
    %v2821 = vmax.f32 %v2820, 1e-08
    %v2822 = vmul.f32 %v2759, %v2821
    %v2823 = vrcp.pop %v2822
    %v2824 = vmul.f32 %v2822, %v2823
    %v2825 = vsub.f32 1.0, %v2824
    %v2826 = vmul.f32 %v2823, %v2825
    %v2827 = vadd.f32 %v2823, %v2826
    %vm2828 = vweird.f32 %v2822
    %vm2829 = vweird.f32 %v2823
    %vm2830 = vmor %vm2828, %vm2829
    %v2831 = vsel %vm2830, %v2823, %v2827
    %v2832 = vand.u32 2147483647, %v2822
    %vm2833 = vcmp.eq.f32.partialorder %v2832, 8.507059e+37
    %v2834 = vand.u32 %v2822, 2147483648
    %v2835 = vor.u32 1.1754944e-38, %v2834
    %v2836 = vsel %vm2833, %v2835, %v2831
    %v2837 = vmul.f32 %v2804, %v2836
    %v2838 = vmul.f32 %v2800, %v2713
    %v2840 = vrot.slane %v2838, 1
    %v2842 = vadd.f32 %v2838, %v2840
    %v2843 = vmul.f32 %v2837, %v2713
    %v2845 = vrot.slane %v2843, 2
    %v2847 = vadd.f32 %v2842, %v2845
    %v2848 = vadd.f32 %v2847, %v2714
    %v2849 = vmax.f32 %v2848, 0.0
    %v2850 = vmul.f32 %v2849, %v2715
    %v2851 = vsel %vm2790, %v2850, 0.0
    %2852 = vadd.xlane.f32.xlu0 %v2851
    %v2853 = vpop.xlane.xlu0 %2852
    %v2854 = vadd.f32 %v2853, %v2716
    %2856 = vrot.lane.b32.xlu0 %v2854, 1
    %v2857 = vpop.permute.xlu0 %2856
    %v2859 = vsel %vm2641, %v2794, %v2857
    %vm2860 = vcmask 8192
    %2861 = vst.msk [vmem:[#allocation3] sm:$0x1] %vm2860, %v2859
    // Predicated region
    $region74: #{bert_siamese_forward.1} parent=1 // pred_check
      _
    $region75: #{bert_siamese_forward.1} parent=1 // pred_check_branch
      %2863 = sbr.rel (0) target = $region77
    $region76: #{bert_siamese_forward.1} parent=1 // pred_region
      %2865 = vsyncadd [#allocation4], 0
      %s2867 = sshll.u32 [#allocation3], 4
      %s2868 = int_to_ptr.vmem [resolvable:$true] %s2867
      %s2869 = sshll.u32 %s18, 4
      %s2870 = int_to_ptr.hbm [resolvable:$true] %s2869
      %2872 = dma.vmem_to_hbm [thread:$0]  %s2868, 16, %s2870, [#allocation4]
    $region77: #{bert_siamese_forward.1} parent=1 // pred_fallthru
      _
    // Predicated region
    $region78: #{bert_siamese_forward.1} parent=1 // pred_check
      _
    $region79: #{bert_siamese_forward.1} parent=1 // pred_check_branch
      %2874 = sbr.rel (0) target = $region81
    $region80: #{bert_siamese_forward.1} parent=1 // pred_region
      %2876 = dma.done [#allocation4], 16
    $region81: #{bert_siamese_forward.1} parent=1 // pred_fallthru
      _
    %2877 = vsyncpa [#allocation4], 1

</llo_original>
